<compile_context>
chip_gen: v6e
topology: v6e:2x2x1
jax: 0.10.0
libtpu: 0.0.40
codegen_flags: <defaults>
</compile_context>

<pallas_src>
import functools

import jax
import jax.numpy as jnp
from jax.experimental import pallas as pl
from jax.experimental.pallas import tpu as pltpu


def _round_up(x, m):
    return (x + m - 1) // m * m


# -----------------------------------------------------------------------------
# Pallas kernels
# -----------------------------------------------------------------------------
def _conv_bn_relu_pool_kernel(p_ref, w_ref, s_ref, b_ref, o_ref):
    """Fused conv (im2col matmul) + folded-BN affine + 2x2 max-pool + ReLU.

    p_ref: (4, TR, K) bf16  -- im2col patches for the 4 positions of each
                               2x2 pooling window (TR pooled rows per step).
    w_ref: (K, C)  bf16     -- conv weights, rows ordered (kh, kw, cin).
    s_ref: (1, C)  f32      -- folded BN scale.
    b_ref: (1, C)  f32      -- folded BN bias.
    o_ref: (TR, C) f32      -- pooled activations.
    """
    G, TR, K = p_ref.shape
    C = w_ref.shape[1]

    # Single MXU stream for all four pool positions (one big matmul instead of
    # four small push/drain sequences).  TR is always a multiple of 8, so this
    # reshape is layout-trivial.
    p = p_ref[...].reshape(G * TR, K)
    y = jnp.dot(p, w_ref[...], preferred_element_type=jnp.float32)  # (4*TR, C)

    # BN scale must be applied per branch (its sign is unconstrained); bias and
    # ReLU commute with max, so they are applied once after the pool reduction.
    y = (y * s_ref[...]).reshape(G, TR, C)
    m = jnp.maximum(jnp.maximum(y[0], y[1]), jnp.maximum(y[2], y[3]))
    o_ref[...] = jnp.maximum(m + b_ref[...], 0.0).astype(o_ref.dtype)


def conv_bn_relu_pool(p, w, scale, bias, *, tr=512):
    """p: (4, R, K) bf16; w: (K, C) bf16; scale/bias: (1, C) f32 -> (R, C) f32."""
    G, R, K = p.shape
    C = w.shape[1]

    # Keep the row tile a multiple of 8 (sublane) and size it for the smallest
    # scoped-VMEM generation: at TR=512, K=400, bf16, 4 pool inputs x 2 pipeline
    # buffers is ~3.3 MB of patch buffers -- comfortably inside 16 MiB (v5e).
    Rp = _round_up(R, 8)
    TR = min(tr, Rp)
    if Rp != R:
        p = jnp.pad(p, ((0, 0), (0, Rp - R), (0, 0)))

    out = pl.pallas_call(
        _conv_bn_relu_pool_kernel,
        out_shape=jax.ShapeDtypeStruct((Rp, C), jnp.float32),
        grid=(pl.cdiv(Rp, TR),),
        in_specs=[
            pl.BlockSpec((G, TR, K), lambda i: (0, i, 0)),   # tiled over rows
            pl.BlockSpec((K, C), lambda i: (0, 0)),          # weights resident
            pl.BlockSpec((1, C), lambda i: (0, 0)),          # scale resident
            pl.BlockSpec((1, C), lambda i: (0, 0)),          # bias resident
        ],
        out_specs=pl.BlockSpec((TR, C), lambda i: (i, 0)),
        compiler_params=pltpu.CompilerParams(
            dimension_semantics=("parallel",),
            vmem_limit_bytes=32 * 1024 * 1024,
        ),
    )(p, w, scale, bias)
    return out[:R] if Rp != R else out


def _linear_kernel(x_ref, w_ref, b_ref, o_ref):
    o_ref[...] = (jnp.dot(x_ref[...], w_ref[...],
                          preferred_element_type=jnp.float32) + b_ref[...])


def linear(x, w, b, *, tn=256):
    """x: (N, K) bf16; w: (K, Cp) bf16; b: (1, Cp) f32 -> (N, Cp) f32.

    Cp is the class count padded to a full 128-lane group (lane-dense store).
    """
    N, K = x.shape
    Cp = w.shape[1]
    Np = _round_up(N, 8)
    TN = min(tn, Np)
    if Np != N:
        x = jnp.pad(x, ((0, Np - N), (0, 0)))

    out = pl.pallas_call(
        _linear_kernel,
        out_shape=jax.ShapeDtypeStruct((Np, Cp), jnp.float32),
        grid=(pl.cdiv(Np, TN),),
        in_specs=[
            pl.BlockSpec((TN, K), lambda i: (i, 0)),
            pl.BlockSpec((K, Cp), lambda i: (0, 0)),
            pl.BlockSpec((1, Cp), lambda i: (0, 0)),
        ],
        out_specs=pl.BlockSpec((TN, Cp), lambda i: (i, 0)),
        compiler_params=pltpu.CompilerParams(
            dimension_semantics=("parallel",),
            vmem_limit_bytes=32 * 1024 * 1024,
        ),
    )(x, w, b)
    return out[:N] if Np != N else out


# -----------------------------------------------------------------------------
# JAX glue: im2col + pooling-window grouping (bf16), BN folding, param prep
# -----------------------------------------------------------------------------
def extract_pooled_patches(x, K=5, pad=2):
    """x: (N, H, W, Cin) NHWC -> (4, N*Ho*Wo, K*K*Cin) bf16 patch stack.

    Leading axis enumerates the 4 positions of each 2x2 pooling window.
    Patch feature order is (kh, kw, cin), matching the conv weight reshape.
    Conv is stride 1, 'same' (pad=2) padding; pool is 2x2 stride 2.
    """
    # TODO(synk): build the 25 im2col taps inside the Pallas kernel from a
    # resident padded activation tile to remove the remaining K*K HBM read
    # amplification (kept wrapper-side here for lowering robustness; bf16
    # already halves the patch bytes).
    N, H, W, Cin = x.shape
    x = x.astype(jnp.bfloat16)
    xp = jnp.pad(x, ((0, 0), (pad, pad), (pad, pad), (0, 0)))
    cols = []
    for kh in range(K):
        for kw in range(K):
            cols.append(xp[:, kh:kh + H, kw:kw + W, :])
    p = jnp.concatenate(cols, axis=-1)          # (N, H, W, K*K*Cin)
    Ho, Wo = H // 2, W // 2
    KK = K * K * Cin

    def sel(di, dj):
        return p[:, di::2, dj::2, :].reshape(N * Ho * Wo, KK)

    return jnp.stack([sel(0, 0), sel(0, 1), sel(1, 0), sel(1, 1)], axis=0)


def fold_bn(conv_b, gamma, beta, mean, var, eps=1e-5):
    # inference-mode BN folded onto the conv output: y*scale + bias
    scale = gamma / jnp.sqrt(var + eps)
    bias = (conv_b - mean) * scale + beta
    return (scale.reshape(1, -1).astype(jnp.float32),
            bias.reshape(1, -1).astype(jnp.float32))


def prepare_params(params):
    """One-time parameter prep: weight permutes/reshapes, BN folding, bf16
    casts, and fc lane-padding -- all hoisted out of the forward pass."""
    num_classes = params["fc_w"].shape[0]
    prep = {}
    prep["w1"] = jnp.transpose(params["conv1_w"], (2, 3, 1, 0)) \
        .reshape(25 * 1, 16).astype(jnp.bfloat16)
    prep["s1"], prep["b1"] = fold_bn(params["conv1_b"], params["bn1_gamma"],
                                     params["bn1_beta"], params["bn1_mean"],
                                     params["bn1_var"])
    prep["w2"] = jnp.transpose(params["conv2_w"], (2, 3, 1, 0)) \
        .reshape(25 * 16, 32).astype(jnp.bfloat16)
    prep["s2"], prep["b2"] = fold_bn(params["conv2_b"], params["bn2_gamma"],
                                     params["bn2_beta"], params["bn2_mean"],
                                     params["bn2_var"])
    # fc weight: PyTorch flattens activations in NCHW (c, h, w) order; our
    # activations stay NHWC, so permute the fc input columns to (h, w, c) once
    # here instead of transposing activations every forward pass.  Pad the
    # output classes to a full 128-lane group for a lane-dense store.
    fc_w = params["fc_w"].reshape(num_classes, 32, 7, 7)
    fc_w = jnp.transpose(fc_w, (2, 3, 1, 0)).reshape(7 * 7 * 32, num_classes)
    cp = _round_up(num_classes, 128)
    prep["fc_w"] = jnp.pad(fc_w, ((0, 0), (0, cp - num_classes))) \
        .astype(jnp.bfloat16)
    prep["fc_b"] = jnp.pad(params["fc_b"], (0, cp - num_classes)) \
        .reshape(1, cp).astype(jnp.float32)
    return prep


def init_params(key, num_classes=10):
    ks = jax.random.split(key, 14)
    p = {}
    p["conv1_w"] = jax.random.normal(ks[0], (16, 1, 5, 5), jnp.float32) * 0.1
    p["conv1_b"] = jax.random.normal(ks[1], (16,), jnp.float32) * 0.1
    p["bn1_gamma"] = 1.0 + 0.1 * jax.random.normal(ks[2], (16,), jnp.float32)
    p["bn1_beta"] = 0.1 * jax.random.normal(ks[3], (16,), jnp.float32)
    p["bn1_mean"] = 0.1 * jax.random.normal(ks[4], (16,), jnp.float32)
    p["bn1_var"] = jax.random.uniform(ks[5], (16,), jnp.float32, 0.5, 1.5)
    p["conv2_w"] = jax.random.normal(ks[6], (32, 16, 5, 5), jnp.float32) * 0.05
    p["conv2_b"] = jax.random.normal(ks[7], (32,), jnp.float32) * 0.1
    p["bn2_gamma"] = 1.0 + 0.1 * jax.random.normal(ks[8], (32,), jnp.float32)
    p["bn2_beta"] = 0.1 * jax.random.normal(ks[9], (32,), jnp.float32)
    p["bn2_mean"] = 0.1 * jax.random.normal(ks[10], (32,), jnp.float32)
    p["bn2_var"] = jax.random.uniform(ks[11], (32,), jnp.float32, 0.5, 1.5)
    p["fc_w"] = jax.random.normal(ks[12], (num_classes, 7 * 7 * 32),
                                  jnp.float32) * 0.02
    p["fc_b"] = jnp.linspace(-0.1, 0.1, num_classes, dtype=jnp.float32)
    return p


@functools.partial(jax.jit, static_argnames=("num_classes",))
def convnet_forward(x_nchw, prep, num_classes=10):
    N = x_nchw.shape[0]
    x = jnp.transpose(x_nchw, (0, 2, 3, 1)).astype(jnp.float32)   # NCHW -> NHWC

    # ---- layer1: conv(1->16, 5x5, pad 2) + BN + ReLU + maxpool(2) ----
    p1 = extract_pooled_patches(x)                      # (4, N*14*14, 25) bf16
    y1 = conv_bn_relu_pool(p1, prep["w1"], prep["s1"], prep["b1"])
    y1 = y1.reshape(N, 14, 14, 16)

    # ---- layer2: conv(16->32, 5x5, pad 2) + BN + ReLU + maxpool(2) ----
    p2 = extract_pooled_patches(y1)                     # (4, N*7*7, 400) bf16
    y2 = conv_bn_relu_pool(p2, prep["w2"], prep["s2"], prep["b2"])

    # ---- fc: flatten (NHWC; NCHW permutation folded into fc_w) + Linear ----
    flat = y2.reshape(N, 7 * 7 * 32).astype(jnp.bfloat16)
    out = linear(flat, prep["fc_w"], prep["fc_b"])
    return out[:, :num_classes]


# -----------------------------------------------------------------------------
if __name__ == "__main__":
    key = jax.random.PRNGKey(0)
    k_x, k_p = jax.random.split(key)
    # MNIST-shaped input is required by the fc layer (7*7*32); small batch.
    x = jax.random.normal(k_x, (2, 1, 28, 28), jnp.float32)
    params = init_params(k_p, num_classes=10)
    prep = prepare_params(params)

    logits = convnet_forward(x, prep, num_classes=10)
    jax.block_until_ready(logits)
    assert logits.shape == (2, 10), logits.shape
    print("KERNEL_OK")
</pallas_src>

<mosaic_0001>
module attributes {stable_mosaic.version = 11 : i64} {
  func.func @_conv_bn_relu_pool_kernel(%arg0: i32, %arg1: memref<4x392x25xbf16, #tpu.memory_space<vmem>>, %arg2: memref<25x16xbf16, #tpu.memory_space<vmem>>, %arg3: memref<1x16xf32, #tpu.memory_space<vmem>>, %arg4: memref<1x16xf32, #tpu.memory_space<vmem>>, %arg5: memref<392x16xf32, #tpu.memory_space<vmem>>) attributes {dimension_semantics = [#tpu.dimension_semantics<parallel>], iteration_bounds = array<i64: 1>, scalar_prefetch = 0 : i64, scratch_operands = 0 : i64, tpu.core_type = #tpu.core_type<tc>, window_params = [{transform_indices = @transform_0, window_bounds = array<i64: 4, 392, 25>}, {pipeline_mode = #tpu.pipeline_mode<synchronous>, transform_indices = @transform_1, window_bounds = array<i64: 25, 16>}, {pipeline_mode = #tpu.pipeline_mode<synchronous>, transform_indices = @transform_2, window_bounds = array<i64: 1, 16>}, {pipeline_mode = #tpu.pipeline_mode<synchronous>, transform_indices = @transform_3, window_bounds = array<i64: 1, 16>}, {transform_indices = @transform_4, window_bounds = array<i64: 392, 16>}]} {
    %c0 = arith.constant 0 : index
    %c0_0 = arith.constant 0 : index
    %c0_1 = arith.constant 0 : index
    %0 = vector.load %arg1[%c0, %c0_0, %c0_1] : memref<4x392x25xbf16, #tpu.memory_space<vmem>>, vector<4x392x25xbf16>
    %1 = vector.shape_cast %0 : vector<4x392x25xbf16> to vector<1568x25xbf16>
    %c0_2 = arith.constant 0 : index
    %c0_3 = arith.constant 0 : index
    %2 = vector.load %arg2[%c0_2, %c0_3] : memref<25x16xbf16, #tpu.memory_space<vmem>>, vector<25x16xbf16>
    %cst = arith.constant dense<0.000000e+00> : vector<1568x16xf32>
    %3 = tpu.matmul %1, %2, %cst {dimension_numbers = #tpu.dot_dimension_numbers<[1], [0], [0], [1], [0, 0, 1, 1], [], []>} : vector<1568x25xbf16>, vector<25x16xbf16>, vector<1568x16xf32> -> vector<1568x16xf32>
    %c0_4 = arith.constant 0 : index
    %c0_5 = arith.constant 0 : index
    %4 = vector.load %arg3[%c0_4, %c0_5] : memref<1x16xf32, #tpu.memory_space<vmem>>, vector<1x16xf32>
    %5 = vector.broadcast %4 : vector<1x16xf32> to vector<1568x16xf32>
    %6 = arith.mulf %3, %5 : vector<1568x16xf32>
    %7 = vector.shape_cast %6 : vector<1568x16xf32> to vector<4x392x16xf32>
    %8 = vector.extract_strided_slice %7 {offsets = [0, 0, 0], sizes = [1, 392, 16], strides = [1, 1, 1]} : vector<4x392x16xf32> to vector<1x392x16xf32>
    %9 = vector.shape_cast %8 : vector<1x392x16xf32> to vector<392x16xf32>
    %10 = vector.extract_strided_slice %7 {offsets = [1, 0, 0], sizes = [1, 392, 16], strides = [1, 1, 1]} : vector<4x392x16xf32> to vector<1x392x16xf32>
    %11 = vector.shape_cast %10 : vector<1x392x16xf32> to vector<392x16xf32>
    %12 = arith.maximumf %9, %11 : vector<392x16xf32>
    %13 = vector.extract_strided_slice %7 {offsets = [2, 0, 0], sizes = [1, 392, 16], strides = [1, 1, 1]} : vector<4x392x16xf32> to vector<1x392x16xf32>
    %14 = vector.shape_cast %13 : vector<1x392x16xf32> to vector<392x16xf32>
    %15 = vector.extract_strided_slice %7 {offsets = [3, 0, 0], sizes = [1, 392, 16], strides = [1, 1, 1]} : vector<4x392x16xf32> to vector<1x392x16xf32>
    %16 = vector.shape_cast %15 : vector<1x392x16xf32> to vector<392x16xf32>
    %17 = arith.maximumf %14, %16 : vector<392x16xf32>
    %18 = arith.maximumf %12, %17 : vector<392x16xf32>
    %c0_6 = arith.constant 0 : index
    %c0_7 = arith.constant 0 : index
    %19 = vector.load %arg4[%c0_6, %c0_7] : memref<1x16xf32, #tpu.memory_space<vmem>>, vector<1x16xf32>
    %20 = vector.broadcast %19 : vector<1x16xf32> to vector<392x16xf32>
    %21 = arith.addf %18, %20 : vector<392x16xf32>
    %cst_8 = arith.constant 0.000000e+00 : f32
    %22 = vector.broadcast %cst_8 : f32 to vector<392x16xf32>
    %23 = arith.maximumf %21, %22 : vector<392x16xf32>
    %c0_9 = arith.constant 0 : index
    %c0_10 = arith.constant 0 : index
    %24 = vector.load %arg5[%c0_9, %c0_10] : memref<392x16xf32, #tpu.memory_space<vmem>>, vector<392x16xf32>
    tpu.vector_store %arg5[%c0_9, %c0_10], %23 {strides = array<i32>} : memref<392x16xf32, #tpu.memory_space<vmem>>, vector<392x16xf32>,
    return
  }
  func.func @transform_0(%arg0: i32) -> (i32, i32, i32) {
    %c0_i32 = arith.constant 0 : i32
    %c0_i32_0 = arith.constant 0 : i32
    %c0_i32_1 = arith.constant 0 : i32
    return %c0_i32, %arg0, %c0_i32_0 : i32, i32, i32
  }
  func.func @transform_1(%arg0: i32) -> (i32, i32) {
    %c0_i32 = arith.constant 0 : i32
    %c0_i32_0 = arith.constant 0 : i32
    %c0_i32_1 = arith.constant 0 : i32
    return %c0_i32, %c0_i32_0 : i32, i32
  }
  func.func @transform_2(%arg0: i32) -> (i32, i32) {
    %c0_i32 = arith.constant 0 : i32
    %c0_i32_0 = arith.constant 0 : i32
    %c0_i32_1 = arith.constant 0 : i32
    return %c0_i32, %c0_i32_0 : i32, i32
  }
  func.func @transform_3(%arg0: i32) -> (i32, i32) {
    %c0_i32 = arith.constant 0 : i32
    %c0_i32_0 = arith.constant 0 : i32
    %c0_i32_1 = arith.constant 0 : i32
    return %c0_i32, %c0_i32_0 : i32, i32
  }
  func.func @transform_4(%arg0: i32) -> (i32, i32) {
    %c0_i32 = arith.constant 0 : i32
    %c0_i32_0 = arith.constant 0 : i32
    return %arg0, %c0_i32 : i32, i32
  }
}

module attributes {stable_mosaic.version = 11 : i64} {
  func.func @_conv_bn_relu_pool_kernel(%arg0: i32, %arg1: memref<4x104x400xbf16, #tpu.memory_space<vmem>>, %arg2: memref<400x32xbf16, #tpu.memory_space<vmem>>, %arg3: memref<1x32xf32, #tpu.memory_space<vmem>>, %arg4: memref<1x32xf32, #tpu.memory_space<vmem>>, %arg5: memref<104x32xf32, #tpu.memory_space<vmem>>) attributes {dimension_semantics = [#tpu.dimension_semantics<parallel>], iteration_bounds = array<i64: 1>, scalar_prefetch = 0 : i64, scratch_operands = 0 : i64, tpu.core_type = #tpu.core_type<tc>, window_params = [{transform_indices = @transform_0, window_bounds = array<i64: 4, 104, 400>}, {pipeline_mode = #tpu.pipeline_mode<synchronous>, transform_indices = @transform_1, window_bounds = array<i64: 400, 32>}, {pipeline_mode = #tpu.pipeline_mode<synchronous>, transform_indices = @transform_2, window_bounds = array<i64: 1, 32>}, {pipeline_mode = #tpu.pipeline_mode<synchronous>, transform_indices = @transform_3, window_bounds = array<i64: 1, 32>}, {transform_indices = @transform_4, window_bounds = array<i64: 104, 32>}]} {
    %c0 = arith.constant 0 : index
    %c0_0 = arith.constant 0 : index
    %c0_1 = arith.constant 0 : index
    %0 = vector.load %arg1[%c0, %c0_0, %c0_1] : memref<4x104x400xbf16, #tpu.memory_space<vmem>>, vector<4x104x400xbf16>
    %1 = vector.shape_cast %0 : vector<4x104x400xbf16> to vector<416x400xbf16>
    %c0_2 = arith.constant 0 : index
    %c0_3 = arith.constant 0 : index
    %2 = vector.load %arg2[%c0_2, %c0_3] : memref<400x32xbf16, #tpu.memory_space<vmem>>, vector<400x32xbf16>
    %cst = arith.constant dense<0.000000e+00> : vector<416x32xf32>
    %3 = tpu.matmul %1, %2, %cst {dimension_numbers = #tpu.dot_dimension_numbers<[1], [0], [0], [1], [0, 0, 1, 1], [], []>} : vector<416x400xbf16>, vector<400x32xbf16>, vector<416x32xf32> -> vector<416x32xf32>
    %c0_4 = arith.constant 0 : index
    %c0_5 = arith.constant 0 : index
    %4 = vector.load %arg3[%c0_4, %c0_5] : memref<1x32xf32, #tpu.memory_space<vmem>>, vector<1x32xf32>
    %5 = vector.broadcast %4 : vector<1x32xf32> to vector<416x32xf32>
    %6 = arith.mulf %3, %5 : vector<416x32xf32>
    %7 = vector.shape_cast %6 : vector<416x32xf32> to vector<4x104x32xf32>
    %8 = vector.extract_strided_slice %7 {offsets = [0, 0, 0], sizes = [1, 104, 32], strides = [1, 1, 1]} : vector<4x104x32xf32> to vector<1x104x32xf32>
    %9 = vector.shape_cast %8 : vector<1x104x32xf32> to vector<104x32xf32>
    %10 = vector.extract_strided_slice %7 {offsets = [1, 0, 0], sizes = [1, 104, 32], strides = [1, 1, 1]} : vector<4x104x32xf32> to vector<1x104x32xf32>
    %11 = vector.shape_cast %10 : vector<1x104x32xf32> to vector<104x32xf32>
    %12 = arith.maximumf %9, %11 : vector<104x32xf32>
    %13 = vector.extract_strided_slice %7 {offsets = [2, 0, 0], sizes = [1, 104, 32], strides = [1, 1, 1]} : vector<4x104x32xf32> to vector<1x104x32xf32>
    %14 = vector.shape_cast %13 : vector<1x104x32xf32> to vector<104x32xf32>
    %15 = vector.extract_strided_slice %7 {offsets = [3, 0, 0], sizes = [1, 104, 32], strides = [1, 1, 1]} : vector<4x104x32xf32> to vector<1x104x32xf32>
    %16 = vector.shape_cast %15 : vector<1x104x32xf32> to vector<104x32xf32>
    %17 = arith.maximumf %14, %16 : vector<104x32xf32>
    %18 = arith.maximumf %12, %17 : vector<104x32xf32>
    %c0_6 = arith.constant 0 : index
    %c0_7 = arith.constant 0 : index
    %19 = vector.load %arg4[%c0_6, %c0_7] : memref<1x32xf32, #tpu.memory_space<vmem>>, vector<1x32xf32>
    %20 = vector.broadcast %19 : vector<1x32xf32> to vector<104x32xf32>
    %21 = arith.addf %18, %20 : vector<104x32xf32>
    %cst_8 = arith.constant 0.000000e+00 : f32
    %22 = vector.broadcast %cst_8 : f32 to vector<104x32xf32>
    %23 = arith.maximumf %21, %22 : vector<104x32xf32>
    %c0_9 = arith.constant 0 : index
    %c0_10 = arith.constant 0 : index
    %24 = vector.load %arg5[%c0_9, %c0_10] : memref<104x32xf32, #tpu.memory_space<vmem>>, vector<104x32xf32>
    tpu.vector_store %arg5[%c0_9, %c0_10], %23 {strides = array<i32>} : memref<104x32xf32, #tpu.memory_space<vmem>>, vector<104x32xf32>,
    return
  }
  func.func @transform_0(%arg0: i32) -> (i32, i32, i32) {
    %c0_i32 = arith.constant 0 : i32
    %c0_i32_0 = arith.constant 0 : i32
    %c0_i32_1 = arith.constant 0 : i32
    return %c0_i32, %arg0, %c0_i32_0 : i32, i32, i32
  }
  func.func @transform_1(%arg0: i32) -> (i32, i32) {
    %c0_i32 = arith.constant 0 : i32
    %c0_i32_0 = arith.constant 0 : i32
    %c0_i32_1 = arith.constant 0 : i32
    return %c0_i32, %c0_i32_0 : i32, i32
  }
  func.func @transform_2(%arg0: i32) -> (i32, i32) {
    %c0_i32 = arith.constant 0 : i32
    %c0_i32_0 = arith.constant 0 : i32
    %c0_i32_1 = arith.constant 0 : i32
    return %c0_i32, %c0_i32_0 : i32, i32
  }
  func.func @transform_3(%arg0: i32) -> (i32, i32) {
    %c0_i32 = arith.constant 0 : i32
    %c0_i32_0 = arith.constant 0 : i32
    %c0_i32_1 = arith.constant 0 : i32
    return %c0_i32, %c0_i32_0 : i32, i32
  }
  func.func @transform_4(%arg0: i32) -> (i32, i32) {
    %c0_i32 = arith.constant 0 : i32
    %c0_i32_0 = arith.constant 0 : i32
    return %arg0, %c0_i32 : i32, i32
  }
}

module attributes {stable_mosaic.version = 11 : i64} {
  func.func @_linear_kernel(%arg0: i32, %arg1: memref<8x1568xbf16, #tpu.memory_space<vmem>>, %arg2: memref<1568x128xbf16, #tpu.memory_space<vmem>>, %arg3: memref<1x128xf32, #tpu.memory_space<vmem>>, %arg4: memref<8x128xf32, #tpu.memory_space<vmem>>) attributes {dimension_semantics = [#tpu.dimension_semantics<parallel>], iteration_bounds = array<i64: 1>, scalar_prefetch = 0 : i64, scratch_operands = 0 : i64, tpu.core_type = #tpu.core_type<tc>, window_params = [{transform_indices = @transform_0, window_bounds = array<i64: 8, 1568>}, {pipeline_mode = #tpu.pipeline_mode<synchronous>, transform_indices = @transform_1, window_bounds = array<i64: 1568, 128>}, {pipeline_mode = #tpu.pipeline_mode<synchronous>, transform_indices = @transform_2, window_bounds = array<i64: 1, 128>}, {transform_indices = @transform_3, window_bounds = array<i64: 8, 128>}]} {
    %c0 = arith.constant 0 : index
    %c0_0 = arith.constant 0 : index
    %0 = vector.load %arg1[%c0, %c0_0] : memref<8x1568xbf16, #tpu.memory_space<vmem>>, vector<8x1568xbf16>
    %c0_1 = arith.constant 0 : index
    %c0_2 = arith.constant 0 : index
    %1 = vector.load %arg2[%c0_1, %c0_2] : memref<1568x128xbf16, #tpu.memory_space<vmem>>, vector<1568x128xbf16>
    %cst = arith.constant dense<0.000000e+00> : vector<8x128xf32>
    %2 = tpu.matmul %0, %1, %cst {dimension_numbers = #tpu.dot_dimension_numbers<[1], [0], [0], [1], [0, 0, 1, 1], [], []>} : vector<8x1568xbf16>, vector<1568x128xbf16>, vector<8x128xf32> -> vector<8x128xf32>
    %c0_3 = arith.constant 0 : index
    %c0_4 = arith.constant 0 : index
    %3 = vector.load %arg3[%c0_3, %c0_4] : memref<1x128xf32, #tpu.memory_space<vmem>>, vector<1x128xf32>
    %4 = vector.broadcast %3 : vector<1x128xf32> to vector<8x128xf32>
    %5 = arith.addf %2, %4 : vector<8x128xf32>
    %c0_5 = arith.constant 0 : index
    %c0_6 = arith.constant 0 : index
    %6 = vector.load %arg4[%c0_5, %c0_6] : memref<8x128xf32, #tpu.memory_space<vmem>>, vector<8x128xf32>
    tpu.vector_store %arg4[%c0_5, %c0_6], %5 {strides = array<i32>} : memref<8x128xf32, #tpu.memory_space<vmem>>, vector<8x128xf32>,
    return
  }
  func.func @transform_0(%arg0: i32) -> (i32, i32) {
    %c0_i32 = arith.constant 0 : i32
    %c0_i32_0 = arith.constant 0 : i32
    return %arg0, %c0_i32 : i32, i32
  }
  func.func @transform_1(%arg0: i32) -> (i32, i32) {
    %c0_i32 = arith.constant 0 : i32
    %c0_i32_0 = arith.constant 0 : i32
    %c0_i32_1 = arith.constant 0 : i32
    return %c0_i32, %c0_i32_0 : i32, i32
  }
  func.func @transform_2(%arg0: i32) -> (i32, i32) {
    %c0_i32 = arith.constant 0 : i32
    %c0_i32_0 = arith.constant 0 : i32
    %c0_i32_1 = arith.constant 0 : i32
    return %c0_i32, %c0_i32_0 : i32, i32
  }
  func.func @transform_3(%arg0: i32) -> (i32, i32) {
    %c0_i32 = arith.constant 0 : i32
    %c0_i32_0 = arith.constant 0 : i32
    return %arg0, %c0_i32 : i32, i32
  }
}

</mosaic_0001>

<llo_original>
// kernel: convnet_forward.3
$region0: #{convnet_forward.3}
  #allocation0 [shape = 'u32[]', space=smem, size = 0x4, offset = 0x4, fixed_abs, tag = 'smem constant byte address 0x4 - core index']
  #allocation1 [shape = 'u32[144,128]{1,0:T(1,128)}', space=vmem, size = 0x12000, scoped, tag = 'internal scratch']
  %s0 = inlined_call_operand.vmem [shape: bf16[4,392,25], index: 0, kind: input, shape index: {}]
  %s1 = inlined_call_operand.vmem [shape: bf16[25,16], index: 1, kind: input, shape index: {}]
  %s2 = inlined_call_operand.vmem [shape: f32[1,16], index: 2, kind: input, shape index: {}]
  %s3 = inlined_call_operand.vmem [shape: f32[1,16], index: 3, kind: input, shape index: {}]
  %s4 = inlined_call_operand.vmem [shape: f32[392,16], index: 4, kind: output, shape index: {}]
  %s5 = sld [smem:[#allocation0]]
  $region26: #{convnet_forward.3} parent=0
    _
  %s7 = ssub.s32 1, %s5
  %s8 = scalar_select 0, %s7, %s5
  // Predicated region
  $region2: #{convnet_forward.3} parent=0 // pred_check
    _
  $region3: #{convnet_forward.3} parent=0 // pred_check_branch
    %10 = sbr.rel (0) target = $region5
  $region4: #{convnet_forward.3} parent=0 // pred_region
    _
  $region5: #{convnet_forward.3} parent=0 // pred_fallthru
    _
  // Predicated region
  $region6: #{convnet_forward.3} parent=0 // pred_check
    _
  $region7: #{convnet_forward.3} parent=0 // pred_check_branch
    %12 = sbr.rel (0) target = $region9
  $region8: #{convnet_forward.3} parent=0 // pred_region
    _
  $region9: #{convnet_forward.3} parent=0 // pred_fallthru
    _
  // Predicated region
  $region10: #{convnet_forward.3} parent=0 // pred_check
    _
  $region11: #{convnet_forward.3} parent=0 // pred_check_branch
    %14 = sbr.rel (0) target = $region13
  $region12: #{convnet_forward.3} parent=0 // pred_region
    _
  $region13: #{convnet_forward.3} parent=0 // pred_fallthru
    _
  // Predicated region
  $region14: #{convnet_forward.3} parent=0 // pred_check
    _
  $region15: #{convnet_forward.3} parent=0 // pred_check_branch
    %16 = sbr.rel (0) target = $region17
  $region16: #{convnet_forward.3} parent=0 // pred_region
    _
  $region17: #{convnet_forward.3} parent=0 // pred_fallthru
    _
  %v18 = vld [vmem:[%s0] sm:$0xf]
  %v19 = vld [vmem:[%s0 + $0x4] sm:$0xf]
  %v20 = vld [vmem:[%s0 + $0x8] sm:$0xf]
  %v21 = vld [vmem:[%s0 + $0xc] sm:$0xf]
  %v22 = vld [vmem:[%s0 + $0x10] sm:$0xf]
  %v23 = vld [vmem:[%s0 + $0x14] sm:$0xf]
  %v24 = vld [vmem:[%s0 + $0x18] sm:$0xf]
  %v25 = vld [vmem:[%s0 + $0x1c] sm:$0xf]
  %v26 = vld [vmem:[%s0 + $0x20] sm:$0xf]
  %v27 = vld [vmem:[%s0 + $0x24] sm:$0xf]
  %v28 = vld [vmem:[%s0 + $0x28] sm:$0xf]
  %v29 = vld [vmem:[%s0 + $0x2c] sm:$0xf]
  %v30 = vld [vmem:[%s0 + $0x30] sm:$0xf]
  %v31 = vld [vmem:[%s0 + $0x34] sm:$0xf]
  %v32 = vld [vmem:[%s0 + $0x38] sm:$0xf]
  %v33 = vld [vmem:[%s0 + $0x3c] sm:$0xf]
  %v34 = vld [vmem:[%s0 + $0x40] sm:$0xf]
  %v35 = vld [vmem:[%s0 + $0x44] sm:$0xf]
  %v36 = vld [vmem:[%s0 + $0x48] sm:$0xf]
  %v37 = vld [vmem:[%s0 + $0x4c] sm:$0xf]
  %v38 = vld [vmem:[%s0 + $0x50] sm:$0xf]
  %v39 = vld [vmem:[%s0 + $0x54] sm:$0xf]
  %v40 = vld [vmem:[%s0 + $0x58] sm:$0xf]
  %v41 = vld [vmem:[%s0 + $0x5c] sm:$0xf]
  %v42 = vld [vmem:[%s0 + $0x60] sm:$0xf]
  %v43 = vld [vmem:[%s0 + $0x64] sm:$0xf]
  %v44 = vld [vmem:[%s0 + $0x68] sm:$0xf]
  %v45 = vld [vmem:[%s0 + $0x6c] sm:$0xf]
  %v46 = vld [vmem:[%s0 + $0x70] sm:$0xf]
  %v47 = vld [vmem:[%s0 + $0x74] sm:$0xf]
  %v48 = vld [vmem:[%s0 + $0x78] sm:$0xf]
  %v49 = vld [vmem:[%s0 + $0x7c] sm:$0xf]
  %v50 = vld [vmem:[%s0 + $0x80] sm:$0xf]
  %v51 = vld [vmem:[%s0 + $0x84] sm:$0xf]
  %v52 = vld [vmem:[%s0 + $0x88] sm:$0xf]
  %v53 = vld [vmem:[%s0 + $0x8c] sm:$0xf]
  %v54 = vld [vmem:[%s0 + $0x90] sm:$0xf]
  %v55 = vld [vmem:[%s0 + $0x94] sm:$0xf]
  %v56 = vld [vmem:[%s0 + $0x98] sm:$0xf]
  %v57 = vld [vmem:[%s0 + $0x9c] sm:$0xf]
  %v58 = vld [vmem:[%s0 + $0xa0] sm:$0xf]
  %v59 = vld [vmem:[%s0 + $0xa4] sm:$0xf]
  %v60 = vld [vmem:[%s0 + $0xa8] sm:$0xf]
  %v61 = vld [vmem:[%s0 + $0xac] sm:$0xf]
  %v62 = vld [vmem:[%s0 + $0xb0] sm:$0xf]
  %v63 = vld [vmem:[%s0 + $0xb4] sm:$0xf]
  %v64 = vld [vmem:[%s0 + $0xb8] sm:$0xf]
  %v65 = vld [vmem:[%s0 + $0xbc] sm:$0xf]
  %v66 = vld [vmem:[%s0 + $0xc0] sm:$0xf]
  %v67 = vld [vmem:[%s0 + $0xc4] sm:$0xf]
  %v68 = vld [vmem:[%s0 + $0xc8] sm:$0xf]
  %v69 = vld [vmem:[%s0 + $0xcc] sm:$0xf]
  %v70 = vld [vmem:[%s0 + $0xd0] sm:$0xf]
  %v71 = vld [vmem:[%s0 + $0xd4] sm:$0xf]
  %v72 = vld [vmem:[%s0 + $0xd8] sm:$0xf]
  %v73 = vld [vmem:[%s0 + $0xdc] sm:$0xf]
  %v74 = vld [vmem:[%s0 + $0xe0] sm:$0xf]
  %v75 = vld [vmem:[%s0 + $0xe4] sm:$0xf]
  %v76 = vld [vmem:[%s0 + $0xe8] sm:$0xf]
  %v77 = vld [vmem:[%s0 + $0xec] sm:$0xf]
  %v78 = vld [vmem:[%s0 + $0xf0] sm:$0xf]
  %v79 = vld [vmem:[%s0 + $0xf4] sm:$0xf]
  %v80 = vld [vmem:[%s0 + $0xf8] sm:$0xf]
  %v81 = vld [vmem:[%s0 + $0xfc] sm:$0xf]
  %v82 = vld [vmem:[%s0 + $0x100] sm:$0xf]
  %v83 = vld [vmem:[%s0 + $0x104] sm:$0xf]
  %v84 = vld [vmem:[%s0 + $0x108] sm:$0xf]
  %v85 = vld [vmem:[%s0 + $0x10c] sm:$0xf]
  %v86 = vld [vmem:[%s0 + $0x110] sm:$0xf]
  %v87 = vld [vmem:[%s0 + $0x114] sm:$0xf]
  %v88 = vld [vmem:[%s0 + $0x118] sm:$0xf]
  %v89 = vld [vmem:[%s0 + $0x11c] sm:$0xf]
  %v90 = vld [vmem:[%s0 + $0x120] sm:$0xf]
  %v91 = vld [vmem:[%s0 + $0x124] sm:$0xf]
  %v92 = vld [vmem:[%s0 + $0x128] sm:$0xf]
  %v93 = vld [vmem:[%s0 + $0x12c] sm:$0xf]
  %v94 = vld [vmem:[%s0 + $0x130] sm:$0xf]
  %v95 = vld [vmem:[%s0 + $0x134] sm:$0xf]
  %v96 = vld [vmem:[%s0 + $0x138] sm:$0xf]
  %v97 = vld [vmem:[%s0 + $0x13c] sm:$0xf]
  %v98 = vld [vmem:[%s0 + $0x140] sm:$0xf]
  %v99 = vld [vmem:[%s0 + $0x144] sm:$0xf]
  %v100 = vld [vmem:[%s0 + $0x148] sm:$0xf]
  %v101 = vld [vmem:[%s0 + $0x14c] sm:$0xf]
  %v102 = vld [vmem:[%s0 + $0x150] sm:$0xf]
  %v103 = vld [vmem:[%s0 + $0x154] sm:$0xf]
  %v104 = vld [vmem:[%s0 + $0x158] sm:$0xf]
  %v105 = vld [vmem:[%s0 + $0x15c] sm:$0xf]
  %v106 = vld [vmem:[%s0 + $0x160] sm:$0xf]
  %v107 = vld [vmem:[%s0 + $0x164] sm:$0xf]
  %v108 = vld [vmem:[%s0 + $0x168] sm:$0xf]
  %v109 = vld [vmem:[%s0 + $0x16c] sm:$0xf]
  %v110 = vld [vmem:[%s0 + $0x170] sm:$0xf]
  %v111 = vld [vmem:[%s0 + $0x174] sm:$0xf]
  %v112 = vld [vmem:[%s0 + $0x178] sm:$0xf]
  %v113 = vld [vmem:[%s0 + $0x17c] sm:$0xf]
  %v114 = vld [vmem:[%s0 + $0x180] sm:$0xf]
  %v115 = vld [vmem:[%s0 + $0x184] sm:$0xf]
  %v116 = vld [vmem:[%s0 + $0x188] sm:$0xf]
  %v117 = vld [vmem:[%s0 + $0x18c] sm:$0xf]
  %v118 = vld [vmem:[%s0 + $0x190] sm:$0xf]
  %v119 = vld [vmem:[%s0 + $0x194] sm:$0xf]
  %v120 = vld [vmem:[%s0 + $0x198] sm:$0xf]
  %v121 = vld [vmem:[%s0 + $0x19c] sm:$0xf]
  %v122 = vld [vmem:[%s0 + $0x1a0] sm:$0xf]
  %v123 = vld [vmem:[%s0 + $0x1a4] sm:$0xf]
  %v124 = vld [vmem:[%s0 + $0x1a8] sm:$0xf]
  %v125 = vld [vmem:[%s0 + $0x1ac] sm:$0xf]
  %v126 = vld [vmem:[%s0 + $0x1b0] sm:$0xf]
  %v127 = vld [vmem:[%s0 + $0x1b4] sm:$0xf]
  %v128 = vld [vmem:[%s0 + $0x1b8] sm:$0xf]
  %v129 = vld [vmem:[%s0 + $0x1bc] sm:$0xf]
  %v130 = vld [vmem:[%s0 + $0x1c0] sm:$0xf]
  %v131 = vld [vmem:[%s0 + $0x1c4] sm:$0xf]
  %v132 = vld [vmem:[%s0 + $0x1c8] sm:$0xf]
  %v133 = vld [vmem:[%s0 + $0x1cc] sm:$0xf]
  %v134 = vld [vmem:[%s0 + $0x1d0] sm:$0xf]
  %v135 = vld [vmem:[%s0 + $0x1d4] sm:$0xf]
  %v136 = vld [vmem:[%s0 + $0x1d8] sm:$0xf]
  %v137 = vld [vmem:[%s0 + $0x1dc] sm:$0xf]
  %v138 = vld [vmem:[%s0 + $0x1e0] sm:$0xf]
  %v139 = vld [vmem:[%s0 + $0x1e4] sm:$0xf]
  %v140 = vld [vmem:[%s0 + $0x1e8] sm:$0xf]
  %v141 = vld [vmem:[%s0 + $0x1ec] sm:$0xf]
  %v142 = vld [vmem:[%s0 + $0x1f0] sm:$0xf]
  %v143 = vld [vmem:[%s0 + $0x1f4] sm:$0xf]
  %v144 = vld [vmem:[%s0 + $0x1f8] sm:$0xf]
  %v145 = vld [vmem:[%s0 + $0x1fc] sm:$0xf]
  %v146 = vld [vmem:[%s0 + $0x200] sm:$0xf]
  %v147 = vld [vmem:[%s0 + $0x204] sm:$0xf]
  %v148 = vld [vmem:[%s0 + $0x208] sm:$0xf]
  %v149 = vld [vmem:[%s0 + $0x20c] sm:$0xf]
  %v150 = vld [vmem:[%s0 + $0x210] sm:$0xf]
  %v151 = vld [vmem:[%s0 + $0x214] sm:$0xf]
  %v152 = vld [vmem:[%s0 + $0x218] sm:$0xf]
  %v153 = vld [vmem:[%s0 + $0x21c] sm:$0xf]
  %v154 = vld [vmem:[%s0 + $0x220] sm:$0xf]
  %v155 = vld [vmem:[%s0 + $0x224] sm:$0xf]
  %v156 = vld [vmem:[%s0 + $0x228] sm:$0xf]
  %v157 = vld [vmem:[%s0 + $0x22c] sm:$0xf]
  %v158 = vld [vmem:[%s0 + $0x230] sm:$0xf]
  %v159 = vld [vmem:[%s0 + $0x234] sm:$0xf]
  %v160 = vld [vmem:[%s0 + $0x238] sm:$0xf]
  %v161 = vld [vmem:[%s0 + $0x23c] sm:$0xf]
  %v162 = vld [vmem:[%s0 + $0x240] sm:$0xf]
  %v163 = vld [vmem:[%s0 + $0x244] sm:$0xf]
  %v164 = vld [vmem:[%s0 + $0x248] sm:$0xf]
  %v165 = vld [vmem:[%s0 + $0x24c] sm:$0xf]
  %v166 = vld [vmem:[%s0 + $0x250] sm:$0xf]
  %v167 = vld [vmem:[%s0 + $0x254] sm:$0xf]
  %v168 = vld [vmem:[%s0 + $0x258] sm:$0xf]
  %v169 = vld [vmem:[%s0 + $0x25c] sm:$0xf]
  %v170 = vld [vmem:[%s0 + $0x260] sm:$0xf]
  %v171 = vld [vmem:[%s0 + $0x264] sm:$0xf]
  %v172 = vld [vmem:[%s0 + $0x268] sm:$0xf]
  %v173 = vld [vmem:[%s0 + $0x26c] sm:$0xf]
  %v174 = vld [vmem:[%s0 + $0x270] sm:$0xf]
  %v175 = vld [vmem:[%s0 + $0x274] sm:$0xf]
  %v176 = vld [vmem:[%s0 + $0x278] sm:$0xf]
  %v177 = vld [vmem:[%s0 + $0x27c] sm:$0xf]
  %v178 = vld [vmem:[%s0 + $0x280] sm:$0xf]
  %v179 = vld [vmem:[%s0 + $0x284] sm:$0xf]
  %v180 = vld [vmem:[%s0 + $0x288] sm:$0xf]
  %v181 = vld [vmem:[%s0 + $0x28c] sm:$0xf]
  %v182 = vld [vmem:[%s0 + $0x290] sm:$0xf]
  %v183 = vld [vmem:[%s0 + $0x294] sm:$0xf]
  %v184 = vld [vmem:[%s0 + $0x298] sm:$0xf]
  %v185 = vld [vmem:[%s0 + $0x29c] sm:$0xf]
  %v186 = vld [vmem:[%s0 + $0x2a0] sm:$0xf]
  %v187 = vld [vmem:[%s0 + $0x2a4] sm:$0xf]
  %v188 = vld [vmem:[%s0 + $0x2a8] sm:$0xf]
  %v189 = vld [vmem:[%s0 + $0x2ac] sm:$0xf]
  %v190 = vld [vmem:[%s0 + $0x2b0] sm:$0xf]
  %v191 = vld [vmem:[%s0 + $0x2b4] sm:$0xf]
  %v192 = vld [vmem:[%s0 + $0x2b8] sm:$0xf]
  %v193 = vld [vmem:[%s0 + $0x2bc] sm:$0xf]
  %v194 = vld [vmem:[%s0 + $0x2c0] sm:$0xf]
  %v195 = vld [vmem:[%s0 + $0x2c4] sm:$0xf]
  %v196 = vld [vmem:[%s0 + $0x2c8] sm:$0xf]
  %v197 = vld [vmem:[%s0 + $0x2cc] sm:$0xf]
  %v198 = vld [vmem:[%s0 + $0x2d0] sm:$0xf]
  %v199 = vld [vmem:[%s0 + $0x2d4] sm:$0xf]
  %v200 = vld [vmem:[%s0 + $0x2d8] sm:$0xf]
  %v201 = vld [vmem:[%s0 + $0x2dc] sm:$0xf]
  %v202 = vld [vmem:[%s0 + $0x2e0] sm:$0xf]
  %v203 = vld [vmem:[%s0 + $0x2e4] sm:$0xf]
  %v204 = vld [vmem:[%s0 + $0x2e8] sm:$0xf]
  %v205 = vld [vmem:[%s0 + $0x2ec] sm:$0xf]
  %v206 = vld [vmem:[%s0 + $0x2f0] sm:$0xf]
  %v207 = vld [vmem:[%s0 + $0x2f4] sm:$0xf]
  %v208 = vld [vmem:[%s0 + $0x2f8] sm:$0xf]
  %v209 = vld [vmem:[%s0 + $0x2fc] sm:$0xf]
  %v210 = vld [vmem:[%s0 + $0x300] sm:$0xf]
  %v211 = vld [vmem:[%s0 + $0x304] sm:$0xf]
  %v212 = vld [vmem:[%s0 + $0x308] sm:$0xf]
  %v213 = vld [vmem:[%s0 + $0x30c] sm:$0xf]
  %v214 = vld [vmem:[%s1] sm:$0xf]
  %v215 = vld [vmem:[%s1 + $0x4] sm:$0xf]
  %v216 = vld [vmem:[%s1 + $0x8] sm:$0xf]
  %v217 = vld [vmem:[%s1 + $0xc] sm:$0x1]
  %v414 = vunpack.c.l.b16 %v18
  %v415 = vunpack.c.l.b16 %v19
  %v416 = vunpack.c.l.b16 %v20
  %v417 = vunpack.c.l.b16 %v21
  %v418 = vunpack.c.l.b16 %v22
  %v419 = vunpack.c.l.b16 %v23
  %v420 = vunpack.c.l.b16 %v24
  %v421 = vunpack.c.l.b16 %v25
  %v422 = vunpack.c.l.b16 %v26
  %v423 = vunpack.c.l.b16 %v27
  %v424 = vunpack.c.l.b16 %v28
  %v425 = vunpack.c.l.b16 %v29
  %v426 = vunpack.c.l.b16 %v30
  %v427 = vunpack.c.l.b16 %v31
  %v428 = vunpack.c.l.b16 %v32
  %v429 = vunpack.c.l.b16 %v33
  %v430 = vunpack.c.l.b16 %v34
  %v431 = vunpack.c.l.b16 %v35
  %v432 = vunpack.c.l.b16 %v36
  %v433 = vunpack.c.l.b16 %v37
  %v434 = vunpack.c.l.b16 %v38
  %v435 = vunpack.c.l.b16 %v39
  %v436 = vunpack.c.l.b16 %v40
  %v437 = vunpack.c.l.b16 %v41
  %v438 = vunpack.c.l.b16 %v42
  %v439 = vunpack.c.l.b16 %v43
  %v440 = vunpack.c.l.b16 %v44
  %v441 = vunpack.c.l.b16 %v45
  %v442 = vunpack.c.l.b16 %v46
  %v443 = vunpack.c.l.b16 %v47
  %v444 = vunpack.c.l.b16 %v48
  %v445 = vunpack.c.l.b16 %v49
  %v446 = vunpack.c.l.b16 %v50
  %v447 = vunpack.c.l.b16 %v51
  %v448 = vunpack.c.l.b16 %v52
  %v449 = vunpack.c.l.b16 %v53
  %v450 = vunpack.c.l.b16 %v54
  %v451 = vunpack.c.l.b16 %v55
  %v452 = vunpack.c.l.b16 %v56
  %v453 = vunpack.c.l.b16 %v57
  %v454 = vunpack.c.l.b16 %v58
  %v455 = vunpack.c.l.b16 %v59
  %v456 = vunpack.c.l.b16 %v60
  %v457 = vunpack.c.l.b16 %v61
  %v458 = vunpack.c.l.b16 %v62
  %v459 = vunpack.c.l.b16 %v63
  %v460 = vunpack.c.l.b16 %v64
  %v461 = vunpack.c.l.b16 %v65
  %v462 = vunpack.c.l.b16 %v66
  %v463 = vunpack.c.l.b16 %v67
  %v464 = vunpack.c.l.b16 %v68
  %v465 = vunpack.c.l.b16 %v69
  %v466 = vunpack.c.l.b16 %v70
  %v467 = vunpack.c.l.b16 %v71
  %v468 = vunpack.c.l.b16 %v72
  %v469 = vunpack.c.l.b16 %v73
  %v470 = vunpack.c.l.b16 %v74
  %v471 = vunpack.c.l.b16 %v75
  %v472 = vunpack.c.l.b16 %v76
  %v473 = vunpack.c.l.b16 %v77
  %v474 = vunpack.c.l.b16 %v78
  %v475 = vunpack.c.l.b16 %v79
  %v476 = vunpack.c.l.b16 %v80
  %v477 = vunpack.c.l.b16 %v81
  %v478 = vunpack.c.l.b16 %v82
  %v479 = vunpack.c.l.b16 %v83
  %v480 = vunpack.c.l.b16 %v84
  %v481 = vunpack.c.l.b16 %v85
  %v482 = vunpack.c.l.b16 %v86
  %v483 = vunpack.c.l.b16 %v87
  %v484 = vunpack.c.l.b16 %v88
  %v485 = vunpack.c.l.b16 %v89
  %v486 = vunpack.c.l.b16 %v90
  %v487 = vunpack.c.l.b16 %v91
  %v488 = vunpack.c.l.b16 %v92
  %v489 = vunpack.c.l.b16 %v93
  %v490 = vunpack.c.l.b16 %v94
  %v491 = vunpack.c.l.b16 %v95
  %v492 = vunpack.c.l.b16 %v96
  %v493 = vunpack.c.l.b16 %v97
  %v494 = vunpack.c.l.b16 %v98
  %v495 = vunpack.c.l.b16 %v99
  %v496 = vunpack.c.l.b16 %v100
  %v497 = vunpack.c.l.b16 %v101
  %v498 = vunpack.c.l.b16 %v102
  %v499 = vunpack.c.l.b16 %v103
  %v500 = vunpack.c.l.b16 %v104
  %v501 = vunpack.c.l.b16 %v105
  %v502 = vunpack.c.l.b16 %v106
  %v503 = vunpack.c.l.b16 %v107
  %v504 = vunpack.c.l.b16 %v108
  %v505 = vunpack.c.l.b16 %v109
  %v506 = vunpack.c.l.b16 %v110
  %v507 = vunpack.c.l.b16 %v111
  %v508 = vunpack.c.l.b16 %v112
  %v509 = vunpack.c.l.b16 %v113
  %v510 = vunpack.c.l.b16 %v114
  %v511 = vunpack.c.l.b16 %v115
  %v512 = vunpack.c.l.b16 %v116
  %v513 = vunpack.c.l.b16 %v117
  %v514 = vunpack.c.l.b16 %v118
  %v515 = vunpack.c.l.b16 %v119
  %v516 = vunpack.c.l.b16 %v120
  %v517 = vunpack.c.l.b16 %v121
  %v518 = vunpack.c.l.b16 %v122
  %v519 = vunpack.c.l.b16 %v123
  %v520 = vunpack.c.l.b16 %v124
  %v521 = vunpack.c.l.b16 %v125
  %v522 = vunpack.c.l.b16 %v126
  %v523 = vunpack.c.l.b16 %v127
  %v524 = vunpack.c.l.b16 %v128
  %v525 = vunpack.c.l.b16 %v129
  %v526 = vunpack.c.l.b16 %v130
  %v527 = vunpack.c.l.b16 %v131
  %v528 = vunpack.c.l.b16 %v132
  %v529 = vunpack.c.l.b16 %v133
  %v530 = vunpack.c.l.b16 %v134
  %v531 = vunpack.c.l.b16 %v135
  %v532 = vunpack.c.l.b16 %v136
  %v533 = vunpack.c.l.b16 %v137
  %v534 = vunpack.c.l.b16 %v138
  %v535 = vunpack.c.l.b16 %v139
  %v536 = vunpack.c.l.b16 %v140
  %v537 = vunpack.c.l.b16 %v141
  %v538 = vunpack.c.l.b16 %v142
  %v539 = vunpack.c.l.b16 %v143
  %v540 = vunpack.c.l.b16 %v144
  %v541 = vunpack.c.l.b16 %v145
  %v542 = vunpack.c.l.b16 %v146
  %v543 = vunpack.c.l.b16 %v147
  %v544 = vunpack.c.l.b16 %v148
  %v545 = vunpack.c.l.b16 %v149
  %v546 = vunpack.c.l.b16 %v150
  %v547 = vunpack.c.l.b16 %v151
  %v548 = vunpack.c.l.b16 %v152
  %v549 = vunpack.c.l.b16 %v153
  %v550 = vunpack.c.l.b16 %v154
  %v551 = vunpack.c.l.b16 %v155
  %v552 = vunpack.c.l.b16 %v156
  %v553 = vunpack.c.l.b16 %v157
  %v554 = vunpack.c.l.b16 %v158
  %v555 = vunpack.c.l.b16 %v159
  %v556 = vunpack.c.l.b16 %v160
  %v557 = vunpack.c.l.b16 %v161
  %v558 = vunpack.c.l.b16 %v162
  %v559 = vunpack.c.l.b16 %v163
  %v560 = vunpack.c.l.b16 %v164
  %v561 = vunpack.c.l.b16 %v165
  %v562 = vunpack.c.l.b16 %v166
  %v563 = vunpack.c.l.b16 %v167
  %v564 = vunpack.c.l.b16 %v168
  %v565 = vunpack.c.l.b16 %v169
  %v566 = vunpack.c.l.b16 %v170
  %v567 = vunpack.c.l.b16 %v171
  %v568 = vunpack.c.l.b16 %v172
  %v569 = vunpack.c.l.b16 %v173
  %v570 = vunpack.c.l.b16 %v174
  %v571 = vunpack.c.l.b16 %v175
  %v572 = vunpack.c.l.b16 %v176
  %v573 = vunpack.c.l.b16 %v177
  %v574 = vunpack.c.l.b16 %v178
  %v575 = vunpack.c.l.b16 %v179
  %v576 = vunpack.c.l.b16 %v180
  %v577 = vunpack.c.l.b16 %v181
  %v578 = vunpack.c.l.b16 %v182
  %v579 = vunpack.c.l.b16 %v183
  %v580 = vunpack.c.l.b16 %v184
  %v581 = vunpack.c.l.b16 %v185
  %v582 = vunpack.c.l.b16 %v186
  %v583 = vunpack.c.l.b16 %v187
  %v584 = vunpack.c.l.b16 %v188
  %v585 = vunpack.c.l.b16 %v189
  %v586 = vunpack.c.l.b16 %v190
  %v587 = vunpack.c.l.b16 %v191
  %v588 = vunpack.c.l.b16 %v192
  %v589 = vunpack.c.l.b16 %v193
  %v590 = vunpack.c.l.b16 %v194
  %v591 = vunpack.c.l.b16 %v195
  %v592 = vunpack.c.l.b16 %v196
  %v593 = vunpack.c.l.b16 %v197
  %v594 = vunpack.c.l.b16 %v198
  %v595 = vunpack.c.l.b16 %v199
  %v596 = vunpack.c.l.b16 %v200
  %v597 = vunpack.c.l.b16 %v201
  %v598 = vunpack.c.l.b16 %v202
  %v599 = vunpack.c.l.b16 %v203
  %v600 = vunpack.c.l.b16 %v204
  %v601 = vunpack.c.l.b16 %v205
  %v602 = vunpack.c.l.b16 %v206
  %v603 = vunpack.c.l.b16 %v207
  %v604 = vunpack.c.l.b16 %v208
  %v605 = vunpack.c.l.b16 %v209
  %v606 = vunpack.c.l.b16 %v210
  %v607 = vunpack.c.l.b16 %v211
  %v608 = vunpack.c.l.b16 %v212
  %v609 = vunpack.c.l.b16 %v213
  %v610 = vpack.c.b16 %v415, %v414
  %v611 = vpack.c.b16 %v417, %v416
  %v612 = vpack.c.b16 %v419, %v418
  %v613 = vpack.c.b16 %v421, %v420
  %v614 = vpack.c.b16 %v423, %v422
  %v615 = vpack.c.b16 %v425, %v424
  %v616 = vpack.c.b16 %v427, %v426
  %v617 = vpack.c.b16 %v429, %v428
  %v618 = vpack.c.b16 %v431, %v430
  %v619 = vpack.c.b16 %v433, %v432
  %v620 = vpack.c.b16 %v435, %v434
  %v621 = vpack.c.b16 %v437, %v436
  %v622 = vpack.c.b16 %v439, %v438
  %v623 = vpack.c.b16 %v441, %v440
  %v624 = vpack.c.b16 %v443, %v442
  %v625 = vpack.c.b16 %v445, %v444
  %v626 = vpack.c.b16 %v447, %v446
  %v627 = vpack.c.b16 %v449, %v448
  %v628 = vpack.c.b16 %v451, %v450
  %v629 = vpack.c.b16 %v453, %v452
  %v630 = vpack.c.b16 %v455, %v454
  %v631 = vpack.c.b16 %v457, %v456
  %v632 = vpack.c.b16 %v459, %v458
  %v633 = vpack.c.b16 %v461, %v460
  %v634 = vpack.c.b16 %v463, %v462
  %v635 = vpack.c.b16 %v465, %v464
  %v636 = vpack.c.b16 %v467, %v466
  %v637 = vpack.c.b16 %v469, %v468
  %v638 = vpack.c.b16 %v471, %v470
  %v639 = vpack.c.b16 %v473, %v472
  %v640 = vpack.c.b16 %v475, %v474
  %v641 = vpack.c.b16 %v477, %v476
  %v642 = vpack.c.b16 %v479, %v478
  %v643 = vpack.c.b16 %v481, %v480
  %v644 = vpack.c.b16 %v483, %v482
  %v645 = vpack.c.b16 %v485, %v484
  %v646 = vpack.c.b16 %v487, %v486
  %v647 = vpack.c.b16 %v489, %v488
  %v648 = vpack.c.b16 %v491, %v490
  %v649 = vpack.c.b16 %v493, %v492
  %v650 = vpack.c.b16 %v495, %v494
  %v651 = vpack.c.b16 %v497, %v496
  %v652 = vpack.c.b16 %v499, %v498
  %v653 = vpack.c.b16 %v501, %v500
  %v654 = vpack.c.b16 %v503, %v502
  %v655 = vpack.c.b16 %v505, %v504
  %v656 = vpack.c.b16 %v507, %v506
  %v657 = vpack.c.b16 %v509, %v508
  %v658 = vpack.c.b16 %v511, %v510
  %v659 = vpack.c.b16 %v513, %v512
  %v660 = vpack.c.b16 %v515, %v514
  %v661 = vpack.c.b16 %v517, %v516
  %v662 = vpack.c.b16 %v519, %v518
  %v663 = vpack.c.b16 %v521, %v520
  %v664 = vpack.c.b16 %v523, %v522
  %v665 = vpack.c.b16 %v525, %v524
  %v666 = vpack.c.b16 %v527, %v526
  %v667 = vpack.c.b16 %v529, %v528
  %v668 = vpack.c.b16 %v531, %v530
  %v669 = vpack.c.b16 %v533, %v532
  %v670 = vpack.c.b16 %v535, %v534
  %v671 = vpack.c.b16 %v537, %v536
  %v672 = vpack.c.b16 %v539, %v538
  %v673 = vpack.c.b16 %v541, %v540
  %v674 = vpack.c.b16 %v543, %v542
  %v675 = vpack.c.b16 %v545, %v544
  %v676 = vpack.c.b16 %v547, %v546
  %v677 = vpack.c.b16 %v549, %v548
  %v678 = vpack.c.b16 %v551, %v550
  %v679 = vpack.c.b16 %v553, %v552
  %v680 = vpack.c.b16 %v555, %v554
  %v681 = vpack.c.b16 %v557, %v556
  %v682 = vpack.c.b16 %v559, %v558
  %v683 = vpack.c.b16 %v561, %v560
  %v684 = vpack.c.b16 %v563, %v562
  %v685 = vpack.c.b16 %v565, %v564
  %v686 = vpack.c.b16 %v567, %v566
  %v687 = vpack.c.b16 %v569, %v568
  %v688 = vpack.c.b16 %v571, %v570
  %v689 = vpack.c.b16 %v573, %v572
  %v690 = vpack.c.b16 %v575, %v574
  %v691 = vpack.c.b16 %v577, %v576
  %v692 = vpack.c.b16 %v579, %v578
  %v693 = vpack.c.b16 %v581, %v580
  %v694 = vpack.c.b16 %v583, %v582
  %v695 = vpack.c.b16 %v585, %v584
  %v696 = vpack.c.b16 %v587, %v586
  %v697 = vpack.c.b16 %v589, %v588
  %v698 = vpack.c.b16 %v591, %v590
  %v699 = vpack.c.b16 %v593, %v592
  %v700 = vpack.c.b16 %v595, %v594
  %v701 = vpack.c.b16 %v597, %v596
  %v702 = vpack.c.b16 %v599, %v598
  %v703 = vpack.c.b16 %v601, %v600
  %v704 = vpack.c.b16 %v603, %v602
  %v705 = vpack.c.b16 %v605, %v604
  %v706 = vpack.c.b16 %v607, %v606
  %v707 = vpack.c.b16 %v609, %v608
  %v712 = vunpack.c.l.b16 %v214
  %v713 = vunpack.c.l.b16 %v215
  %v714 = vunpack.c.l.b16 %v216
  %v715 = vunpack.c.l.b16 %v217
  %v716 = vpack.c.b16 %v713, %v712
  %v717 = vpack.c.b16 %v715, %v714
  %vm719 = vcmask 203776
  %v721 = vsel %vm719, %v610, 0
  %v724 = vsel %vm719, %v611, 0
  %v727 = vsel %vm719, %v612, 0
  %v730 = vsel %vm719, %v613, 0
  %v733 = vsel %vm719, %v614, 0
  %v736 = vsel %vm719, %v615, 0
  %v739 = vsel %vm719, %v616, 0
  %v742 = vsel %vm719, %v617, 0
  %v745 = vsel %vm719, %v618, 0
  %v748 = vsel %vm719, %v619, 0
  %v751 = vsel %vm719, %v620, 0
  %v754 = vsel %vm719, %v621, 0
  %v757 = vsel %vm719, %v622, 0
  %v760 = vsel %vm719, %v623, 0
  %v763 = vsel %vm719, %v624, 0
  %v766 = vsel %vm719, %v625, 0
  %v769 = vsel %vm719, %v626, 0
  %v772 = vsel %vm719, %v627, 0
  %v775 = vsel %vm719, %v628, 0
  %v778 = vsel %vm719, %v629, 0
  %v781 = vsel %vm719, %v630, 0
  %v784 = vsel %vm719, %v631, 0
  %v787 = vsel %vm719, %v632, 0
  %v790 = vsel %vm719, %v633, 0
  %v793 = vsel %vm719, %v634, 0
  %v796 = vsel %vm719, %v635, 0
  %v799 = vsel %vm719, %v636, 0
  %v802 = vsel %vm719, %v637, 0
  %v805 = vsel %vm719, %v638, 0
  %v808 = vsel %vm719, %v639, 0
  %v811 = vsel %vm719, %v640, 0
  %v814 = vsel %vm719, %v641, 0
  %v817 = vsel %vm719, %v642, 0
  %v820 = vsel %vm719, %v643, 0
  %v823 = vsel %vm719, %v644, 0
  %v826 = vsel %vm719, %v645, 0
  %v829 = vsel %vm719, %v646, 0
  %v832 = vsel %vm719, %v647, 0
  %v835 = vsel %vm719, %v648, 0
  %v838 = vsel %vm719, %v649, 0
  %v841 = vsel %vm719, %v650, 0
  %v844 = vsel %vm719, %v651, 0
  %v847 = vsel %vm719, %v652, 0
  %v850 = vsel %vm719, %v653, 0
  %v853 = vsel %vm719, %v654, 0
  %v856 = vsel %vm719, %v655, 0
  %v859 = vsel %vm719, %v656, 0
  %v862 = vsel %vm719, %v657, 0
  %v865 = vsel %vm719, %v658, 0
  %v868 = vsel %vm719, %v659, 0
  %v871 = vsel %vm719, %v660, 0
  %v874 = vsel %vm719, %v661, 0
  %v877 = vsel %vm719, %v662, 0
  %v880 = vsel %vm719, %v663, 0
  %v883 = vsel %vm719, %v664, 0
  %v886 = vsel %vm719, %v665, 0
  %v889 = vsel %vm719, %v666, 0
  %v892 = vsel %vm719, %v667, 0
  %v895 = vsel %vm719, %v668, 0
  %v898 = vsel %vm719, %v669, 0
  %v901 = vsel %vm719, %v670, 0
  %v904 = vsel %vm719, %v671, 0
  %v907 = vsel %vm719, %v672, 0
  %v910 = vsel %vm719, %v673, 0
  %v913 = vsel %vm719, %v674, 0
  %v916 = vsel %vm719, %v675, 0
  %v919 = vsel %vm719, %v676, 0
  %v922 = vsel %vm719, %v677, 0
  %v925 = vsel %vm719, %v678, 0
  %v928 = vsel %vm719, %v679, 0
  %v931 = vsel %vm719, %v680, 0
  %v934 = vsel %vm719, %v681, 0
  %v937 = vsel %vm719, %v682, 0
  %v940 = vsel %vm719, %v683, 0
  %v943 = vsel %vm719, %v684, 0
  %v946 = vsel %vm719, %v685, 0
  %v949 = vsel %vm719, %v686, 0
  %v952 = vsel %vm719, %v687, 0
  %v955 = vsel %vm719, %v688, 0
  %v958 = vsel %vm719, %v689, 0
  %v961 = vsel %vm719, %v690, 0
  %v964 = vsel %vm719, %v691, 0
  %v967 = vsel %vm719, %v692, 0
  %v970 = vsel %vm719, %v693, 0
  %v973 = vsel %vm719, %v694, 0
  %v976 = vsel %vm719, %v695, 0
  %v979 = vsel %vm719, %v696, 0
  %v982 = vsel %vm719, %v697, 0
  %v985 = vsel %vm719, %v698, 0
  %v988 = vsel %vm719, %v699, 0
  %v991 = vsel %vm719, %v700, 0
  %v994 = vsel %vm719, %v701, 0
  %v997 = vsel %vm719, %v702, 0
  %v1000 = vsel %vm719, %v703, 0
  %v1003 = vsel %vm719, %v704, 0
  %v1006 = vsel %vm719, %v705, 0
  %v1009 = vsel %vm719, %v706, 0
  %v1012 = vsel %vm719, %v707, 0
  %vm1014 = vcmask 1043456
  %vm1015 = vcmask 1044480
  %v1016 = vsel %vm1014, 4294967295, 65535
  %v1017 = vsel %vm1015, %v1016, 0
  %v1019 = vand.u32 %v717, %v1017
  %1021 = vmatprep.subr.bf16.mxu0 0
  %1022 = vmatpush1.bf16.msra.mxu0 0
  %1023 = vmatprep.subr.bf16.mxu0 0
  %1024 = vmatpush1.bf16.msra.mxu0 0
  %1025 = vmatprep.subr.bf16.mxu0 0
  %1026 = vmatpush1.bf16.msra.mxu0 0
  %1027 = vmatprep.subr.bf16.mxu0 0
  %1028 = vmatpush1.bf16.msra.mxu0 0
  %1029 = vmatprep.subr.bf16.mxu0 0
  %1030 = vmatpush1.bf16.msra.mxu0 0
  %1031 = vmatprep.subr.bf16.mxu0 0
  %1032 = vmatpush1.bf16.msra.mxu0 0
  %1033 = vmatprep.subr.bf16.mxu0 0
  %1034 = vmatpush1.bf16.msra.mxu0 %v1019
  %1035 = vmatprep.subr.bf16.mxu0 0
  %1036 = vmatpush1.bf16.msra.mxu0 %v716
  %1037 = vmatprep.subr.bf16.mxu0 0
  %1038 = vmatpush2.bf16.msra.mxu0 0
  %1039 = vmatprep.subr.bf16.mxu0 0
  %1040 = vmatpush2.bf16.msra.mxu0 0
  %1041 = vmatprep.subr.bf16.mxu0 0
  %1042 = vmatpush2.bf16.msra.mxu0 0
  %1043 = vmatprep.subr.bf16.mxu0 0
  %1044 = vmatpush2.bf16.msra.mxu0 0
  %1045 = vmatprep.subr.bf16.mxu0 0
  %1046 = vmatpush2.bf16.msra.mxu0 0
  %1047 = vmatprep.subr.bf16.mxu0 0
  %1048 = vmatpush2.bf16.msra.mxu0 0
  %1049 = vmatprep.subr.bf16.mxu0 0
  %1050 = vmatpush2.bf16.msra.mxu0 0
  %1051 = vmatprep.subr.bf16.mxu0 0
  %1052 = vmatpush2.bf16.msra.mxu0 0
  %1053 = vmatprep.mubr.bf16.mxu0 0
  %1054 = vmatmul.mubr.bf16.gmra.mxu0 %v721
  %v1055 = vpop.f32.mrf.mxu0
  %v1056 = vadd.f32 0.0, %v1055
  %v1057 = vpop.f32.mrf.mxu0
  %v1058 = vpop.f32.mrf.mxu0
  %v1059 = vadd.f32 0.0, %v1058
  %v1060 = vpop.f32.mrf.mxu0
  %1061 = vmatprep.mubr.bf16.mxu0 0
  %1062 = vmatmul.mubr.bf16.gmra.mxu0 %v724
  %v1063 = vpop.f32.mrf.mxu0
  %v1064 = vadd.f32 0.0, %v1063
  %v1065 = vpop.f32.mrf.mxu0
  %v1066 = vpop.f32.mrf.mxu0
  %v1067 = vadd.f32 0.0, %v1066
  %v1068 = vpop.f32.mrf.mxu0
  %1069 = vmatprep.mubr.bf16.mxu0 0
  %1070 = vmatmul.mubr.bf16.gmra.mxu0 %v727
  %v1071 = vpop.f32.mrf.mxu0
  %v1072 = vadd.f32 0.0, %v1071
  %v1073 = vpop.f32.mrf.mxu0
  %v1074 = vpop.f32.mrf.mxu0
  %v1075 = vadd.f32 0.0, %v1074
  %v1076 = vpop.f32.mrf.mxu0
  %1077 = vmatprep.mubr.bf16.mxu0 0
  %1078 = vmatmul.mubr.bf16.gmra.mxu0 %v730
  %v1079 = vpop.f32.mrf.mxu0
  %v1080 = vadd.f32 0.0, %v1079
  %v1081 = vpop.f32.mrf.mxu0
  %v1082 = vpop.f32.mrf.mxu0
  %v1083 = vadd.f32 0.0, %v1082
  %v1084 = vpop.f32.mrf.mxu0
  %1085 = vmatprep.mubr.bf16.mxu0 0
  %1086 = vmatmul.mubr.bf16.gmra.mxu0 %v733
  %v1087 = vpop.f32.mrf.mxu0
  %v1088 = vadd.f32 0.0, %v1087
  %v1089 = vpop.f32.mrf.mxu0
  %v1090 = vpop.f32.mrf.mxu0
  %v1091 = vadd.f32 0.0, %v1090
  %v1092 = vpop.f32.mrf.mxu0
  %1093 = vmatprep.mubr.bf16.mxu0 0
  %1094 = vmatmul.mubr.bf16.gmra.mxu0 %v736
  %v1095 = vpop.f32.mrf.mxu0
  %v1096 = vadd.f32 0.0, %v1095
  %v1097 = vpop.f32.mrf.mxu0
  %v1098 = vpop.f32.mrf.mxu0
  %v1099 = vadd.f32 0.0, %v1098
  %v1100 = vpop.f32.mrf.mxu0
  %1101 = vmatprep.mubr.bf16.mxu0 0
  %1102 = vmatmul.mubr.bf16.gmra.mxu0 %v739
  %v1103 = vpop.f32.mrf.mxu0
  %v1104 = vadd.f32 0.0, %v1103
  %v1105 = vpop.f32.mrf.mxu0
  %v1106 = vpop.f32.mrf.mxu0
  %v1107 = vadd.f32 0.0, %v1106
  %v1108 = vpop.f32.mrf.mxu0
  %1109 = vmatprep.mubr.bf16.mxu0 0
  %1110 = vmatmul.mubr.bf16.gmra.mxu0 %v742
  %v1111 = vpop.f32.mrf.mxu0
  %v1112 = vadd.f32 0.0, %v1111
  %v1113 = vpop.f32.mrf.mxu0
  %v1114 = vpop.f32.mrf.mxu0
  %v1115 = vadd.f32 0.0, %v1114
  %v1116 = vpop.f32.mrf.mxu0
  %1117 = vmatprep.mubr.bf16.mxu0 0
  %1118 = vmatmul.mubr.bf16.gmra.mxu0 %v745
  %v1119 = vpop.f32.mrf.mxu0
  %v1120 = vadd.f32 0.0, %v1119
  %v1121 = vpop.f32.mrf.mxu0
  %v1122 = vpop.f32.mrf.mxu0
  %v1123 = vadd.f32 0.0, %v1122
  %v1124 = vpop.f32.mrf.mxu0
  %1125 = vmatprep.mubr.bf16.mxu0 0
  %1126 = vmatmul.mubr.bf16.gmra.mxu0 %v748
  %v1127 = vpop.f32.mrf.mxu0
  %v1128 = vadd.f32 0.0, %v1127
  %v1129 = vpop.f32.mrf.mxu0
  %v1130 = vpop.f32.mrf.mxu0
  %v1131 = vadd.f32 0.0, %v1130
  %v1132 = vpop.f32.mrf.mxu0
  %1133 = vmatprep.mubr.bf16.mxu0 0
  %1134 = vmatmul.mubr.bf16.gmra.mxu0 %v751
  %v1135 = vpop.f32.mrf.mxu0
  %v1136 = vadd.f32 0.0, %v1135
  %v1137 = vpop.f32.mrf.mxu0
  %v1138 = vpop.f32.mrf.mxu0
  %v1139 = vadd.f32 0.0, %v1138
  %v1140 = vpop.f32.mrf.mxu0
  %1141 = vmatprep.mubr.bf16.mxu0 0
  %1142 = vmatmul.mubr.bf16.gmra.mxu0 %v754
  %v1143 = vpop.f32.mrf.mxu0
  %v1144 = vadd.f32 0.0, %v1143
  %v1145 = vpop.f32.mrf.mxu0
  %v1146 = vpop.f32.mrf.mxu0
  %v1147 = vadd.f32 0.0, %v1146
  %v1148 = vpop.f32.mrf.mxu0
  %1149 = vmatprep.mubr.bf16.mxu0 0
  %1150 = vmatmul.mubr.bf16.gmra.mxu0 %v757
  %v1151 = vpop.f32.mrf.mxu0
  %v1152 = vadd.f32 0.0, %v1151
  %v1153 = vpop.f32.mrf.mxu0
  %v1154 = vpop.f32.mrf.mxu0
  %v1155 = vadd.f32 0.0, %v1154
  %v1156 = vpop.f32.mrf.mxu0
  %1157 = vmatprep.mubr.bf16.mxu0 0
  %1158 = vmatmul.mubr.bf16.gmra.mxu0 %v760
  %v1159 = vpop.f32.mrf.mxu0
  %v1160 = vadd.f32 0.0, %v1159
  %v1161 = vpop.f32.mrf.mxu0
  %v1162 = vpop.f32.mrf.mxu0
  %v1163 = vadd.f32 0.0, %v1162
  %v1164 = vpop.f32.mrf.mxu0
  %1165 = vmatprep.mubr.bf16.mxu0 0
  %1166 = vmatmul.mubr.bf16.gmra.mxu0 %v763
  %v1167 = vpop.f32.mrf.mxu0
  %v1168 = vadd.f32 0.0, %v1167
  %v1169 = vpop.f32.mrf.mxu0
  %v1170 = vpop.f32.mrf.mxu0
  %v1171 = vadd.f32 0.0, %v1170
  %v1172 = vpop.f32.mrf.mxu0
  %1173 = vmatprep.mubr.bf16.mxu0 0
  %1174 = vmatmul.mubr.bf16.gmra.mxu0 %v766
  %v1175 = vpop.f32.mrf.mxu0
  %v1176 = vadd.f32 0.0, %v1175
  %v1177 = vpop.f32.mrf.mxu0
  %v1178 = vpop.f32.mrf.mxu0
  %v1179 = vadd.f32 0.0, %v1178
  %v1180 = vpop.f32.mrf.mxu0
  %1181 = vmatprep.mubr.bf16.mxu0 0
  %1182 = vmatmul.mubr.bf16.gmra.mxu0 %v769
  %v1183 = vpop.f32.mrf.mxu0
  %v1184 = vadd.f32 0.0, %v1183
  %v1185 = vpop.f32.mrf.mxu0
  %v1186 = vpop.f32.mrf.mxu0
  %v1187 = vadd.f32 0.0, %v1186
  %v1188 = vpop.f32.mrf.mxu0
  %1189 = vmatprep.mubr.bf16.mxu0 0
  %1190 = vmatmul.mubr.bf16.gmra.mxu0 %v772
  %v1191 = vpop.f32.mrf.mxu0
  %v1192 = vadd.f32 0.0, %v1191
  %v1193 = vpop.f32.mrf.mxu0
  %v1194 = vpop.f32.mrf.mxu0
  %v1195 = vadd.f32 0.0, %v1194
  %v1196 = vpop.f32.mrf.mxu0
  %1197 = vmatprep.mubr.bf16.mxu0 0
  %1198 = vmatmul.mubr.bf16.gmra.mxu0 %v775
  %v1199 = vpop.f32.mrf.mxu0
  %v1200 = vadd.f32 0.0, %v1199
  %v1201 = vpop.f32.mrf.mxu0
  %v1202 = vpop.f32.mrf.mxu0
  %v1203 = vadd.f32 0.0, %v1202
  %v1204 = vpop.f32.mrf.mxu0
  %1205 = vmatprep.mubr.bf16.mxu0 0
  %1206 = vmatmul.mubr.bf16.gmra.mxu0 %v778
  %v1207 = vpop.f32.mrf.mxu0
  %v1208 = vadd.f32 0.0, %v1207
  %v1209 = vpop.f32.mrf.mxu0
  %v1210 = vpop.f32.mrf.mxu0
  %v1211 = vadd.f32 0.0, %v1210
  %v1212 = vpop.f32.mrf.mxu0
  %1213 = vmatprep.mubr.bf16.mxu0 0
  %1214 = vmatmul.mubr.bf16.gmra.mxu0 %v781
  %v1215 = vpop.f32.mrf.mxu0
  %v1216 = vadd.f32 0.0, %v1215
  %v1217 = vpop.f32.mrf.mxu0
  %v1218 = vpop.f32.mrf.mxu0
  %v1219 = vadd.f32 0.0, %v1218
  %v1220 = vpop.f32.mrf.mxu0
  %1221 = vmatprep.mubr.bf16.mxu0 0
  %1222 = vmatmul.mubr.bf16.gmra.mxu0 %v784
  %v1223 = vpop.f32.mrf.mxu0
  %v1224 = vadd.f32 0.0, %v1223
  %v1225 = vpop.f32.mrf.mxu0
  %v1226 = vpop.f32.mrf.mxu0
  %v1227 = vadd.f32 0.0, %v1226
  %v1228 = vpop.f32.mrf.mxu0
  %1229 = vmatprep.mubr.bf16.mxu0 0
  %1230 = vmatmul.mubr.bf16.gmra.mxu0 %v787
  %v1231 = vpop.f32.mrf.mxu0
  %v1232 = vadd.f32 0.0, %v1231
  %v1233 = vpop.f32.mrf.mxu0
  %v1234 = vpop.f32.mrf.mxu0
  %v1235 = vadd.f32 0.0, %v1234
  %v1236 = vpop.f32.mrf.mxu0
  %1237 = vmatprep.mubr.bf16.mxu0 0
  %1238 = vmatmul.mubr.bf16.gmra.mxu0 %v790
  %v1239 = vpop.f32.mrf.mxu0
  %v1240 = vadd.f32 0.0, %v1239
  %v1241 = vpop.f32.mrf.mxu0
  %v1242 = vpop.f32.mrf.mxu0
  %v1243 = vadd.f32 0.0, %v1242
  %v1244 = vpop.f32.mrf.mxu0
  %1245 = vmatprep.mubr.bf16.mxu0 0
  %1246 = vmatmul.mubr.bf16.gmra.mxu0 %v793
  %v1247 = vpop.f32.mrf.mxu0
  %v1248 = vadd.f32 0.0, %v1247
  %v1249 = vpop.f32.mrf.mxu0
  %v1250 = vpop.f32.mrf.mxu0
  %v1251 = vadd.f32 0.0, %v1250
  %v1252 = vpop.f32.mrf.mxu0
  %1253 = vmatprep.mubr.bf16.mxu0 0
  %1254 = vmatmul.mubr.bf16.gmra.mxu0 %v796
  %v1255 = vpop.f32.mrf.mxu0
  %v1256 = vadd.f32 0.0, %v1255
  %v1257 = vpop.f32.mrf.mxu0
  %v1258 = vpop.f32.mrf.mxu0
  %v1259 = vadd.f32 0.0, %v1258
  %v1260 = vpop.f32.mrf.mxu0
  %1261 = vmatprep.mubr.bf16.mxu0 0
  %1262 = vmatmul.mubr.bf16.gmra.mxu0 %v799
  %v1263 = vpop.f32.mrf.mxu0
  %v1264 = vadd.f32 0.0, %v1263
  %v1265 = vpop.f32.mrf.mxu0
  %v1266 = vpop.f32.mrf.mxu0
  %v1267 = vadd.f32 0.0, %v1266
  %v1268 = vpop.f32.mrf.mxu0
  %1269 = vmatprep.mubr.bf16.mxu0 0
  %1270 = vmatmul.mubr.bf16.gmra.mxu0 %v802
  %v1271 = vpop.f32.mrf.mxu0
  %v1272 = vadd.f32 0.0, %v1271
  %v1273 = vpop.f32.mrf.mxu0
  %v1274 = vpop.f32.mrf.mxu0
  %v1275 = vadd.f32 0.0, %v1274
  %v1276 = vpop.f32.mrf.mxu0
  %1277 = vmatprep.mubr.bf16.mxu0 0
  %1278 = vmatmul.mubr.bf16.gmra.mxu0 %v805
  %v1279 = vpop.f32.mrf.mxu0
  %v1280 = vadd.f32 0.0, %v1279
  %v1281 = vpop.f32.mrf.mxu0
  %v1282 = vpop.f32.mrf.mxu0
  %v1283 = vadd.f32 0.0, %v1282
  %v1284 = vpop.f32.mrf.mxu0
  %1285 = vmatprep.mubr.bf16.mxu0 0
  %1286 = vmatmul.mubr.bf16.gmra.mxu0 %v808
  %v1287 = vpop.f32.mrf.mxu0
  %v1288 = vadd.f32 0.0, %v1287
  %v1289 = vpop.f32.mrf.mxu0
  %v1290 = vpop.f32.mrf.mxu0
  %v1291 = vadd.f32 0.0, %v1290
  %v1292 = vpop.f32.mrf.mxu0
  %1293 = vmatprep.mubr.bf16.mxu0 0
  %1294 = vmatmul.mubr.bf16.gmra.mxu0 %v811
  %v1295 = vpop.f32.mrf.mxu0
  %v1296 = vadd.f32 0.0, %v1295
  %v1297 = vpop.f32.mrf.mxu0
  %v1298 = vpop.f32.mrf.mxu0
  %v1299 = vadd.f32 0.0, %v1298
  %v1300 = vpop.f32.mrf.mxu0
  %1301 = vmatprep.mubr.bf16.mxu0 0
  %1302 = vmatmul.mubr.bf16.gmra.mxu0 %v814
  %v1303 = vpop.f32.mrf.mxu0
  %v1304 = vadd.f32 0.0, %v1303
  %v1305 = vpop.f32.mrf.mxu0
  %v1306 = vpop.f32.mrf.mxu0
  %v1307 = vadd.f32 0.0, %v1306
  %v1308 = vpop.f32.mrf.mxu0
  %1309 = vmatprep.mubr.bf16.mxu0 0
  %1310 = vmatmul.mubr.bf16.gmra.mxu0 %v817
  %v1311 = vpop.f32.mrf.mxu0
  %v1312 = vadd.f32 0.0, %v1311
  %v1313 = vpop.f32.mrf.mxu0
  %v1314 = vpop.f32.mrf.mxu0
  %v1315 = vadd.f32 0.0, %v1314
  %v1316 = vpop.f32.mrf.mxu0
  %1317 = vmatprep.mubr.bf16.mxu0 0
  %1318 = vmatmul.mubr.bf16.gmra.mxu0 %v820
  %v1319 = vpop.f32.mrf.mxu0
  %v1320 = vadd.f32 0.0, %v1319
  %v1321 = vpop.f32.mrf.mxu0
  %v1322 = vpop.f32.mrf.mxu0
  %v1323 = vadd.f32 0.0, %v1322
  %v1324 = vpop.f32.mrf.mxu0
  %1325 = vmatprep.mubr.bf16.mxu0 0
  %1326 = vmatmul.mubr.bf16.gmra.mxu0 %v823
  %v1327 = vpop.f32.mrf.mxu0
  %v1328 = vadd.f32 0.0, %v1327
  %v1329 = vpop.f32.mrf.mxu0
  %v1330 = vpop.f32.mrf.mxu0
  %v1331 = vadd.f32 0.0, %v1330
  %v1332 = vpop.f32.mrf.mxu0
  %1333 = vmatprep.mubr.bf16.mxu0 0
  %1334 = vmatmul.mubr.bf16.gmra.mxu0 %v826
  %v1335 = vpop.f32.mrf.mxu0
  %v1336 = vadd.f32 0.0, %v1335
  %v1337 = vpop.f32.mrf.mxu0
  %v1338 = vpop.f32.mrf.mxu0
  %v1339 = vadd.f32 0.0, %v1338
  %v1340 = vpop.f32.mrf.mxu0
  %1341 = vmatprep.mubr.bf16.mxu0 0
  %1342 = vmatmul.mubr.bf16.gmra.mxu0 %v829
  %v1343 = vpop.f32.mrf.mxu0
  %v1344 = vadd.f32 0.0, %v1343
  %v1345 = vpop.f32.mrf.mxu0
  %v1346 = vpop.f32.mrf.mxu0
  %v1347 = vadd.f32 0.0, %v1346
  %v1348 = vpop.f32.mrf.mxu0
  %1349 = vmatprep.mubr.bf16.mxu0 0
  %1350 = vmatmul.mubr.bf16.gmra.mxu0 %v832
  %v1351 = vpop.f32.mrf.mxu0
  %v1352 = vadd.f32 0.0, %v1351
  %v1353 = vpop.f32.mrf.mxu0
  %v1354 = vpop.f32.mrf.mxu0
  %v1355 = vadd.f32 0.0, %v1354
  %v1356 = vpop.f32.mrf.mxu0
  %1357 = vmatprep.mubr.bf16.mxu0 0
  %1358 = vmatmul.mubr.bf16.gmra.mxu0 %v835
  %v1359 = vpop.f32.mrf.mxu0
  %v1360 = vadd.f32 0.0, %v1359
  %v1361 = vpop.f32.mrf.mxu0
  %v1362 = vpop.f32.mrf.mxu0
  %v1363 = vadd.f32 0.0, %v1362
  %v1364 = vpop.f32.mrf.mxu0
  %1365 = vmatprep.mubr.bf16.mxu0 0
  %1366 = vmatmul.mubr.bf16.gmra.mxu0 %v838
  %v1367 = vpop.f32.mrf.mxu0
  %v1368 = vadd.f32 0.0, %v1367
  %v1369 = vpop.f32.mrf.mxu0
  %v1370 = vpop.f32.mrf.mxu0
  %v1371 = vadd.f32 0.0, %v1370
  %v1372 = vpop.f32.mrf.mxu0
  %1373 = vmatprep.mubr.bf16.mxu0 0
  %1374 = vmatmul.mubr.bf16.gmra.mxu0 %v841
  %v1375 = vpop.f32.mrf.mxu0
  %v1376 = vadd.f32 0.0, %v1375
  %v1377 = vpop.f32.mrf.mxu0
  %v1378 = vpop.f32.mrf.mxu0
  %v1379 = vadd.f32 0.0, %v1378
  %v1380 = vpop.f32.mrf.mxu0
  %1381 = vmatprep.mubr.bf16.mxu0 0
  %1382 = vmatmul.mubr.bf16.gmra.mxu0 %v844
  %v1383 = vpop.f32.mrf.mxu0
  %v1384 = vadd.f32 0.0, %v1383
  %v1385 = vpop.f32.mrf.mxu0
  %v1386 = vpop.f32.mrf.mxu0
  %v1387 = vadd.f32 0.0, %v1386
  %v1388 = vpop.f32.mrf.mxu0
  %1389 = vmatprep.mubr.bf16.mxu0 0
  %1390 = vmatmul.mubr.bf16.gmra.mxu0 %v847
  %v1391 = vpop.f32.mrf.mxu0
  %v1392 = vadd.f32 0.0, %v1391
  %v1393 = vpop.f32.mrf.mxu0
  %v1394 = vpop.f32.mrf.mxu0
  %v1395 = vadd.f32 0.0, %v1394
  %v1396 = vpop.f32.mrf.mxu0
  %1397 = vmatprep.mubr.bf16.mxu0 0
  %1398 = vmatmul.mubr.bf16.gmra.mxu0 %v850
  %v1399 = vpop.f32.mrf.mxu0
  %v1400 = vadd.f32 0.0, %v1399
  %v1401 = vpop.f32.mrf.mxu0
  %v1402 = vpop.f32.mrf.mxu0
  %v1403 = vadd.f32 0.0, %v1402
  %v1404 = vpop.f32.mrf.mxu0
  %1405 = vmatprep.mubr.bf16.mxu0 0
  %1406 = vmatmul.mubr.bf16.gmra.mxu0 %v853
  %v1407 = vpop.f32.mrf.mxu0
  %v1408 = vadd.f32 0.0, %v1407
  %v1409 = vpop.f32.mrf.mxu0
  %v1410 = vpop.f32.mrf.mxu0
  %v1411 = vadd.f32 0.0, %v1410
  %v1412 = vpop.f32.mrf.mxu0
  %1413 = vmatprep.mubr.bf16.mxu0 0
  %1414 = vmatmul.mubr.bf16.gmra.mxu0 %v856
  %v1415 = vpop.f32.mrf.mxu0
  %v1416 = vadd.f32 0.0, %v1415
  %v1417 = vpop.f32.mrf.mxu0
  %v1418 = vpop.f32.mrf.mxu0
  %v1419 = vadd.f32 0.0, %v1418
  %v1420 = vpop.f32.mrf.mxu0
  %1421 = vmatprep.mubr.bf16.mxu0 0
  %1422 = vmatmul.mubr.bf16.gmra.mxu0 %v859
  %v1423 = vpop.f32.mrf.mxu0
  %v1424 = vadd.f32 0.0, %v1423
  %v1425 = vpop.f32.mrf.mxu0
  %v1426 = vpop.f32.mrf.mxu0
  %v1427 = vadd.f32 0.0, %v1426
  %v1428 = vpop.f32.mrf.mxu0
  %1429 = vmatprep.mubr.bf16.mxu0 0
  %1430 = vmatmul.mubr.bf16.gmra.mxu0 %v862
  %v1431 = vpop.f32.mrf.mxu0
  %v1432 = vadd.f32 0.0, %v1431
  %v1433 = vpop.f32.mrf.mxu0
  %v1434 = vpop.f32.mrf.mxu0
  %v1435 = vadd.f32 0.0, %v1434
  %v1436 = vpop.f32.mrf.mxu0
  %1437 = vmatprep.mubr.bf16.mxu0 0
  %1438 = vmatmul.mubr.bf16.gmra.mxu0 %v865
  %v1439 = vpop.f32.mrf.mxu0
  %v1440 = vadd.f32 0.0, %v1439
  %v1441 = vpop.f32.mrf.mxu0
  %v1442 = vpop.f32.mrf.mxu0
  %v1443 = vadd.f32 0.0, %v1442
  %v1444 = vpop.f32.mrf.mxu0
  %1445 = vmatprep.mubr.bf16.mxu0 0
  %1446 = vmatmul.mubr.bf16.gmra.mxu0 %v868
  %v1447 = vpop.f32.mrf.mxu0
  %v1448 = vadd.f32 0.0, %v1447
  %v1449 = vpop.f32.mrf.mxu0
  %v1450 = vpop.f32.mrf.mxu0
  %v1451 = vadd.f32 0.0, %v1450
  %v1452 = vpop.f32.mrf.mxu0
  %1453 = vmatprep.mubr.bf16.mxu0 0
  %1454 = vmatmul.mubr.bf16.gmra.mxu0 %v871
  %v1455 = vpop.f32.mrf.mxu0
  %v1456 = vadd.f32 0.0, %v1455
  %v1457 = vpop.f32.mrf.mxu0
  %v1458 = vpop.f32.mrf.mxu0
  %v1459 = vadd.f32 0.0, %v1458
  %v1460 = vpop.f32.mrf.mxu0
  %1461 = vmatprep.mubr.bf16.mxu0 0
  %1462 = vmatmul.mubr.bf16.gmra.mxu0 %v874
  %v1463 = vpop.f32.mrf.mxu0
  %v1464 = vadd.f32 0.0, %v1463
  %v1465 = vpop.f32.mrf.mxu0
  %v1466 = vpop.f32.mrf.mxu0
  %v1467 = vadd.f32 0.0, %v1466
  %v1468 = vpop.f32.mrf.mxu0
  %1469 = vmatprep.mubr.bf16.mxu0 0
  %1470 = vmatmul.mubr.bf16.gmra.mxu0 %v877
  %v1471 = vpop.f32.mrf.mxu0
  %v1472 = vadd.f32 0.0, %v1471
  %v1473 = vpop.f32.mrf.mxu0
  %v1474 = vpop.f32.mrf.mxu0
  %v1475 = vadd.f32 0.0, %v1474
  %v1476 = vpop.f32.mrf.mxu0
  %1477 = vmatprep.mubr.bf16.mxu0 0
  %1478 = vmatmul.mubr.bf16.gmra.mxu0 %v880
  %v1479 = vpop.f32.mrf.mxu0
  %v1480 = vadd.f32 0.0, %v1479
  %v1481 = vpop.f32.mrf.mxu0
  %v1482 = vpop.f32.mrf.mxu0
  %v1483 = vadd.f32 0.0, %v1482
  %v1484 = vpop.f32.mrf.mxu0
  %1485 = vmatprep.mubr.bf16.mxu0 0
  %1486 = vmatmul.mubr.bf16.gmra.mxu0 %v883
  %v1487 = vpop.f32.mrf.mxu0
  %v1488 = vadd.f32 0.0, %v1487
  %v1489 = vpop.f32.mrf.mxu0
  %v1490 = vpop.f32.mrf.mxu0
  %v1491 = vadd.f32 0.0, %v1490
  %v1492 = vpop.f32.mrf.mxu0
  %1493 = vmatprep.mubr.bf16.mxu0 0
  %1494 = vmatmul.mubr.bf16.gmra.mxu0 %v886
  %v1495 = vpop.f32.mrf.mxu0
  %v1496 = vadd.f32 0.0, %v1495
  %v1497 = vpop.f32.mrf.mxu0
  %v1498 = vpop.f32.mrf.mxu0
  %v1499 = vadd.f32 0.0, %v1498
  %v1500 = vpop.f32.mrf.mxu0
  %1501 = vmatprep.mubr.bf16.mxu0 0
  %1502 = vmatmul.mubr.bf16.gmra.mxu0 %v889
  %v1503 = vpop.f32.mrf.mxu0
  %v1504 = vadd.f32 0.0, %v1503
  %v1505 = vpop.f32.mrf.mxu0
  %v1506 = vpop.f32.mrf.mxu0
  %v1507 = vadd.f32 0.0, %v1506
  %v1508 = vpop.f32.mrf.mxu0
  %1509 = vmatprep.mubr.bf16.mxu0 0
  %1510 = vmatmul.mubr.bf16.gmra.mxu0 %v892
  %v1511 = vpop.f32.mrf.mxu0
  %v1512 = vadd.f32 0.0, %v1511
  %v1513 = vpop.f32.mrf.mxu0
  %v1514 = vpop.f32.mrf.mxu0
  %v1515 = vadd.f32 0.0, %v1514
  %v1516 = vpop.f32.mrf.mxu0
  %1517 = vmatprep.mubr.bf16.mxu0 0
  %1518 = vmatmul.mubr.bf16.gmra.mxu0 %v895
  %v1519 = vpop.f32.mrf.mxu0
  %v1520 = vadd.f32 0.0, %v1519
  %v1521 = vpop.f32.mrf.mxu0
  %v1522 = vpop.f32.mrf.mxu0
  %v1523 = vadd.f32 0.0, %v1522
  %v1524 = vpop.f32.mrf.mxu0
  %1525 = vmatprep.mubr.bf16.mxu0 0
  %1526 = vmatmul.mubr.bf16.gmra.mxu0 %v898
  %v1527 = vpop.f32.mrf.mxu0
  %v1528 = vadd.f32 0.0, %v1527
  %v1529 = vpop.f32.mrf.mxu0
  %v1530 = vpop.f32.mrf.mxu0
  %v1531 = vadd.f32 0.0, %v1530
  %v1532 = vpop.f32.mrf.mxu0
  %1533 = vmatprep.mubr.bf16.mxu0 0
  %1534 = vmatmul.mubr.bf16.gmra.mxu0 %v901
  %v1535 = vpop.f32.mrf.mxu0
  %v1536 = vadd.f32 0.0, %v1535
  %v1537 = vpop.f32.mrf.mxu0
  %v1538 = vpop.f32.mrf.mxu0
  %v1539 = vadd.f32 0.0, %v1538
  %v1540 = vpop.f32.mrf.mxu0
  %1541 = vmatprep.mubr.bf16.mxu0 0
  %1542 = vmatmul.mubr.bf16.gmra.mxu0 %v904
  %v1543 = vpop.f32.mrf.mxu0
  %v1544 = vadd.f32 0.0, %v1543
  %v1545 = vpop.f32.mrf.mxu0
  %v1546 = vpop.f32.mrf.mxu0
  %v1547 = vadd.f32 0.0, %v1546
  %v1548 = vpop.f32.mrf.mxu0
  %1549 = vmatprep.mubr.bf16.mxu0 0
  %1550 = vmatmul.mubr.bf16.gmra.mxu0 %v907
  %v1551 = vpop.f32.mrf.mxu0
  %v1552 = vadd.f32 0.0, %v1551
  %v1553 = vpop.f32.mrf.mxu0
  %v1554 = vpop.f32.mrf.mxu0
  %v1555 = vadd.f32 0.0, %v1554
  %v1556 = vpop.f32.mrf.mxu0
  %1557 = vmatprep.mubr.bf16.mxu0 0
  %1558 = vmatmul.mubr.bf16.gmra.mxu0 %v910
  %v1559 = vpop.f32.mrf.mxu0
  %v1560 = vadd.f32 0.0, %v1559
  %v1561 = vpop.f32.mrf.mxu0
  %v1562 = vpop.f32.mrf.mxu0
  %v1563 = vadd.f32 0.0, %v1562
  %v1564 = vpop.f32.mrf.mxu0
  %1565 = vmatprep.mubr.bf16.mxu0 0
  %1566 = vmatmul.mubr.bf16.gmra.mxu0 %v913
  %v1567 = vpop.f32.mrf.mxu0
  %v1568 = vadd.f32 0.0, %v1567
  %v1569 = vpop.f32.mrf.mxu0
  %v1570 = vpop.f32.mrf.mxu0
  %v1571 = vadd.f32 0.0, %v1570
  %v1572 = vpop.f32.mrf.mxu0
  %1573 = vmatprep.mubr.bf16.mxu0 0
  %1574 = vmatmul.mubr.bf16.gmra.mxu0 %v916
  %v1575 = vpop.f32.mrf.mxu0
  %v1576 = vadd.f32 0.0, %v1575
  %v1577 = vpop.f32.mrf.mxu0
  %v1578 = vpop.f32.mrf.mxu0
  %v1579 = vadd.f32 0.0, %v1578
  %v1580 = vpop.f32.mrf.mxu0
  %1581 = vmatprep.mubr.bf16.mxu0 0
  %1582 = vmatmul.mubr.bf16.gmra.mxu0 %v919
  %v1583 = vpop.f32.mrf.mxu0
  %v1584 = vadd.f32 0.0, %v1583
  %v1585 = vpop.f32.mrf.mxu0
  %v1586 = vpop.f32.mrf.mxu0
  %v1587 = vadd.f32 0.0, %v1586
  %v1588 = vpop.f32.mrf.mxu0
  %1589 = vmatprep.mubr.bf16.mxu0 0
  %1590 = vmatmul.mubr.bf16.gmra.mxu0 %v922
  %v1591 = vpop.f32.mrf.mxu0
  %v1592 = vadd.f32 0.0, %v1591
  %v1593 = vpop.f32.mrf.mxu0
  %v1594 = vpop.f32.mrf.mxu0
  %v1595 = vadd.f32 0.0, %v1594
  %v1596 = vpop.f32.mrf.mxu0
  %1597 = vmatprep.mubr.bf16.mxu0 0
  %1598 = vmatmul.mubr.bf16.gmra.mxu0 %v925
  %v1599 = vpop.f32.mrf.mxu0
  %v1600 = vadd.f32 0.0, %v1599
  %v1601 = vpop.f32.mrf.mxu0
  %v1602 = vpop.f32.mrf.mxu0
  %v1603 = vadd.f32 0.0, %v1602
  %v1604 = vpop.f32.mrf.mxu0
  %1605 = vmatprep.mubr.bf16.mxu0 0
  %1606 = vmatmul.mubr.bf16.gmra.mxu0 %v928
  %v1607 = vpop.f32.mrf.mxu0
  %v1608 = vadd.f32 0.0, %v1607
  %v1609 = vpop.f32.mrf.mxu0
  %v1610 = vpop.f32.mrf.mxu0
  %v1611 = vadd.f32 0.0, %v1610
  %v1612 = vpop.f32.mrf.mxu0
  %1613 = vmatprep.mubr.bf16.mxu0 0
  %1614 = vmatmul.mubr.bf16.gmra.mxu0 %v931
  %v1615 = vpop.f32.mrf.mxu0
  %v1616 = vadd.f32 0.0, %v1615
  %v1617 = vpop.f32.mrf.mxu0
  %v1618 = vpop.f32.mrf.mxu0
  %v1619 = vadd.f32 0.0, %v1618
  %v1620 = vpop.f32.mrf.mxu0
  %1621 = vmatprep.mubr.bf16.mxu0 0
  %1622 = vmatmul.mubr.bf16.gmra.mxu0 %v934
  %v1623 = vpop.f32.mrf.mxu0
  %v1624 = vadd.f32 0.0, %v1623
  %v1625 = vpop.f32.mrf.mxu0
  %v1626 = vpop.f32.mrf.mxu0
  %v1627 = vadd.f32 0.0, %v1626
  %v1628 = vpop.f32.mrf.mxu0
  %1629 = vmatprep.mubr.bf16.mxu0 0
  %1630 = vmatmul.mubr.bf16.gmra.mxu0 %v937
  %v1631 = vpop.f32.mrf.mxu0
  %v1632 = vadd.f32 0.0, %v1631
  %v1633 = vpop.f32.mrf.mxu0
  %v1634 = vpop.f32.mrf.mxu0
  %v1635 = vadd.f32 0.0, %v1634
  %v1636 = vpop.f32.mrf.mxu0
  %1637 = vmatprep.mubr.bf16.mxu0 0
  %1638 = vmatmul.mubr.bf16.gmra.mxu0 %v940
  %v1639 = vpop.f32.mrf.mxu0
  %v1640 = vadd.f32 0.0, %v1639
  %v1641 = vpop.f32.mrf.mxu0
  %v1642 = vpop.f32.mrf.mxu0
  %v1643 = vadd.f32 0.0, %v1642
  %v1644 = vpop.f32.mrf.mxu0
  %1645 = vmatprep.mubr.bf16.mxu0 0
  %1646 = vmatmul.mubr.bf16.gmra.mxu0 %v943
  %v1647 = vpop.f32.mrf.mxu0
  %v1648 = vadd.f32 0.0, %v1647
  %v1649 = vpop.f32.mrf.mxu0
  %v1650 = vpop.f32.mrf.mxu0
  %v1651 = vadd.f32 0.0, %v1650
  %v1652 = vpop.f32.mrf.mxu0
  %1653 = vmatprep.mubr.bf16.mxu0 0
  %1654 = vmatmul.mubr.bf16.gmra.mxu0 %v946
  %v1655 = vpop.f32.mrf.mxu0
  %v1656 = vadd.f32 0.0, %v1655
  %v1657 = vpop.f32.mrf.mxu0
  %v1658 = vpop.f32.mrf.mxu0
  %v1659 = vadd.f32 0.0, %v1658
  %v1660 = vpop.f32.mrf.mxu0
  %1661 = vmatprep.mubr.bf16.mxu0 0
  %1662 = vmatmul.mubr.bf16.gmra.mxu0 %v949
  %v1663 = vpop.f32.mrf.mxu0
  %v1664 = vadd.f32 0.0, %v1663
  %v1665 = vpop.f32.mrf.mxu0
  %v1666 = vpop.f32.mrf.mxu0
  %v1667 = vadd.f32 0.0, %v1666
  %v1668 = vpop.f32.mrf.mxu0
  %1669 = vmatprep.mubr.bf16.mxu0 0
  %1670 = vmatmul.mubr.bf16.gmra.mxu0 %v952
  %v1671 = vpop.f32.mrf.mxu0
  %v1672 = vadd.f32 0.0, %v1671
  %v1673 = vpop.f32.mrf.mxu0
  %v1674 = vpop.f32.mrf.mxu0
  %v1675 = vadd.f32 0.0, %v1674
  %v1676 = vpop.f32.mrf.mxu0
  %1677 = vmatprep.mubr.bf16.mxu0 0
  %1678 = vmatmul.mubr.bf16.gmra.mxu0 %v955
  %v1679 = vpop.f32.mrf.mxu0
  %v1680 = vadd.f32 0.0, %v1679
  %v1681 = vpop.f32.mrf.mxu0
  %v1682 = vpop.f32.mrf.mxu0
  %v1683 = vadd.f32 0.0, %v1682
  %v1684 = vpop.f32.mrf.mxu0
  %1685 = vmatprep.mubr.bf16.mxu0 0
  %1686 = vmatmul.mubr.bf16.gmra.mxu0 %v958
  %v1687 = vpop.f32.mrf.mxu0
  %v1688 = vadd.f32 0.0, %v1687
  %v1689 = vpop.f32.mrf.mxu0
  %v1690 = vpop.f32.mrf.mxu0
  %v1691 = vadd.f32 0.0, %v1690
  %v1692 = vpop.f32.mrf.mxu0
  %1693 = vmatprep.mubr.bf16.mxu0 0
  %1694 = vmatmul.mubr.bf16.gmra.mxu0 %v961
  %v1695 = vpop.f32.mrf.mxu0
  %v1696 = vadd.f32 0.0, %v1695
  %v1697 = vpop.f32.mrf.mxu0
  %v1698 = vpop.f32.mrf.mxu0
  %v1699 = vadd.f32 0.0, %v1698
  %v1700 = vpop.f32.mrf.mxu0
  %1701 = vmatprep.mubr.bf16.mxu0 0
  %1702 = vmatmul.mubr.bf16.gmra.mxu0 %v964
  %v1703 = vpop.f32.mrf.mxu0
  %v1704 = vadd.f32 0.0, %v1703
  %v1705 = vpop.f32.mrf.mxu0
  %v1706 = vpop.f32.mrf.mxu0
  %v1707 = vadd.f32 0.0, %v1706
  %v1708 = vpop.f32.mrf.mxu0
  %1709 = vmatprep.mubr.bf16.mxu0 0
  %1710 = vmatmul.mubr.bf16.gmra.mxu0 %v967
  %v1711 = vpop.f32.mrf.mxu0
  %v1712 = vadd.f32 0.0, %v1711
  %v1713 = vpop.f32.mrf.mxu0
  %v1714 = vpop.f32.mrf.mxu0
  %v1715 = vadd.f32 0.0, %v1714
  %v1716 = vpop.f32.mrf.mxu0
  %1717 = vmatprep.mubr.bf16.mxu0 0
  %1718 = vmatmul.mubr.bf16.gmra.mxu0 %v970
  %v1719 = vpop.f32.mrf.mxu0
  %v1720 = vadd.f32 0.0, %v1719
  %v1721 = vpop.f32.mrf.mxu0
  %v1722 = vpop.f32.mrf.mxu0
  %v1723 = vadd.f32 0.0, %v1722
  %v1724 = vpop.f32.mrf.mxu0
  %1725 = vmatprep.mubr.bf16.mxu0 0
  %1726 = vmatmul.mubr.bf16.gmra.mxu0 %v973
  %v1727 = vpop.f32.mrf.mxu0
  %v1728 = vadd.f32 0.0, %v1727
  %v1729 = vpop.f32.mrf.mxu0
  %v1730 = vpop.f32.mrf.mxu0
  %v1731 = vadd.f32 0.0, %v1730
  %v1732 = vpop.f32.mrf.mxu0
  %1733 = vmatprep.mubr.bf16.mxu0 0
  %1734 = vmatmul.mubr.bf16.gmra.mxu0 %v976
  %v1735 = vpop.f32.mrf.mxu0
  %v1736 = vadd.f32 0.0, %v1735
  %v1737 = vpop.f32.mrf.mxu0
  %v1738 = vpop.f32.mrf.mxu0
  %v1739 = vadd.f32 0.0, %v1738
  %v1740 = vpop.f32.mrf.mxu0
  %1741 = vmatprep.mubr.bf16.mxu0 0
  %1742 = vmatmul.mubr.bf16.gmra.mxu0 %v979
  %v1743 = vpop.f32.mrf.mxu0
  %v1744 = vadd.f32 0.0, %v1743
  %v1745 = vpop.f32.mrf.mxu0
  %v1746 = vpop.f32.mrf.mxu0
  %v1747 = vadd.f32 0.0, %v1746
  %v1748 = vpop.f32.mrf.mxu0
  %1749 = vmatprep.mubr.bf16.mxu0 0
  %1750 = vmatmul.mubr.bf16.gmra.mxu0 %v982
  %v1751 = vpop.f32.mrf.mxu0
  %v1752 = vadd.f32 0.0, %v1751
  %v1753 = vpop.f32.mrf.mxu0
  %v1754 = vpop.f32.mrf.mxu0
  %v1755 = vadd.f32 0.0, %v1754
  %v1756 = vpop.f32.mrf.mxu0
  %1757 = vmatprep.mubr.bf16.mxu0 0
  %1758 = vmatmul.mubr.bf16.gmra.mxu0 %v985
  %v1759 = vpop.f32.mrf.mxu0
  %v1760 = vadd.f32 0.0, %v1759
  %v1761 = vpop.f32.mrf.mxu0
  %v1762 = vpop.f32.mrf.mxu0
  %v1763 = vadd.f32 0.0, %v1762
  %v1764 = vpop.f32.mrf.mxu0
  %1765 = vmatprep.mubr.bf16.mxu0 0
  %1766 = vmatmul.mubr.bf16.gmra.mxu0 %v988
  %v1767 = vpop.f32.mrf.mxu0
  %v1768 = vadd.f32 0.0, %v1767
  %v1769 = vpop.f32.mrf.mxu0
  %v1770 = vpop.f32.mrf.mxu0
  %v1771 = vadd.f32 0.0, %v1770
  %v1772 = vpop.f32.mrf.mxu0
  %1773 = vmatprep.mubr.bf16.mxu0 0
  %1774 = vmatmul.mubr.bf16.gmra.mxu0 %v991
  %v1775 = vpop.f32.mrf.mxu0
  %v1776 = vadd.f32 0.0, %v1775
  %v1777 = vpop.f32.mrf.mxu0
  %v1778 = vpop.f32.mrf.mxu0
  %v1779 = vadd.f32 0.0, %v1778
  %v1780 = vpop.f32.mrf.mxu0
  %1781 = vmatprep.mubr.bf16.mxu0 0
  %1782 = vmatmul.mubr.bf16.gmra.mxu0 %v994
  %v1783 = vpop.f32.mrf.mxu0
  %v1784 = vadd.f32 0.0, %v1783
  %v1785 = vpop.f32.mrf.mxu0
  %v1786 = vpop.f32.mrf.mxu0
  %v1787 = vadd.f32 0.0, %v1786
  %v1788 = vpop.f32.mrf.mxu0
  %1789 = vmatprep.mubr.bf16.mxu0 0
  %1790 = vmatmul.mubr.bf16.gmra.mxu0 %v997
  %v1791 = vpop.f32.mrf.mxu0
  %v1792 = vadd.f32 0.0, %v1791
  %v1793 = vpop.f32.mrf.mxu0
  %v1794 = vpop.f32.mrf.mxu0
  %v1795 = vadd.f32 0.0, %v1794
  %v1796 = vpop.f32.mrf.mxu0
  %1797 = vmatprep.mubr.bf16.mxu0 0
  %1798 = vmatmul.mubr.bf16.gmra.mxu0 %v1000
  %v1799 = vpop.f32.mrf.mxu0
  %v1800 = vadd.f32 0.0, %v1799
  %v1801 = vpop.f32.mrf.mxu0
  %v1802 = vpop.f32.mrf.mxu0
  %v1803 = vadd.f32 0.0, %v1802
  %v1804 = vpop.f32.mrf.mxu0
  %1805 = vmatprep.mubr.bf16.mxu0 0
  %1806 = vmatmul.mubr.bf16.gmra.mxu0 %v1003
  %v1807 = vpop.f32.mrf.mxu0
  %v1808 = vadd.f32 0.0, %v1807
  %v1809 = vpop.f32.mrf.mxu0
  %v1810 = vpop.f32.mrf.mxu0
  %v1811 = vadd.f32 0.0, %v1810
  %v1812 = vpop.f32.mrf.mxu0
  %1813 = vmatprep.mubr.bf16.mxu0 0
  %1814 = vmatmul.mubr.bf16.gmra.mxu0 %v1006
  %v1815 = vpop.f32.mrf.mxu0
  %v1816 = vadd.f32 0.0, %v1815
  %v1817 = vpop.f32.mrf.mxu0
  %v1818 = vpop.f32.mrf.mxu0
  %v1819 = vadd.f32 0.0, %v1818
  %v1820 = vpop.f32.mrf.mxu0
  %1821 = vmatprep.mubr.bf16.mxu0 0
  %1822 = vmatmul.mubr.bf16.gmra.mxu0 %v1009
  %v1823 = vpop.f32.mrf.mxu0
  %v1824 = vadd.f32 0.0, %v1823
  %v1825 = vpop.f32.mrf.mxu0
  %v1826 = vpop.f32.mrf.mxu0
  %v1827 = vadd.f32 0.0, %v1826
  %v1828 = vpop.f32.mrf.mxu0
  %1829 = vmatprep.mubr.bf16.mxu0 0
  %1830 = vmatmul.mubr.bf16.gmra.mxu0 %v1012
  %v1831 = vpop.f32.mrf.mxu0
  %v1832 = vadd.f32 0.0, %v1831
  %v1833 = vpop.f32.mrf.mxu0
  %v1834 = vpop.f32.mrf.mxu0
  %v1835 = vadd.f32 0.0, %v1834
  %v1836 = vpop.f32.mrf.mxu0
  %1837 = vdwg.mxu0
  %v1838 = vld [vmem:[%s2] sm:$0x1]
  %v1840 = vlaneseq
  %v1841 = vshrl.u32 %v1840, 7
  %v1842 = vsub.s32 0, %v1841
  %v1843 = vrot.slane %v1838, %v1842
  %v1845 = vmul.f32 %v1056, %v1843
  %v1846 = vmul.f32 %v1059, %v1843
  %v1847 = vmul.f32 %v1064, %v1843
  %v1848 = vmul.f32 %v1067, %v1843
  %v1849 = vmul.f32 %v1072, %v1843
  %v1850 = vmul.f32 %v1075, %v1843
  %v1851 = vmul.f32 %v1080, %v1843
  %v1852 = vmul.f32 %v1083, %v1843
  %v1853 = vmul.f32 %v1088, %v1843
  %v1854 = vmul.f32 %v1091, %v1843
  %v1855 = vmul.f32 %v1096, %v1843
  %v1856 = vmul.f32 %v1099, %v1843
  %v1857 = vmul.f32 %v1104, %v1843
  %v1858 = vmul.f32 %v1107, %v1843
  %v1859 = vmul.f32 %v1112, %v1843
  %v1860 = vmul.f32 %v1115, %v1843
  %v1861 = vmul.f32 %v1120, %v1843
  %v1862 = vmul.f32 %v1123, %v1843
  %v1863 = vmul.f32 %v1128, %v1843
  %v1864 = vmul.f32 %v1131, %v1843
  %v1865 = vmul.f32 %v1136, %v1843
  %v1866 = vmul.f32 %v1139, %v1843
  %v1867 = vmul.f32 %v1144, %v1843
  %v1868 = vmul.f32 %v1147, %v1843
  %v1869 = vmul.f32 %v1152, %v1843
  %v1870 = vmul.f32 %v1155, %v1843
  %v1871 = vmul.f32 %v1160, %v1843
  %v1872 = vmul.f32 %v1163, %v1843
  %v1873 = vmul.f32 %v1168, %v1843
  %v1874 = vmul.f32 %v1171, %v1843
  %v1875 = vmul.f32 %v1176, %v1843
  %v1876 = vmul.f32 %v1179, %v1843
  %v1877 = vmul.f32 %v1184, %v1843
  %v1878 = vmul.f32 %v1187, %v1843
  %v1879 = vmul.f32 %v1192, %v1843
  %v1880 = vmul.f32 %v1195, %v1843
  %v1881 = vmul.f32 %v1200, %v1843
  %v1882 = vmul.f32 %v1203, %v1843
  %v1883 = vmul.f32 %v1208, %v1843
  %v1884 = vmul.f32 %v1211, %v1843
  %v1885 = vmul.f32 %v1216, %v1843
  %v1886 = vmul.f32 %v1219, %v1843
  %v1887 = vmul.f32 %v1224, %v1843
  %v1888 = vmul.f32 %v1227, %v1843
  %v1889 = vmul.f32 %v1232, %v1843
  %v1890 = vmul.f32 %v1235, %v1843
  %v1891 = vmul.f32 %v1240, %v1843
  %v1892 = vmul.f32 %v1243, %v1843
  %v1893 = vmul.f32 %v1248, %v1843
  %v1894 = vmul.f32 %v1251, %v1843
  %v1895 = vmul.f32 %v1256, %v1843
  %v1896 = vmul.f32 %v1259, %v1843
  %v1897 = vmul.f32 %v1264, %v1843
  %v1898 = vmul.f32 %v1267, %v1843
  %v1899 = vmul.f32 %v1272, %v1843
  %v1900 = vmul.f32 %v1275, %v1843
  %v1901 = vmul.f32 %v1280, %v1843
  %v1902 = vmul.f32 %v1283, %v1843
  %v1903 = vmul.f32 %v1288, %v1843
  %v1904 = vmul.f32 %v1291, %v1843
  %v1905 = vmul.f32 %v1296, %v1843
  %v1906 = vmul.f32 %v1299, %v1843
  %v1907 = vmul.f32 %v1304, %v1843
  %v1908 = vmul.f32 %v1307, %v1843
  %v1909 = vmul.f32 %v1312, %v1843
  %v1910 = vmul.f32 %v1315, %v1843
  %v1911 = vmul.f32 %v1320, %v1843
  %v1912 = vmul.f32 %v1323, %v1843
  %v1913 = vmul.f32 %v1328, %v1843
  %v1914 = vmul.f32 %v1331, %v1843
  %v1915 = vmul.f32 %v1336, %v1843
  %v1916 = vmul.f32 %v1339, %v1843
  %v1917 = vmul.f32 %v1344, %v1843
  %v1918 = vmul.f32 %v1347, %v1843
  %v1919 = vmul.f32 %v1352, %v1843
  %v1920 = vmul.f32 %v1355, %v1843
  %v1921 = vmul.f32 %v1360, %v1843
  %v1922 = vmul.f32 %v1363, %v1843
  %v1923 = vmul.f32 %v1368, %v1843
  %v1924 = vmul.f32 %v1371, %v1843
  %v1925 = vmul.f32 %v1376, %v1843
  %v1926 = vmul.f32 %v1379, %v1843
  %v1927 = vmul.f32 %v1384, %v1843
  %v1928 = vmul.f32 %v1387, %v1843
  %v1929 = vmul.f32 %v1392, %v1843
  %v1930 = vmul.f32 %v1395, %v1843
  %v1931 = vmul.f32 %v1400, %v1843
  %v1932 = vmul.f32 %v1403, %v1843
  %v1933 = vmul.f32 %v1408, %v1843
  %v1934 = vmul.f32 %v1411, %v1843
  %v1935 = vmul.f32 %v1416, %v1843
  %v1936 = vmul.f32 %v1419, %v1843
  %v1937 = vmul.f32 %v1424, %v1843
  %v1938 = vmul.f32 %v1427, %v1843
  %v1939 = vmul.f32 %v1432, %v1843
  %v1940 = vmul.f32 %v1435, %v1843
  %v1941 = vmul.f32 %v1440, %v1843
  %v1942 = vmul.f32 %v1443, %v1843
  %v1943 = vmul.f32 %v1448, %v1843
  %v1944 = vmul.f32 %v1451, %v1843
  %v1945 = vmul.f32 %v1456, %v1843
  %v1946 = vmul.f32 %v1459, %v1843
  %v1947 = vmul.f32 %v1464, %v1843
  %v1948 = vmul.f32 %v1467, %v1843
  %v1949 = vmul.f32 %v1472, %v1843
  %v1950 = vmul.f32 %v1475, %v1843
  %v1951 = vmul.f32 %v1480, %v1843
  %v1952 = vmul.f32 %v1483, %v1843
  %v1953 = vmul.f32 %v1488, %v1843
  %v1954 = vmul.f32 %v1491, %v1843
  %v1955 = vmul.f32 %v1496, %v1843
  %v1956 = vmul.f32 %v1499, %v1843
  %v1957 = vmul.f32 %v1504, %v1843
  %v1958 = vmul.f32 %v1507, %v1843
  %v1959 = vmul.f32 %v1512, %v1843
  %v1960 = vmul.f32 %v1515, %v1843
  %v1961 = vmul.f32 %v1520, %v1843
  %v1962 = vmul.f32 %v1523, %v1843
  %v1963 = vmul.f32 %v1528, %v1843
  %v1964 = vmul.f32 %v1531, %v1843
  %v1965 = vmul.f32 %v1536, %v1843
  %v1966 = vmul.f32 %v1539, %v1843
  %v1967 = vmul.f32 %v1544, %v1843
  %v1968 = vmul.f32 %v1547, %v1843
  %v1969 = vmul.f32 %v1552, %v1843
  %v1970 = vmul.f32 %v1555, %v1843
  %v1971 = vmul.f32 %v1560, %v1843
  %v1972 = vmul.f32 %v1563, %v1843
  %v1973 = vmul.f32 %v1568, %v1843
  %v1974 = vmul.f32 %v1571, %v1843
  %v1975 = vmul.f32 %v1576, %v1843
  %v1976 = vmul.f32 %v1579, %v1843
  %v1977 = vmul.f32 %v1584, %v1843
  %v1978 = vmul.f32 %v1587, %v1843
  %v1979 = vmul.f32 %v1592, %v1843
  %v1980 = vmul.f32 %v1595, %v1843
  %v1981 = vmul.f32 %v1600, %v1843
  %v1982 = vmul.f32 %v1603, %v1843
  %v1983 = vmul.f32 %v1608, %v1843
  %v1984 = vmul.f32 %v1611, %v1843
  %v1985 = vmul.f32 %v1616, %v1843
  %v1986 = vmul.f32 %v1619, %v1843
  %v1987 = vmul.f32 %v1624, %v1843
  %v1988 = vmul.f32 %v1627, %v1843
  %v1989 = vmul.f32 %v1632, %v1843
  %v1990 = vmul.f32 %v1635, %v1843
  %v1991 = vmul.f32 %v1640, %v1843
  %v1992 = vmul.f32 %v1643, %v1843
  %v1993 = vmul.f32 %v1648, %v1843
  %v1994 = vmul.f32 %v1651, %v1843
  %v1995 = vmul.f32 %v1656, %v1843
  %v1996 = vmul.f32 %v1659, %v1843
  %v1997 = vmul.f32 %v1664, %v1843
  %v1998 = vmul.f32 %v1667, %v1843
  %v1999 = vmul.f32 %v1672, %v1843
  %v2000 = vmul.f32 %v1675, %v1843
  %v2001 = vmul.f32 %v1680, %v1843
  %v2002 = vmul.f32 %v1683, %v1843
  %v2003 = vmul.f32 %v1688, %v1843
  %v2004 = vmul.f32 %v1691, %v1843
  %v2005 = vmul.f32 %v1696, %v1843
  %v2006 = vmul.f32 %v1699, %v1843
  %v2007 = vmul.f32 %v1704, %v1843
  %v2008 = vmul.f32 %v1707, %v1843
  %v2009 = vmul.f32 %v1712, %v1843
  %v2010 = vmul.f32 %v1715, %v1843
  %v2011 = vmul.f32 %v1720, %v1843
  %v2012 = vmul.f32 %v1723, %v1843
  %v2013 = vmul.f32 %v1728, %v1843
  %v2014 = vmul.f32 %v1731, %v1843
  %v2015 = vmul.f32 %v1736, %v1843
  %v2016 = vmul.f32 %v1739, %v1843
  %v2017 = vmul.f32 %v1744, %v1843
  %v2018 = vmul.f32 %v1747, %v1843
  %v2019 = vmul.f32 %v1752, %v1843
  %v2020 = vmul.f32 %v1755, %v1843
  %v2021 = vmul.f32 %v1760, %v1843
  %v2022 = vmul.f32 %v1763, %v1843
  %v2023 = vmul.f32 %v1768, %v1843
  %v2024 = vmul.f32 %v1771, %v1843
  %v2025 = vmul.f32 %v1776, %v1843
  %v2026 = vmul.f32 %v1779, %v1843
  %v2027 = vmul.f32 %v1784, %v1843
  %v2028 = vmul.f32 %v1787, %v1843
  %v2029 = vmul.f32 %v1792, %v1843
  %v2030 = vmul.f32 %v1795, %v1843
  %v2031 = vmul.f32 %v1800, %v1843
  %v2032 = vmul.f32 %v1803, %v1843
  %v2033 = vmul.f32 %v1808, %v1843
  %v2034 = vmul.f32 %v1811, %v1843
  %v2035 = vmul.f32 %v1816, %v1843
  %v2036 = vmul.f32 %v1819, %v1843
  %v2037 = vmul.f32 %v1824, %v1843
  %v2038 = vmul.f32 %v1827, %v1843
  %v2039 = vmul.f32 %v1832, %v1843
  %v2040 = vmul.f32 %v1835, %v1843
  %v2041 = vmax.f32 %v1845, %v1894
  %v2042 = vmax.f32 %v1846, %v1895
  %v2043 = vmax.f32 %v1847, %v1896
  %v2044 = vmax.f32 %v1848, %v1897
  %v2045 = vmax.f32 %v1849, %v1898
  %v2046 = vmax.f32 %v1850, %v1899
  %v2047 = vmax.f32 %v1851, %v1900
  %v2048 = vmax.f32 %v1852, %v1901
  %v2049 = vmax.f32 %v1853, %v1902
  %v2050 = vmax.f32 %v1854, %v1903
  %v2051 = vmax.f32 %v1855, %v1904
  %v2052 = vmax.f32 %v1856, %v1905
  %v2053 = vmax.f32 %v1857, %v1906
  %v2054 = vmax.f32 %v1858, %v1907
  %v2055 = vmax.f32 %v1859, %v1908
  %v2056 = vmax.f32 %v1860, %v1909
  %v2057 = vmax.f32 %v1861, %v1910
  %v2058 = vmax.f32 %v1862, %v1911
  %v2059 = vmax.f32 %v1863, %v1912
  %v2060 = vmax.f32 %v1864, %v1913
  %v2061 = vmax.f32 %v1865, %v1914
  %v2062 = vmax.f32 %v1866, %v1915
  %v2063 = vmax.f32 %v1867, %v1916
  %v2064 = vmax.f32 %v1868, %v1917
  %v2065 = vmax.f32 %v1869, %v1918
  %v2066 = vmax.f32 %v1870, %v1919
  %v2067 = vmax.f32 %v1871, %v1920
  %v2068 = vmax.f32 %v1872, %v1921
  %v2069 = vmax.f32 %v1873, %v1922
  %v2070 = vmax.f32 %v1874, %v1923
  %v2071 = vmax.f32 %v1875, %v1924
  %v2072 = vmax.f32 %v1876, %v1925
  %v2073 = vmax.f32 %v1877, %v1926
  %v2074 = vmax.f32 %v1878, %v1927
  %v2075 = vmax.f32 %v1879, %v1928
  %v2076 = vmax.f32 %v1880, %v1929
  %v2077 = vmax.f32 %v1881, %v1930
  %v2078 = vmax.f32 %v1882, %v1931
  %v2079 = vmax.f32 %v1883, %v1932
  %v2080 = vmax.f32 %v1884, %v1933
  %v2081 = vmax.f32 %v1885, %v1934
  %v2082 = vmax.f32 %v1886, %v1935
  %v2083 = vmax.f32 %v1887, %v1936
  %v2084 = vmax.f32 %v1888, %v1937
  %v2085 = vmax.f32 %v1889, %v1938
  %v2086 = vmax.f32 %v1890, %v1939
  %v2087 = vmax.f32 %v1891, %v1940
  %v2088 = vmax.f32 %v1892, %v1941
  %v2089 = vmax.f32 %v1893, %v1942
  %v2090 = vmax.f32 %v1943, %v1992
  %v2091 = vmax.f32 %v1944, %v1993
  %v2092 = vmax.f32 %v1945, %v1994
  %v2093 = vmax.f32 %v1946, %v1995
  %v2094 = vmax.f32 %v1947, %v1996
  %v2095 = vmax.f32 %v1948, %v1997
  %v2096 = vmax.f32 %v1949, %v1998
  %v2097 = vmax.f32 %v1950, %v1999
  %v2098 = vmax.f32 %v1951, %v2000
  %v2099 = vmax.f32 %v1952, %v2001
  %v2100 = vmax.f32 %v1953, %v2002
  %v2101 = vmax.f32 %v1954, %v2003
  %v2102 = vmax.f32 %v1955, %v2004
  %v2103 = vmax.f32 %v1956, %v2005
  %v2104 = vmax.f32 %v1957, %v2006
  %v2105 = vmax.f32 %v1958, %v2007
  %v2106 = vmax.f32 %v1959, %v2008
  %v2107 = vmax.f32 %v1960, %v2009
  %v2108 = vmax.f32 %v1961, %v2010
  %v2109 = vmax.f32 %v1962, %v2011
  %v2110 = vmax.f32 %v1963, %v2012
  %v2111 = vmax.f32 %v1964, %v2013
  %v2112 = vmax.f32 %v1965, %v2014
  %v2113 = vmax.f32 %v1966, %v2015
  %v2114 = vmax.f32 %v1967, %v2016
  %v2115 = vmax.f32 %v1968, %v2017
  %v2116 = vmax.f32 %v1969, %v2018
  %v2117 = vmax.f32 %v1970, %v2019
  %v2118 = vmax.f32 %v1971, %v2020
  %v2119 = vmax.f32 %v1972, %v2021
  %v2120 = vmax.f32 %v1973, %v2022
  %v2121 = vmax.f32 %v1974, %v2023
  %v2122 = vmax.f32 %v1975, %v2024
  %v2123 = vmax.f32 %v1976, %v2025
  %v2124 = vmax.f32 %v1977, %v2026
  %v2125 = vmax.f32 %v1978, %v2027
  %v2126 = vmax.f32 %v1979, %v2028
  %v2127 = vmax.f32 %v1980, %v2029
  %v2128 = vmax.f32 %v1981, %v2030
  %v2129 = vmax.f32 %v1982, %v2031
  %v2130 = vmax.f32 %v1983, %v2032
  %v2131 = vmax.f32 %v1984, %v2033
  %v2132 = vmax.f32 %v1985, %v2034
  %v2133 = vmax.f32 %v1986, %v2035
  %v2134 = vmax.f32 %v1987, %v2036
  %v2135 = vmax.f32 %v1988, %v2037
  %v2136 = vmax.f32 %v1989, %v2038
  %v2137 = vmax.f32 %v1990, %v2039
  %v2138 = vmax.f32 %v1991, %v2040
  %v2139 = vmax.f32 %v2041, %v2090
  %v2140 = vmax.f32 %v2042, %v2091
  %v2141 = vmax.f32 %v2043, %v2092
  %v2142 = vmax.f32 %v2044, %v2093
  %v2143 = vmax.f32 %v2045, %v2094
  %v2144 = vmax.f32 %v2046, %v2095
  %v2145 = vmax.f32 %v2047, %v2096
  %v2146 = vmax.f32 %v2048, %v2097
  %v2147 = vmax.f32 %v2049, %v2098
  %v2148 = vmax.f32 %v2050, %v2099
  %v2149 = vmax.f32 %v2051, %v2100
  %v2150 = vmax.f32 %v2052, %v2101
  %v2151 = vmax.f32 %v2053, %v2102
  %v2152 = vmax.f32 %v2054, %v2103
  %v2153 = vmax.f32 %v2055, %v2104
  %v2154 = vmax.f32 %v2056, %v2105
  %v2155 = vmax.f32 %v2057, %v2106
  %v2156 = vmax.f32 %v2058, %v2107
  %v2157 = vmax.f32 %v2059, %v2108
  %v2158 = vmax.f32 %v2060, %v2109
  %v2159 = vmax.f32 %v2061, %v2110
  %v2160 = vmax.f32 %v2062, %v2111
  %v2161 = vmax.f32 %v2063, %v2112
  %v2162 = vmax.f32 %v2064, %v2113
  %v2163 = vmax.f32 %v2065, %v2114
  %v2164 = vmax.f32 %v2066, %v2115
  %v2165 = vmax.f32 %v2067, %v2116
  %v2166 = vmax.f32 %v2068, %v2117
  %v2167 = vmax.f32 %v2069, %v2118
  %v2168 = vmax.f32 %v2070, %v2119
  %v2169 = vmax.f32 %v2071, %v2120
  %v2170 = vmax.f32 %v2072, %v2121
  %v2171 = vmax.f32 %v2073, %v2122
  %v2172 = vmax.f32 %v2074, %v2123
  %v2173 = vmax.f32 %v2075, %v2124
  %v2174 = vmax.f32 %v2076, %v2125
  %v2175 = vmax.f32 %v2077, %v2126
  %v2176 = vmax.f32 %v2078, %v2127
  %v2177 = vmax.f32 %v2079, %v2128
  %v2178 = vmax.f32 %v2080, %v2129
  %v2179 = vmax.f32 %v2081, %v2130
  %v2180 = vmax.f32 %v2082, %v2131
  %v2181 = vmax.f32 %v2083, %v2132
  %v2182 = vmax.f32 %v2084, %v2133
  %v2183 = vmax.f32 %v2085, %v2134
  %v2184 = vmax.f32 %v2086, %v2135
  %v2185 = vmax.f32 %v2087, %v2136
  %v2186 = vmax.f32 %v2088, %v2137
  %v2187 = vmax.f32 %v2089, %v2138
  %v2188 = vld [vmem:[%s3] sm:$0x1]
  %v2190 = vlaneseq
  %v2191 = vshrl.u32 %v2190, 7
  %v2192 = vsub.s32 0, %v2191
  %v2193 = vrot.slane %v2188, %v2192
  %v2195 = vadd.f32 %v2139, %v2193
  %v2196 = vadd.f32 %v2140, %v2193
  %v2197 = vadd.f32 %v2141, %v2193
  %v2198 = vadd.f32 %v2142, %v2193
  %v2199 = vadd.f32 %v2143, %v2193
  %v2200 = vadd.f32 %v2144, %v2193
  %v2201 = vadd.f32 %v2145, %v2193
  %v2202 = vadd.f32 %v2146, %v2193
  %v2203 = vadd.f32 %v2147, %v2193
  %v2204 = vadd.f32 %v2148, %v2193
  %v2205 = vadd.f32 %v2149, %v2193
  %v2206 = vadd.f32 %v2150, %v2193
  %v2207 = vadd.f32 %v2151, %v2193
  %v2208 = vadd.f32 %v2152, %v2193
  %v2209 = vadd.f32 %v2153, %v2193
  %v2210 = vadd.f32 %v2154, %v2193
  %v2211 = vadd.f32 %v2155, %v2193
  %v2212 = vadd.f32 %v2156, %v2193
  %v2213 = vadd.f32 %v2157, %v2193
  %v2214 = vadd.f32 %v2158, %v2193
  %v2215 = vadd.f32 %v2159, %v2193
  %v2216 = vadd.f32 %v2160, %v2193
  %v2217 = vadd.f32 %v2161, %v2193
  %v2218 = vadd.f32 %v2162, %v2193
  %v2219 = vadd.f32 %v2163, %v2193
  %v2220 = vadd.f32 %v2164, %v2193
  %v2221 = vadd.f32 %v2165, %v2193
  %v2222 = vadd.f32 %v2166, %v2193
  %v2223 = vadd.f32 %v2167, %v2193
  %v2224 = vadd.f32 %v2168, %v2193
  %v2225 = vadd.f32 %v2169, %v2193
  %v2226 = vadd.f32 %v2170, %v2193
  %v2227 = vadd.f32 %v2171, %v2193
  %v2228 = vadd.f32 %v2172, %v2193
  %v2229 = vadd.f32 %v2173, %v2193
  %v2230 = vadd.f32 %v2174, %v2193
  %v2231 = vadd.f32 %v2175, %v2193
  %v2232 = vadd.f32 %v2176, %v2193
  %v2233 = vadd.f32 %v2177, %v2193
  %v2234 = vadd.f32 %v2178, %v2193
  %v2235 = vadd.f32 %v2179, %v2193
  %v2236 = vadd.f32 %v2180, %v2193
  %v2237 = vadd.f32 %v2181, %v2193
  %v2238 = vadd.f32 %v2182, %v2193
  %v2239 = vadd.f32 %v2183, %v2193
  %v2240 = vadd.f32 %v2184, %v2193
  %v2241 = vadd.f32 %v2185, %v2193
  %v2242 = vadd.f32 %v2186, %v2193
  %v2243 = vadd.f32 %v2187, %v2193
  %v2244 = vmax.f32 %v2195, 0.0
  %v2245 = vmax.f32 %v2196, 0.0
  %v2246 = vmax.f32 %v2197, 0.0
  %v2247 = vmax.f32 %v2198, 0.0
  %v2248 = vmax.f32 %v2199, 0.0
  %v2249 = vmax.f32 %v2200, 0.0
  %v2250 = vmax.f32 %v2201, 0.0
  %v2251 = vmax.f32 %v2202, 0.0
  %v2252 = vmax.f32 %v2203, 0.0
  %v2253 = vmax.f32 %v2204, 0.0
  %v2254 = vmax.f32 %v2205, 0.0
  %v2255 = vmax.f32 %v2206, 0.0
  %v2256 = vmax.f32 %v2207, 0.0
  %v2257 = vmax.f32 %v2208, 0.0
  %v2258 = vmax.f32 %v2209, 0.0
  %v2259 = vmax.f32 %v2210, 0.0
  %v2260 = vmax.f32 %v2211, 0.0
  %v2261 = vmax.f32 %v2212, 0.0
  %v2262 = vmax.f32 %v2213, 0.0
  %v2263 = vmax.f32 %v2214, 0.0
  %v2264 = vmax.f32 %v2215, 0.0
  %v2265 = vmax.f32 %v2216, 0.0
  %v2266 = vmax.f32 %v2217, 0.0
  %v2267 = vmax.f32 %v2218, 0.0
  %v2268 = vmax.f32 %v2219, 0.0
  %v2269 = vmax.f32 %v2220, 0.0
  %v2270 = vmax.f32 %v2221, 0.0
  %v2271 = vmax.f32 %v2222, 0.0
  %v2272 = vmax.f32 %v2223, 0.0
  %v2273 = vmax.f32 %v2224, 0.0
  %v2274 = vmax.f32 %v2225, 0.0
  %v2275 = vmax.f32 %v2226, 0.0
  %v2276 = vmax.f32 %v2227, 0.0
  %v2277 = vmax.f32 %v2228, 0.0
  %v2278 = vmax.f32 %v2229, 0.0
  %v2279 = vmax.f32 %v2230, 0.0
  %v2280 = vmax.f32 %v2231, 0.0
  %v2281 = vmax.f32 %v2232, 0.0
  %v2282 = vmax.f32 %v2233, 0.0
  %v2283 = vmax.f32 %v2234, 0.0
  %v2284 = vmax.f32 %v2235, 0.0
  %v2285 = vmax.f32 %v2236, 0.0
  %v2286 = vmax.f32 %v2237, 0.0
  %v2287 = vmax.f32 %v2238, 0.0
  %v2288 = vmax.f32 %v2239, 0.0
  %v2289 = vmax.f32 %v2240, 0.0
  %v2290 = vmax.f32 %v2241, 0.0
  %v2291 = vmax.f32 %v2242, 0.0
  %v2292 = vmax.f32 %v2243, 0.0
  %vm2293 = vcmask 130048
  %2294 = vst.msk [vmem:[%s4] sm:$0xff] %vm2293, %v2244
  %2295 = vst.msk [vmem:[%s4 + $0x8] sm:$0xff] %vm2293, %v2245
  %2296 = vst.msk [vmem:[%s4 + $0x10] sm:$0xff] %vm2293, %v2246
  %2297 = vst.msk [vmem:[%s4 + $0x18] sm:$0xff] %vm2293, %v2247
  %2298 = vst.msk [vmem:[%s4 + $0x20] sm:$0xff] %vm2293, %v2248
  %2299 = vst.msk [vmem:[%s4 + $0x28] sm:$0xff] %vm2293, %v2249
  %2300 = vst.msk [vmem:[%s4 + $0x30] sm:$0xff] %vm2293, %v2250
  %2301 = vst.msk [vmem:[%s4 + $0x38] sm:$0xff] %vm2293, %v2251
  %2302 = vst.msk [vmem:[%s4 + $0x40] sm:$0xff] %vm2293, %v2252
  %2303 = vst.msk [vmem:[%s4 + $0x48] sm:$0xff] %vm2293, %v2253
  %2304 = vst.msk [vmem:[%s4 + $0x50] sm:$0xff] %vm2293, %v2254
  %2305 = vst.msk [vmem:[%s4 + $0x58] sm:$0xff] %vm2293, %v2255
  %2306 = vst.msk [vmem:[%s4 + $0x60] sm:$0xff] %vm2293, %v2256
  %2307 = vst.msk [vmem:[%s4 + $0x68] sm:$0xff] %vm2293, %v2257
  %2308 = vst.msk [vmem:[%s4 + $0x70] sm:$0xff] %vm2293, %v2258
  %2309 = vst.msk [vmem:[%s4 + $0x78] sm:$0xff] %vm2293, %v2259
  %2310 = vst.msk [vmem:[%s4 + $0x80] sm:$0xff] %vm2293, %v2260
  %2311 = vst.msk [vmem:[%s4 + $0x88] sm:$0xff] %vm2293, %v2261
  %2312 = vst.msk [vmem:[%s4 + $0x90] sm:$0xff] %vm2293, %v2262
  %2313 = vst.msk [vmem:[%s4 + $0x98] sm:$0xff] %vm2293, %v2263
  %2314 = vst.msk [vmem:[%s4 + $0xa0] sm:$0xff] %vm2293, %v2264
  %2315 = vst.msk [vmem:[%s4 + $0xa8] sm:$0xff] %vm2293, %v2265
  %2316 = vst.msk [vmem:[%s4 + $0xb0] sm:$0xff] %vm2293, %v2266
  %2317 = vst.msk [vmem:[%s4 + $0xb8] sm:$0xff] %vm2293, %v2267
  %2318 = vst.msk [vmem:[%s4 + $0xc0] sm:$0xff] %vm2293, %v2268
  %2319 = vst.msk [vmem:[%s4 + $0xc8] sm:$0xff] %vm2293, %v2269
  %2320 = vst.msk [vmem:[%s4 + $0xd0] sm:$0xff] %vm2293, %v2270
  %2321 = vst.msk [vmem:[%s4 + $0xd8] sm:$0xff] %vm2293, %v2271
  %2322 = vst.msk [vmem:[%s4 + $0xe0] sm:$0xff] %vm2293, %v2272
  %2323 = vst.msk [vmem:[%s4 + $0xe8] sm:$0xff] %vm2293, %v2273
  %2324 = vst.msk [vmem:[%s4 + $0xf0] sm:$0xff] %vm2293, %v2274
  %2325 = vst.msk [vmem:[%s4 + $0xf8] sm:$0xff] %vm2293, %v2275
  %2326 = vst.msk [vmem:[%s4 + $0x100] sm:$0xff] %vm2293, %v2276
  %2327 = vst.msk [vmem:[%s4 + $0x108] sm:$0xff] %vm2293, %v2277
  %2328 = vst.msk [vmem:[%s4 + $0x110] sm:$0xff] %vm2293, %v2278
  %2329 = vst.msk [vmem:[%s4 + $0x118] sm:$0xff] %vm2293, %v2279
  %2330 = vst.msk [vmem:[%s4 + $0x120] sm:$0xff] %vm2293, %v2280
  %2331 = vst.msk [vmem:[%s4 + $0x128] sm:$0xff] %vm2293, %v2281
  %2332 = vst.msk [vmem:[%s4 + $0x130] sm:$0xff] %vm2293, %v2282
  %2333 = vst.msk [vmem:[%s4 + $0x138] sm:$0xff] %vm2293, %v2283
  %2334 = vst.msk [vmem:[%s4 + $0x140] sm:$0xff] %vm2293, %v2284
  %2335 = vst.msk [vmem:[%s4 + $0x148] sm:$0xff] %vm2293, %v2285
  %2336 = vst.msk [vmem:[%s4 + $0x150] sm:$0xff] %vm2293, %v2286
  %2337 = vst.msk [vmem:[%s4 + $0x158] sm:$0xff] %vm2293, %v2287
  %2338 = vst.msk [vmem:[%s4 + $0x160] sm:$0xff] %vm2293, %v2288
  %2339 = vst.msk [vmem:[%s4 + $0x168] sm:$0xff] %vm2293, %v2289
  %2340 = vst.msk [vmem:[%s4 + $0x170] sm:$0xff] %vm2293, %v2290
  %2341 = vst.msk [vmem:[%s4 + $0x178] sm:$0xff] %vm2293, %v2291
  %2342 = vst.msk [vmem:[%s4 + $0x180] sm:$0xff] %vm2293, %v2292
  // Predicated region
  $region18: #{convnet_forward.3} parent=0 // pred_check
    _
  $region19: #{convnet_forward.3} parent=0 // pred_check_branch
    %2344 = sbr.rel (0) target = $region21
  $region20: #{convnet_forward.3} parent=0 // pred_region
    _
  $region21: #{convnet_forward.3} parent=0 // pred_fallthru
    _
  // Predicated region
  $region22: #{convnet_forward.3} parent=0 // pred_check
    _
  $region23: #{convnet_forward.3} parent=0 // pred_check_branch
    %2346 = sbr.rel (0) target = $region25
  $region24: #{convnet_forward.3} parent=0 // pred_region
    _
  $region25: #{convnet_forward.3} parent=0 // pred_fallthru
    _

// kernel: convnet_forward.4
$region0: #{convnet_forward.4}
  #allocation0 [shape = 'u32[]', space=smem, size = 0x4, offset = 0x4, fixed_abs, tag = 'smem constant byte address 0x4 - core index']
  #allocation1 [shape = 'u32[144,128]{1,0:T(1,128)}', space=vmem, size = 0x12000, scoped, tag = 'internal scratch']
  %s0 = inlined_call_operand.vmem [shape: bf16[4,104,400], index: 0, kind: input, shape index: {}]
  %s1 = inlined_call_operand.vmem [shape: bf16[400,32], index: 1, kind: input, shape index: {}]
  %s2 = inlined_call_operand.vmem [shape: f32[1,32], index: 2, kind: input, shape index: {}]
  %s3 = inlined_call_operand.vmem [shape: f32[1,32], index: 3, kind: input, shape index: {}]
  %s4 = inlined_call_operand.vmem [shape: f32[104,32], index: 4, kind: output, shape index: {}]
  %s5 = sld [smem:[#allocation0]]
  $region26: #{convnet_forward.4} parent=0
    _
  %s7 = ssub.s32 1, %s5
  %s8 = scalar_select 0, %s7, %s5
  // Predicated region
  $region2: #{convnet_forward.4} parent=0 // pred_check
    _
  $region3: #{convnet_forward.4} parent=0 // pred_check_branch
    %10 = sbr.rel (0) target = $region5
  $region4: #{convnet_forward.4} parent=0 // pred_region
    _
  $region5: #{convnet_forward.4} parent=0 // pred_fallthru
    _
  // Predicated region
  $region6: #{convnet_forward.4} parent=0 // pred_check
    _
  $region7: #{convnet_forward.4} parent=0 // pred_check_branch
    %12 = sbr.rel (0) target = $region9
  $region8: #{convnet_forward.4} parent=0 // pred_region
    _
  $region9: #{convnet_forward.4} parent=0 // pred_fallthru
    _
  // Predicated region
  $region10: #{convnet_forward.4} parent=0 // pred_check
    _
  $region11: #{convnet_forward.4} parent=0 // pred_check_branch
    %14 = sbr.rel (0) target = $region13
  $region12: #{convnet_forward.4} parent=0 // pred_region
    _
  $region13: #{convnet_forward.4} parent=0 // pred_fallthru
    _
  // Predicated region
  $region14: #{convnet_forward.4} parent=0 // pred_check
    _
  $region15: #{convnet_forward.4} parent=0 // pred_check_branch
    %16 = sbr.rel (0) target = $region17
  $region16: #{convnet_forward.4} parent=0 // pred_region
    _
  $region17: #{convnet_forward.4} parent=0 // pred_fallthru
    _
  %v18 = vld [vmem:[%s0] sm:$0xff]
  %v19 = vld [vmem:[%s0 + $0x8] sm:$0xff]
  %v20 = vld [vmem:[%s0 + $0x10] sm:$0xff]
  %v21 = vld [vmem:[%s0 + $0x18] sm:$0xff]
  %v22 = vld [vmem:[%s0 + $0x20] sm:$0xff]
  %v23 = vld [vmem:[%s0 + $0x28] sm:$0xff]
  %v24 = vld [vmem:[%s0 + $0x30] sm:$0xff]
  %v25 = vld [vmem:[%s0 + $0x38] sm:$0xff]
  %v26 = vld [vmem:[%s0 + $0x40] sm:$0xff]
  %v27 = vld [vmem:[%s0 + $0x48] sm:$0xff]
  %v28 = vld [vmem:[%s0 + $0x50] sm:$0xff]
  %v29 = vld [vmem:[%s0 + $0x58] sm:$0xff]
  %v30 = vld [vmem:[%s0 + $0x60] sm:$0xff]
  %v31 = vld [vmem:[%s0 + $0x68] sm:$0xff]
  %v32 = vld [vmem:[%s0 + $0x70] sm:$0xff]
  %v33 = vld [vmem:[%s0 + $0x78] sm:$0xff]
  %v34 = vld [vmem:[%s0 + $0x80] sm:$0xff]
  %v35 = vld [vmem:[%s0 + $0x88] sm:$0xff]
  %v36 = vld [vmem:[%s0 + $0x90] sm:$0xff]
  %v37 = vld [vmem:[%s0 + $0x98] sm:$0xff]
  %v38 = vld [vmem:[%s0 + $0xa0] sm:$0xff]
  %v39 = vld [vmem:[%s0 + $0xa8] sm:$0xff]
  %v40 = vld [vmem:[%s0 + $0xb0] sm:$0xff]
  %v41 = vld [vmem:[%s0 + $0xb8] sm:$0xff]
  %v42 = vld [vmem:[%s0 + $0xc0] sm:$0xff]
  %v43 = vld [vmem:[%s0 + $0xc8] sm:$0xff]
  %v44 = vld [vmem:[%s0 + $0xd0] sm:$0xff]
  %v45 = vld [vmem:[%s0 + $0xd8] sm:$0xff]
  %v46 = vld [vmem:[%s0 + $0xe0] sm:$0xff]
  %v47 = vld [vmem:[%s0 + $0xe8] sm:$0xff]
  %v48 = vld [vmem:[%s0 + $0xf0] sm:$0xff]
  %v49 = vld [vmem:[%s0 + $0xf8] sm:$0xff]
  %v50 = vld [vmem:[%s0 + $0x100] sm:$0xff]
  %v51 = vld [vmem:[%s0 + $0x108] sm:$0xff]
  %v52 = vld [vmem:[%s0 + $0x110] sm:$0xff]
  %v53 = vld [vmem:[%s0 + $0x118] sm:$0xff]
  %v54 = vld [vmem:[%s0 + $0x120] sm:$0xff]
  %v55 = vld [vmem:[%s0 + $0x128] sm:$0xff]
  %v56 = vld [vmem:[%s0 + $0x130] sm:$0xff]
  %v57 = vld [vmem:[%s0 + $0x138] sm:$0xff]
  %v58 = vld [vmem:[%s0 + $0x140] sm:$0xff]
  %v59 = vld [vmem:[%s0 + $0x148] sm:$0xff]
  %v60 = vld [vmem:[%s0 + $0x150] sm:$0xff]
  %v61 = vld [vmem:[%s0 + $0x158] sm:$0xff]
  %v62 = vld [vmem:[%s0 + $0x160] sm:$0xff]
  %v63 = vld [vmem:[%s0 + $0x168] sm:$0xff]
  %v64 = vld [vmem:[%s0 + $0x170] sm:$0xff]
  %v65 = vld [vmem:[%s0 + $0x178] sm:$0xff]
  %v66 = vld [vmem:[%s0 + $0x180] sm:$0xff]
  %v67 = vld [vmem:[%s0 + $0x188] sm:$0xff]
  %v68 = vld [vmem:[%s0 + $0x190] sm:$0xff]
  %v69 = vld [vmem:[%s0 + $0x198] sm:$0xff]
  %v70 = vld [vmem:[%s0 + $0x1a0] sm:$0xff]
  %v71 = vld [vmem:[%s0 + $0x1a8] sm:$0xff]
  %v72 = vld [vmem:[%s0 + $0x1b0] sm:$0xff]
  %v73 = vld [vmem:[%s0 + $0x1b8] sm:$0xff]
  %v74 = vld [vmem:[%s0 + $0x1c0] sm:$0xff]
  %v75 = vld [vmem:[%s0 + $0x1c8] sm:$0xff]
  %v76 = vld [vmem:[%s0 + $0x1d0] sm:$0xff]
  %v77 = vld [vmem:[%s0 + $0x1d8] sm:$0xff]
  %v78 = vld [vmem:[%s0 + $0x1e0] sm:$0xff]
  %v79 = vld [vmem:[%s0 + $0x1e8] sm:$0xff]
  %v80 = vld [vmem:[%s0 + $0x1f0] sm:$0xff]
  %v81 = vld [vmem:[%s0 + $0x1f8] sm:$0xff]
  %v82 = vld [vmem:[%s0 + $0x200] sm:$0xff]
  %v83 = vld [vmem:[%s0 + $0x208] sm:$0xff]
  %v84 = vld [vmem:[%s0 + $0x210] sm:$0xff]
  %v85 = vld [vmem:[%s0 + $0x218] sm:$0xff]
  %v86 = vld [vmem:[%s0 + $0x220] sm:$0xff]
  %v87 = vld [vmem:[%s0 + $0x228] sm:$0xff]
  %v88 = vld [vmem:[%s0 + $0x230] sm:$0xff]
  %v89 = vld [vmem:[%s0 + $0x238] sm:$0xff]
  %v90 = vld [vmem:[%s0 + $0x240] sm:$0xff]
  %v91 = vld [vmem:[%s0 + $0x248] sm:$0xff]
  %v92 = vld [vmem:[%s0 + $0x250] sm:$0xff]
  %v93 = vld [vmem:[%s0 + $0x258] sm:$0xff]
  %v94 = vld [vmem:[%s0 + $0x260] sm:$0xff]
  %v95 = vld [vmem:[%s0 + $0x268] sm:$0xff]
  %v96 = vld [vmem:[%s0 + $0x270] sm:$0xff]
  %v97 = vld [vmem:[%s0 + $0x278] sm:$0xff]
  %v98 = vld [vmem:[%s0 + $0x280] sm:$0xff]
  %v99 = vld [vmem:[%s0 + $0x288] sm:$0xff]
  %v100 = vld [vmem:[%s0 + $0x290] sm:$0xff]
  %v101 = vld [vmem:[%s0 + $0x298] sm:$0xff]
  %v102 = vld [vmem:[%s0 + $0x2a0] sm:$0xff]
  %v103 = vld [vmem:[%s0 + $0x2a8] sm:$0xff]
  %v104 = vld [vmem:[%s0 + $0x2b0] sm:$0xff]
  %v105 = vld [vmem:[%s0 + $0x2b8] sm:$0xff]
  %v106 = vld [vmem:[%s0 + $0x2c0] sm:$0xff]
  %v107 = vld [vmem:[%s0 + $0x2c8] sm:$0xff]
  %v108 = vld [vmem:[%s0 + $0x2d0] sm:$0xff]
  %v109 = vld [vmem:[%s0 + $0x2d8] sm:$0xff]
  %v110 = vld [vmem:[%s0 + $0x2e0] sm:$0xff]
  %v111 = vld [vmem:[%s0 + $0x2e8] sm:$0xff]
  %v112 = vld [vmem:[%s0 + $0x2f0] sm:$0xff]
  %v113 = vld [vmem:[%s0 + $0x2f8] sm:$0xff]
  %v114 = vld [vmem:[%s0 + $0x300] sm:$0xff]
  %v115 = vld [vmem:[%s0 + $0x308] sm:$0xff]
  %v116 = vld [vmem:[%s0 + $0x310] sm:$0xff]
  %v117 = vld [vmem:[%s0 + $0x318] sm:$0xff]
  %v118 = vld [vmem:[%s0 + $0x320] sm:$0xff]
  %v119 = vld [vmem:[%s0 + $0x328] sm:$0xff]
  %v120 = vld [vmem:[%s0 + $0x330] sm:$0xff]
  %v121 = vld [vmem:[%s0 + $0x338] sm:$0xff]
  %v122 = vld [vmem:[%s1] sm:$0xf]
  %v123 = vld [vmem:[%s1 + $0x4] sm:$0xf]
  %v124 = vld [vmem:[%s1 + $0x8] sm:$0xf]
  %v125 = vld [vmem:[%s1 + $0xc] sm:$0xf]
  %v126 = vld [vmem:[%s1 + $0x10] sm:$0xf]
  %v127 = vld [vmem:[%s1 + $0x14] sm:$0xf]
  %v128 = vld [vmem:[%s1 + $0x18] sm:$0xf]
  %v129 = vld [vmem:[%s1 + $0x1c] sm:$0xf]
  %v130 = vld [vmem:[%s1 + $0x20] sm:$0xf]
  %v131 = vld [vmem:[%s1 + $0x24] sm:$0xf]
  %v132 = vld [vmem:[%s1 + $0x28] sm:$0xf]
  %v133 = vld [vmem:[%s1 + $0x2c] sm:$0xf]
  %v134 = vld [vmem:[%s1 + $0x30] sm:$0xf]
  %v135 = vld [vmem:[%s1 + $0x34] sm:$0xf]
  %v136 = vld [vmem:[%s1 + $0x38] sm:$0xf]
  %v137 = vld [vmem:[%s1 + $0x3c] sm:$0xf]
  %v138 = vld [vmem:[%s1 + $0x40] sm:$0xf]
  %v139 = vld [vmem:[%s1 + $0x44] sm:$0xf]
  %v140 = vld [vmem:[%s1 + $0x48] sm:$0xf]
  %v141 = vld [vmem:[%s1 + $0x4c] sm:$0xf]
  %v142 = vld [vmem:[%s1 + $0x50] sm:$0xf]
  %v143 = vld [vmem:[%s1 + $0x54] sm:$0xf]
  %v144 = vld [vmem:[%s1 + $0x58] sm:$0xf]
  %v145 = vld [vmem:[%s1 + $0x5c] sm:$0xf]
  %v146 = vld [vmem:[%s1 + $0x60] sm:$0xf]
  %v147 = vld [vmem:[%s1 + $0x64] sm:$0xf]
  %v148 = vld [vmem:[%s1 + $0x68] sm:$0xf]
  %v149 = vld [vmem:[%s1 + $0x6c] sm:$0xf]
  %v150 = vld [vmem:[%s1 + $0x70] sm:$0xf]
  %v151 = vld [vmem:[%s1 + $0x74] sm:$0xf]
  %v152 = vld [vmem:[%s1 + $0x78] sm:$0xf]
  %v153 = vld [vmem:[%s1 + $0x7c] sm:$0xf]
  %v154 = vld [vmem:[%s1 + $0x80] sm:$0xf]
  %v155 = vld [vmem:[%s1 + $0x84] sm:$0xf]
  %v156 = vld [vmem:[%s1 + $0x88] sm:$0xf]
  %v157 = vld [vmem:[%s1 + $0x8c] sm:$0xf]
  %v158 = vld [vmem:[%s1 + $0x90] sm:$0xf]
  %v159 = vld [vmem:[%s1 + $0x94] sm:$0xf]
  %v160 = vld [vmem:[%s1 + $0x98] sm:$0xf]
  %v161 = vld [vmem:[%s1 + $0x9c] sm:$0xf]
  %v162 = vld [vmem:[%s1 + $0xa0] sm:$0xf]
  %v163 = vld [vmem:[%s1 + $0xa4] sm:$0xf]
  %v164 = vld [vmem:[%s1 + $0xa8] sm:$0xf]
  %v165 = vld [vmem:[%s1 + $0xac] sm:$0xf]
  %v166 = vld [vmem:[%s1 + $0xb0] sm:$0xf]
  %v167 = vld [vmem:[%s1 + $0xb4] sm:$0xf]
  %v168 = vld [vmem:[%s1 + $0xb8] sm:$0xf]
  %v169 = vld [vmem:[%s1 + $0xbc] sm:$0xf]
  %v170 = vld [vmem:[%s1 + $0xc0] sm:$0xf]
  %v171 = vld [vmem:[%s1 + $0xc4] sm:$0xf]
  %v276 = vunpack.c.l.b16 %v18
  %v277 = vunpack.c.h.b16 %v18
  %v278 = vunpack.c.l.b16 %v19
  %v279 = vunpack.c.h.b16 %v19
  %v280 = vunpack.c.l.b16 %v20
  %v281 = vunpack.c.h.b16 %v20
  %v282 = vunpack.c.l.b16 %v21
  %v283 = vunpack.c.h.b16 %v21
  %v284 = vunpack.c.l.b16 %v22
  %v285 = vunpack.c.h.b16 %v22
  %v286 = vunpack.c.l.b16 %v23
  %v287 = vunpack.c.h.b16 %v23
  %v288 = vunpack.c.l.b16 %v24
  %v289 = vunpack.c.h.b16 %v24
  %v290 = vunpack.c.l.b16 %v25
  %v291 = vunpack.c.h.b16 %v25
  %v292 = vunpack.c.l.b16 %v26
  %v293 = vunpack.c.h.b16 %v26
  %v294 = vunpack.c.l.b16 %v27
  %v295 = vunpack.c.h.b16 %v27
  %v296 = vunpack.c.l.b16 %v28
  %v297 = vunpack.c.h.b16 %v28
  %v298 = vunpack.c.l.b16 %v29
  %v299 = vunpack.c.h.b16 %v29
  %v300 = vunpack.c.l.b16 %v30
  %v301 = vunpack.c.h.b16 %v30
  %v302 = vunpack.c.l.b16 %v31
  %v303 = vunpack.c.h.b16 %v31
  %v304 = vunpack.c.l.b16 %v32
  %v305 = vunpack.c.h.b16 %v32
  %v306 = vunpack.c.l.b16 %v33
  %v307 = vunpack.c.h.b16 %v33
  %v308 = vunpack.c.l.b16 %v34
  %v309 = vunpack.c.h.b16 %v34
  %v310 = vunpack.c.l.b16 %v35
  %v311 = vunpack.c.h.b16 %v35
  %v312 = vunpack.c.l.b16 %v36
  %v313 = vunpack.c.h.b16 %v36
  %v314 = vunpack.c.l.b16 %v37
  %v315 = vunpack.c.h.b16 %v37
  %v316 = vunpack.c.l.b16 %v38
  %v317 = vunpack.c.h.b16 %v38
  %v318 = vunpack.c.l.b16 %v39
  %v319 = vunpack.c.h.b16 %v39
  %v320 = vunpack.c.l.b16 %v40
  %v321 = vunpack.c.h.b16 %v40
  %v322 = vunpack.c.l.b16 %v41
  %v323 = vunpack.c.h.b16 %v41
  %v324 = vunpack.c.l.b16 %v42
  %v325 = vunpack.c.h.b16 %v42
  %v326 = vunpack.c.l.b16 %v43
  %v327 = vunpack.c.h.b16 %v43
  %v328 = vunpack.c.l.b16 %v44
  %v329 = vunpack.c.h.b16 %v44
  %v330 = vunpack.c.l.b16 %v45
  %v331 = vunpack.c.h.b16 %v45
  %v332 = vunpack.c.l.b16 %v46
  %v333 = vunpack.c.h.b16 %v46
  %v334 = vunpack.c.l.b16 %v47
  %v335 = vunpack.c.h.b16 %v47
  %v336 = vunpack.c.l.b16 %v48
  %v337 = vunpack.c.h.b16 %v48
  %v338 = vunpack.c.l.b16 %v49
  %v339 = vunpack.c.h.b16 %v49
  %v340 = vunpack.c.l.b16 %v50
  %v341 = vunpack.c.h.b16 %v50
  %v342 = vunpack.c.l.b16 %v51
  %v343 = vunpack.c.h.b16 %v51
  %v344 = vunpack.c.l.b16 %v52
  %v345 = vunpack.c.h.b16 %v52
  %v346 = vunpack.c.l.b16 %v53
  %v347 = vunpack.c.h.b16 %v53
  %v348 = vunpack.c.l.b16 %v54
  %v349 = vunpack.c.h.b16 %v54
  %v350 = vunpack.c.l.b16 %v55
  %v351 = vunpack.c.h.b16 %v55
  %v352 = vunpack.c.l.b16 %v56
  %v353 = vunpack.c.h.b16 %v56
  %v354 = vunpack.c.l.b16 %v57
  %v355 = vunpack.c.h.b16 %v57
  %v356 = vunpack.c.l.b16 %v58
  %v357 = vunpack.c.h.b16 %v58
  %v358 = vunpack.c.l.b16 %v59
  %v359 = vunpack.c.h.b16 %v59
  %v360 = vunpack.c.l.b16 %v60
  %v361 = vunpack.c.h.b16 %v60
  %v362 = vunpack.c.l.b16 %v61
  %v363 = vunpack.c.h.b16 %v61
  %v364 = vunpack.c.l.b16 %v62
  %v365 = vunpack.c.h.b16 %v62
  %v366 = vunpack.c.l.b16 %v63
  %v367 = vunpack.c.h.b16 %v63
  %v368 = vunpack.c.l.b16 %v64
  %v369 = vunpack.c.h.b16 %v64
  %v370 = vunpack.c.l.b16 %v65
  %v371 = vunpack.c.h.b16 %v65
  %v372 = vunpack.c.l.b16 %v66
  %v373 = vunpack.c.h.b16 %v66
  %v374 = vunpack.c.l.b16 %v67
  %v375 = vunpack.c.h.b16 %v67
  %v376 = vunpack.c.l.b16 %v68
  %v377 = vunpack.c.h.b16 %v68
  %v378 = vunpack.c.l.b16 %v69
  %v379 = vunpack.c.h.b16 %v69
  %v380 = vunpack.c.l.b16 %v70
  %v381 = vunpack.c.h.b16 %v70
  %v382 = vunpack.c.l.b16 %v71
  %v383 = vunpack.c.h.b16 %v71
  %v384 = vunpack.c.l.b16 %v72
  %v385 = vunpack.c.h.b16 %v72
  %v386 = vunpack.c.l.b16 %v73
  %v387 = vunpack.c.h.b16 %v73
  %v388 = vunpack.c.l.b16 %v74
  %v389 = vunpack.c.h.b16 %v74
  %v390 = vunpack.c.l.b16 %v75
  %v391 = vunpack.c.h.b16 %v75
  %v392 = vunpack.c.l.b16 %v76
  %v393 = vunpack.c.h.b16 %v76
  %v394 = vunpack.c.l.b16 %v77
  %v395 = vunpack.c.h.b16 %v77
  %v396 = vunpack.c.l.b16 %v78
  %v397 = vunpack.c.h.b16 %v78
  %v398 = vunpack.c.l.b16 %v79
  %v399 = vunpack.c.h.b16 %v79
  %v400 = vunpack.c.l.b16 %v80
  %v401 = vunpack.c.h.b16 %v80
  %v402 = vunpack.c.l.b16 %v81
  %v403 = vunpack.c.h.b16 %v81
  %v404 = vunpack.c.l.b16 %v82
  %v405 = vunpack.c.h.b16 %v82
  %v406 = vunpack.c.l.b16 %v83
  %v407 = vunpack.c.h.b16 %v83
  %v408 = vunpack.c.l.b16 %v84
  %v409 = vunpack.c.h.b16 %v84
  %v410 = vunpack.c.l.b16 %v85
  %v411 = vunpack.c.h.b16 %v85
  %v412 = vunpack.c.l.b16 %v86
  %v413 = vunpack.c.h.b16 %v86
  %v414 = vunpack.c.l.b16 %v87
  %v415 = vunpack.c.h.b16 %v87
  %v416 = vunpack.c.l.b16 %v88
  %v417 = vunpack.c.h.b16 %v88
  %v418 = vunpack.c.l.b16 %v89
  %v419 = vunpack.c.h.b16 %v89
  %v420 = vunpack.c.l.b16 %v90
  %v421 = vunpack.c.h.b16 %v90
  %v422 = vunpack.c.l.b16 %v91
  %v423 = vunpack.c.h.b16 %v91
  %v424 = vunpack.c.l.b16 %v92
  %v425 = vunpack.c.h.b16 %v92
  %v426 = vunpack.c.l.b16 %v93
  %v427 = vunpack.c.h.b16 %v93
  %v428 = vunpack.c.l.b16 %v94
  %v429 = vunpack.c.h.b16 %v94
  %v430 = vunpack.c.l.b16 %v95
  %v431 = vunpack.c.h.b16 %v95
  %v432 = vunpack.c.l.b16 %v96
  %v433 = vunpack.c.h.b16 %v96
  %v434 = vunpack.c.l.b16 %v97
  %v435 = vunpack.c.h.b16 %v97
  %v436 = vunpack.c.l.b16 %v98
  %v437 = vunpack.c.h.b16 %v98
  %v438 = vunpack.c.l.b16 %v99
  %v439 = vunpack.c.h.b16 %v99
  %v440 = vunpack.c.l.b16 %v100
  %v441 = vunpack.c.h.b16 %v100
  %v442 = vunpack.c.l.b16 %v101
  %v443 = vunpack.c.h.b16 %v101
  %v444 = vunpack.c.l.b16 %v102
  %v445 = vunpack.c.h.b16 %v102
  %v446 = vunpack.c.l.b16 %v103
  %v447 = vunpack.c.h.b16 %v103
  %v448 = vunpack.c.l.b16 %v104
  %v449 = vunpack.c.h.b16 %v104
  %v450 = vunpack.c.l.b16 %v105
  %v451 = vunpack.c.h.b16 %v105
  %v452 = vunpack.c.l.b16 %v106
  %v453 = vunpack.c.h.b16 %v106
  %v454 = vunpack.c.l.b16 %v107
  %v455 = vunpack.c.h.b16 %v107
  %v456 = vunpack.c.l.b16 %v108
  %v457 = vunpack.c.h.b16 %v108
  %v458 = vunpack.c.l.b16 %v109
  %v459 = vunpack.c.h.b16 %v109
  %v460 = vunpack.c.l.b16 %v110
  %v461 = vunpack.c.h.b16 %v110
  %v462 = vunpack.c.l.b16 %v111
  %v463 = vunpack.c.h.b16 %v111
  %v464 = vunpack.c.l.b16 %v112
  %v465 = vunpack.c.h.b16 %v112
  %v466 = vunpack.c.l.b16 %v113
  %v467 = vunpack.c.h.b16 %v113
  %v468 = vunpack.c.l.b16 %v114
  %v469 = vunpack.c.h.b16 %v114
  %v470 = vunpack.c.l.b16 %v115
  %v471 = vunpack.c.h.b16 %v115
  %v472 = vunpack.c.l.b16 %v116
  %v473 = vunpack.c.h.b16 %v116
  %v474 = vunpack.c.l.b16 %v117
  %v475 = vunpack.c.h.b16 %v117
  %v476 = vunpack.c.l.b16 %v118
  %v477 = vunpack.c.h.b16 %v118
  %v478 = vunpack.c.l.b16 %v119
  %v479 = vunpack.c.h.b16 %v119
  %v480 = vunpack.c.l.b16 %v120
  %v481 = vunpack.c.h.b16 %v120
  %v482 = vunpack.c.l.b16 %v121
  %v483 = vunpack.c.h.b16 %v121
  %v484 = vpack.c.b16 %v280, %v276
  %v485 = vpack.c.b16 %v281, %v277
  %v486 = vpack.c.b16 %v282, %v278
  %v487 = vpack.c.b16 %v283, %v279
  %v488 = vpack.c.b16 %v288, %v284
  %v489 = vpack.c.b16 %v289, %v285
  %v490 = vpack.c.b16 %v290, %v286
  %v491 = vpack.c.b16 %v291, %v287
  %v492 = vpack.c.b16 %v296, %v292
  %v493 = vpack.c.b16 %v297, %v293
  %v494 = vpack.c.b16 %v298, %v294
  %v495 = vpack.c.b16 %v299, %v295
  %v496 = vpack.c.b16 %v304, %v300
  %v497 = vpack.c.b16 %v305, %v301
  %v498 = vpack.c.b16 %v306, %v302
  %v499 = vpack.c.b16 %v307, %v303
  %v500 = vpack.c.b16 %v312, %v308
  %v501 = vpack.c.b16 %v313, %v309
  %v502 = vpack.c.b16 %v314, %v310
  %v503 = vpack.c.b16 %v315, %v311
  %v504 = vpack.c.b16 %v320, %v316
  %v505 = vpack.c.b16 %v321, %v317
  %v506 = vpack.c.b16 %v322, %v318
  %v507 = vpack.c.b16 %v323, %v319
  %v508 = vpack.c.b16 %v328, %v324
  %v509 = vpack.c.b16 %v329, %v325
  %v510 = vpack.c.b16 %v330, %v326
  %v511 = vpack.c.b16 %v331, %v327
  %v512 = vpack.c.b16 %v336, %v332
  %v513 = vpack.c.b16 %v337, %v333
  %v514 = vpack.c.b16 %v338, %v334
  %v515 = vpack.c.b16 %v339, %v335
  %v516 = vpack.c.b16 %v344, %v340
  %v517 = vpack.c.b16 %v345, %v341
  %v518 = vpack.c.b16 %v346, %v342
  %v519 = vpack.c.b16 %v347, %v343
  %v520 = vpack.c.b16 %v352, %v348
  %v521 = vpack.c.b16 %v353, %v349
  %v522 = vpack.c.b16 %v354, %v350
  %v523 = vpack.c.b16 %v355, %v351
  %v524 = vpack.c.b16 %v360, %v356
  %v525 = vpack.c.b16 %v361, %v357
  %v526 = vpack.c.b16 %v362, %v358
  %v527 = vpack.c.b16 %v363, %v359
  %v528 = vpack.c.b16 %v368, %v364
  %v529 = vpack.c.b16 %v369, %v365
  %v530 = vpack.c.b16 %v370, %v366
  %v531 = vpack.c.b16 %v371, %v367
  %v532 = vpack.c.b16 %v376, %v372
  %v533 = vpack.c.b16 %v377, %v373
  %v534 = vpack.c.b16 %v378, %v374
  %v535 = vpack.c.b16 %v379, %v375
  %v536 = vpack.c.b16 %v384, %v380
  %v537 = vpack.c.b16 %v385, %v381
  %v538 = vpack.c.b16 %v386, %v382
  %v539 = vpack.c.b16 %v387, %v383
  %v540 = vpack.c.b16 %v392, %v388
  %v541 = vpack.c.b16 %v393, %v389
  %v542 = vpack.c.b16 %v394, %v390
  %v543 = vpack.c.b16 %v395, %v391
  %v544 = vpack.c.b16 %v400, %v396
  %v545 = vpack.c.b16 %v401, %v397
  %v546 = vpack.c.b16 %v402, %v398
  %v547 = vpack.c.b16 %v403, %v399
  %v548 = vpack.c.b16 %v408, %v404
  %v549 = vpack.c.b16 %v409, %v405
  %v550 = vpack.c.b16 %v410, %v406
  %v551 = vpack.c.b16 %v411, %v407
  %v552 = vpack.c.b16 %v416, %v412
  %v553 = vpack.c.b16 %v417, %v413
  %v554 = vpack.c.b16 %v418, %v414
  %v555 = vpack.c.b16 %v419, %v415
  %v556 = vpack.c.b16 %v424, %v420
  %v557 = vpack.c.b16 %v425, %v421
  %v558 = vpack.c.b16 %v426, %v422
  %v559 = vpack.c.b16 %v427, %v423
  %v560 = vpack.c.b16 %v432, %v428
  %v561 = vpack.c.b16 %v433, %v429
  %v562 = vpack.c.b16 %v434, %v430
  %v563 = vpack.c.b16 %v435, %v431
  %v564 = vpack.c.b16 %v440, %v436
  %v565 = vpack.c.b16 %v441, %v437
  %v566 = vpack.c.b16 %v442, %v438
  %v567 = vpack.c.b16 %v443, %v439
  %v568 = vpack.c.b16 %v448, %v444
  %v569 = vpack.c.b16 %v449, %v445
  %v570 = vpack.c.b16 %v450, %v446
  %v571 = vpack.c.b16 %v451, %v447
  %v572 = vpack.c.b16 %v456, %v452
  %v573 = vpack.c.b16 %v457, %v453
  %v574 = vpack.c.b16 %v458, %v454
  %v575 = vpack.c.b16 %v459, %v455
  %v576 = vpack.c.b16 %v464, %v460
  %v577 = vpack.c.b16 %v465, %v461
  %v578 = vpack.c.b16 %v466, %v462
  %v579 = vpack.c.b16 %v467, %v463
  %v580 = vpack.c.b16 %v472, %v468
  %v581 = vpack.c.b16 %v473, %v469
  %v582 = vpack.c.b16 %v474, %v470
  %v583 = vpack.c.b16 %v475, %v471
  %v584 = vpack.c.b16 %v480, %v476
  %v585 = vpack.c.b16 %v481, %v477
  %v586 = vpack.c.b16 %v482, %v478
  %v587 = vpack.c.b16 %v483, %v479
  %v716 = vunpack.c.l.b16 %v122
  %v717 = vunpack.c.l.b16 %v123
  %v718 = vunpack.c.l.b16 %v124
  %v719 = vunpack.c.l.b16 %v125
  %v720 = vunpack.c.l.b16 %v126
  %v721 = vunpack.c.l.b16 %v127
  %v722 = vunpack.c.l.b16 %v128
  %v723 = vunpack.c.l.b16 %v129
  %v724 = vunpack.c.l.b16 %v130
  %v725 = vunpack.c.l.b16 %v131
  %v726 = vunpack.c.l.b16 %v132
  %v727 = vunpack.c.l.b16 %v133
  %v728 = vunpack.c.l.b16 %v134
  %v729 = vunpack.c.l.b16 %v135
  %v730 = vunpack.c.l.b16 %v136
  %v731 = vunpack.c.l.b16 %v137
  %v732 = vunpack.c.l.b16 %v138
  %v733 = vunpack.c.l.b16 %v139
  %v734 = vunpack.c.l.b16 %v140
  %v735 = vunpack.c.l.b16 %v141
  %v736 = vunpack.c.l.b16 %v142
  %v737 = vunpack.c.l.b16 %v143
  %v738 = vunpack.c.l.b16 %v144
  %v739 = vunpack.c.l.b16 %v145
  %v740 = vunpack.c.l.b16 %v146
  %v741 = vunpack.c.l.b16 %v147
  %v742 = vunpack.c.l.b16 %v148
  %v743 = vunpack.c.l.b16 %v149
  %v744 = vunpack.c.l.b16 %v150
  %v745 = vunpack.c.l.b16 %v151
  %v746 = vunpack.c.l.b16 %v152
  %v747 = vunpack.c.l.b16 %v153
  %v748 = vunpack.c.l.b16 %v154
  %v749 = vunpack.c.l.b16 %v155
  %v750 = vunpack.c.l.b16 %v156
  %v751 = vunpack.c.l.b16 %v157
  %v752 = vunpack.c.l.b16 %v158
  %v753 = vunpack.c.l.b16 %v159
  %v754 = vunpack.c.l.b16 %v160
  %v755 = vunpack.c.l.b16 %v161
  %v756 = vunpack.c.l.b16 %v162
  %v757 = vunpack.c.l.b16 %v163
  %v758 = vunpack.c.l.b16 %v164
  %v759 = vunpack.c.l.b16 %v165
  %v760 = vunpack.c.l.b16 %v166
  %v761 = vunpack.c.l.b16 %v167
  %v762 = vunpack.c.l.b16 %v168
  %v763 = vunpack.c.l.b16 %v169
  %v764 = vunpack.c.l.b16 %v170
  %v765 = vunpack.c.l.b16 %v171
  %v766 = vpack.c.b16 %v717, %v716
  %v767 = vpack.c.b16 %v719, %v718
  %v768 = vpack.c.b16 %v721, %v720
  %v769 = vpack.c.b16 %v723, %v722
  %v770 = vpack.c.b16 %v725, %v724
  %v771 = vpack.c.b16 %v727, %v726
  %v772 = vpack.c.b16 %v729, %v728
  %v773 = vpack.c.b16 %v731, %v730
  %v774 = vpack.c.b16 %v733, %v732
  %v775 = vpack.c.b16 %v735, %v734
  %v776 = vpack.c.b16 %v737, %v736
  %v777 = vpack.c.b16 %v739, %v738
  %v778 = vpack.c.b16 %v741, %v740
  %v779 = vpack.c.b16 %v743, %v742
  %v780 = vpack.c.b16 %v745, %v744
  %v781 = vpack.c.b16 %v747, %v746
  %v782 = vpack.c.b16 %v749, %v748
  %v783 = vpack.c.b16 %v751, %v750
  %v784 = vpack.c.b16 %v753, %v752
  %v785 = vpack.c.b16 %v755, %v754
  %v786 = vpack.c.b16 %v757, %v756
  %v787 = vpack.c.b16 %v759, %v758
  %v788 = vpack.c.b16 %v761, %v760
  %v789 = vpack.c.b16 %v763, %v762
  %v790 = vpack.c.b16 %v765, %v764
  %vm816 = vcmask 130048
  %v818 = vsel %vm816, %v487, 0
  %v821 = vsel %vm816, %v491, 0
  %v824 = vsel %vm816, %v495, 0
  %v827 = vsel %vm816, %v499, 0
  %v830 = vsel %vm816, %v503, 0
  %v833 = vsel %vm816, %v507, 0
  %v836 = vsel %vm816, %v511, 0
  %v839 = vsel %vm816, %v515, 0
  %v842 = vsel %vm816, %v519, 0
  %v845 = vsel %vm816, %v523, 0
  %v848 = vsel %vm816, %v527, 0
  %v851 = vsel %vm816, %v531, 0
  %v854 = vsel %vm816, %v535, 0
  %v857 = vsel %vm816, %v539, 0
  %v860 = vsel %vm816, %v543, 0
  %v863 = vsel %vm816, %v547, 0
  %v866 = vsel %vm816, %v551, 0
  %v869 = vsel %vm816, %v555, 0
  %v872 = vsel %vm816, %v559, 0
  %v875 = vsel %vm816, %v563, 0
  %v878 = vsel %vm816, %v567, 0
  %v881 = vsel %vm816, %v571, 0
  %v884 = vsel %vm816, %v575, 0
  %v887 = vsel %vm816, %v579, 0
  %v890 = vsel %vm816, %v583, 0
  %v893 = vsel %vm816, %v587, 0
  %895 = vmatprep.subr.bf16.mxu0 0
  %896 = vmatpush1.bf16.msra.mxu0 %v773
  %897 = vmatprep.subr.bf16.mxu0 0
  %898 = vmatpush1.bf16.msra.mxu0 %v772
  %899 = vmatprep.subr.bf16.mxu0 0
  %900 = vmatpush1.bf16.msra.mxu0 %v771
  %901 = vmatprep.subr.bf16.mxu0 0
  %902 = vmatpush1.bf16.msra.mxu0 %v770
  %903 = vmatprep.subr.bf16.mxu0 0
  %904 = vmatpush1.bf16.msra.mxu0 %v769
  %905 = vmatprep.subr.bf16.mxu0 0
  %906 = vmatpush1.bf16.msra.mxu0 %v768
  %907 = vmatprep.subr.bf16.mxu0 0
  %908 = vmatpush1.bf16.msra.mxu0 %v767
  %909 = vmatprep.subr.bf16.mxu0 0
  %910 = vmatpush1.bf16.msra.mxu0 %v766
  %911 = vmatprep.subr.bf16.mxu0 0
  %912 = vmatpush2.bf16.msra.mxu0 %v781
  %913 = vmatprep.subr.bf16.mxu0 0
  %914 = vmatpush2.bf16.msra.mxu0 %v780
  %915 = vmatprep.subr.bf16.mxu0 0
  %916 = vmatpush2.bf16.msra.mxu0 %v779
  %917 = vmatprep.subr.bf16.mxu0 0
  %918 = vmatpush2.bf16.msra.mxu0 %v778
  %919 = vmatprep.subr.bf16.mxu0 0
  %920 = vmatpush2.bf16.msra.mxu0 %v777
  %921 = vmatprep.subr.bf16.mxu0 0
  %922 = vmatpush2.bf16.msra.mxu0 %v776
  %923 = vmatprep.subr.bf16.mxu0 0
  %924 = vmatpush2.bf16.msra.mxu0 %v775
  %925 = vmatprep.subr.bf16.mxu0 0
  %926 = vmatpush2.bf16.msra.mxu0 %v774
  %927 = vmatprep.mubr.bf16.mxu0 %v485
  %928 = vmatmul.mubr.bf16.gmra.mxu0 %v484
  %v929 = vpop.f32.mrf.mxu0
  %v930 = vadd.f32 0.0, %v929
  %v931 = vpop.f32.mrf.mxu0
  %v932 = vpop.f32.mrf.mxu0
  %v933 = vadd.f32 0.0, %v932
  %v934 = vpop.f32.mrf.mxu0
  %935 = vmatprep.mubr.bf16.mxu0 %v489
  %936 = vmatmul.mubr.bf16.gmra.mxu0 %v488
  %v937 = vpop.f32.mrf.mxu0
  %v938 = vadd.f32 0.0, %v937
  %v939 = vpop.f32.mrf.mxu0
  %v940 = vpop.f32.mrf.mxu0
  %v941 = vadd.f32 0.0, %v940
  %v942 = vpop.f32.mrf.mxu0
  %943 = vmatprep.mubr.bf16.mxu0 %v493
  %944 = vmatmul.mubr.bf16.gmra.mxu0 %v492
  %v945 = vpop.f32.mrf.mxu0
  %v946 = vadd.f32 0.0, %v945
  %v947 = vpop.f32.mrf.mxu0
  %v948 = vpop.f32.mrf.mxu0
  %v949 = vadd.f32 0.0, %v948
  %v950 = vpop.f32.mrf.mxu0
  %951 = vmatprep.mubr.bf16.mxu0 %v497
  %952 = vmatmul.mubr.bf16.gmra.mxu0 %v496
  %v953 = vpop.f32.mrf.mxu0
  %v954 = vadd.f32 0.0, %v953
  %v955 = vpop.f32.mrf.mxu0
  %v956 = vpop.f32.mrf.mxu0
  %v957 = vadd.f32 0.0, %v956
  %v958 = vpop.f32.mrf.mxu0
  %959 = vmatprep.mubr.bf16.mxu0 %v501
  %960 = vmatmul.mubr.bf16.gmra.mxu0 %v500
  %v961 = vpop.f32.mrf.mxu0
  %v962 = vadd.f32 0.0, %v961
  %v963 = vpop.f32.mrf.mxu0
  %v964 = vpop.f32.mrf.mxu0
  %v965 = vadd.f32 0.0, %v964
  %v966 = vpop.f32.mrf.mxu0
  %967 = vmatprep.mubr.bf16.mxu0 %v505
  %968 = vmatmul.mubr.bf16.gmra.mxu0 %v504
  %v969 = vpop.f32.mrf.mxu0
  %v970 = vadd.f32 0.0, %v969
  %v971 = vpop.f32.mrf.mxu0
  %v972 = vpop.f32.mrf.mxu0
  %v973 = vadd.f32 0.0, %v972
  %v974 = vpop.f32.mrf.mxu0
  %975 = vmatprep.mubr.bf16.mxu0 %v509
  %976 = vmatmul.mubr.bf16.gmra.mxu0 %v508
  %v977 = vpop.f32.mrf.mxu0
  %v978 = vadd.f32 0.0, %v977
  %v979 = vpop.f32.mrf.mxu0
  %v980 = vpop.f32.mrf.mxu0
  %v981 = vadd.f32 0.0, %v980
  %v982 = vpop.f32.mrf.mxu0
  %983 = vmatprep.mubr.bf16.mxu0 %v513
  %984 = vmatmul.mubr.bf16.gmra.mxu0 %v512
  %v985 = vpop.f32.mrf.mxu0
  %v986 = vadd.f32 0.0, %v985
  %v987 = vpop.f32.mrf.mxu0
  %v988 = vpop.f32.mrf.mxu0
  %v989 = vadd.f32 0.0, %v988
  %v990 = vpop.f32.mrf.mxu0
  %991 = vmatprep.mubr.bf16.mxu0 %v517
  %992 = vmatmul.mubr.bf16.gmra.mxu0 %v516
  %v993 = vpop.f32.mrf.mxu0
  %v994 = vadd.f32 0.0, %v993
  %v995 = vpop.f32.mrf.mxu0
  %v996 = vpop.f32.mrf.mxu0
  %v997 = vadd.f32 0.0, %v996
  %v998 = vpop.f32.mrf.mxu0
  %999 = vmatprep.mubr.bf16.mxu0 %v521
  %1000 = vmatmul.mubr.bf16.gmra.mxu0 %v520
  %v1001 = vpop.f32.mrf.mxu0
  %v1002 = vadd.f32 0.0, %v1001
  %v1003 = vpop.f32.mrf.mxu0
  %v1004 = vpop.f32.mrf.mxu0
  %v1005 = vadd.f32 0.0, %v1004
  %v1006 = vpop.f32.mrf.mxu0
  %1007 = vmatprep.mubr.bf16.mxu0 %v525
  %1008 = vmatmul.mubr.bf16.gmra.mxu0 %v524
  %v1009 = vpop.f32.mrf.mxu0
  %v1010 = vadd.f32 0.0, %v1009
  %v1011 = vpop.f32.mrf.mxu0
  %v1012 = vpop.f32.mrf.mxu0
  %v1013 = vadd.f32 0.0, %v1012
  %v1014 = vpop.f32.mrf.mxu0
  %1015 = vmatprep.mubr.bf16.mxu0 %v529
  %1016 = vmatmul.mubr.bf16.gmra.mxu0 %v528
  %v1017 = vpop.f32.mrf.mxu0
  %v1018 = vadd.f32 0.0, %v1017
  %v1019 = vpop.f32.mrf.mxu0
  %v1020 = vpop.f32.mrf.mxu0
  %v1021 = vadd.f32 0.0, %v1020
  %v1022 = vpop.f32.mrf.mxu0
  %1023 = vmatprep.mubr.bf16.mxu0 %v533
  %1024 = vmatmul.mubr.bf16.gmra.mxu0 %v532
  %v1025 = vpop.f32.mrf.mxu0
  %v1026 = vadd.f32 0.0, %v1025
  %v1027 = vpop.f32.mrf.mxu0
  %v1028 = vpop.f32.mrf.mxu0
  %v1029 = vadd.f32 0.0, %v1028
  %v1030 = vpop.f32.mrf.mxu0
  %1031 = vmatprep.mubr.bf16.mxu0 %v537
  %1032 = vmatmul.mubr.bf16.gmra.mxu0 %v536
  %v1033 = vpop.f32.mrf.mxu0
  %v1034 = vadd.f32 0.0, %v1033
  %v1035 = vpop.f32.mrf.mxu0
  %v1036 = vpop.f32.mrf.mxu0
  %v1037 = vadd.f32 0.0, %v1036
  %v1038 = vpop.f32.mrf.mxu0
  %1039 = vmatprep.mubr.bf16.mxu0 %v541
  %1040 = vmatmul.mubr.bf16.gmra.mxu0 %v540
  %v1041 = vpop.f32.mrf.mxu0
  %v1042 = vadd.f32 0.0, %v1041
  %v1043 = vpop.f32.mrf.mxu0
  %v1044 = vpop.f32.mrf.mxu0
  %v1045 = vadd.f32 0.0, %v1044
  %v1046 = vpop.f32.mrf.mxu0
  %1047 = vmatprep.mubr.bf16.mxu0 %v545
  %1048 = vmatmul.mubr.bf16.gmra.mxu0 %v544
  %v1049 = vpop.f32.mrf.mxu0
  %v1050 = vadd.f32 0.0, %v1049
  %v1051 = vpop.f32.mrf.mxu0
  %v1052 = vpop.f32.mrf.mxu0
  %v1053 = vadd.f32 0.0, %v1052
  %v1054 = vpop.f32.mrf.mxu0
  %1055 = vmatprep.mubr.bf16.mxu0 %v549
  %1056 = vmatmul.mubr.bf16.gmra.mxu0 %v548
  %v1057 = vpop.f32.mrf.mxu0
  %v1058 = vadd.f32 0.0, %v1057
  %v1059 = vpop.f32.mrf.mxu0
  %v1060 = vpop.f32.mrf.mxu0
  %v1061 = vadd.f32 0.0, %v1060
  %v1062 = vpop.f32.mrf.mxu0
  %1063 = vmatprep.mubr.bf16.mxu0 %v553
  %1064 = vmatmul.mubr.bf16.gmra.mxu0 %v552
  %v1065 = vpop.f32.mrf.mxu0
  %v1066 = vadd.f32 0.0, %v1065
  %v1067 = vpop.f32.mrf.mxu0
  %v1068 = vpop.f32.mrf.mxu0
  %v1069 = vadd.f32 0.0, %v1068
  %v1070 = vpop.f32.mrf.mxu0
  %1071 = vmatprep.mubr.bf16.mxu0 %v557
  %1072 = vmatmul.mubr.bf16.gmra.mxu0 %v556
  %v1073 = vpop.f32.mrf.mxu0
  %v1074 = vadd.f32 0.0, %v1073
  %v1075 = vpop.f32.mrf.mxu0
  %v1076 = vpop.f32.mrf.mxu0
  %v1077 = vadd.f32 0.0, %v1076
  %v1078 = vpop.f32.mrf.mxu0
  %1079 = vmatprep.mubr.bf16.mxu0 %v561
  %1080 = vmatmul.mubr.bf16.gmra.mxu0 %v560
  %v1081 = vpop.f32.mrf.mxu0
  %v1082 = vadd.f32 0.0, %v1081
  %v1083 = vpop.f32.mrf.mxu0
  %v1084 = vpop.f32.mrf.mxu0
  %v1085 = vadd.f32 0.0, %v1084
  %v1086 = vpop.f32.mrf.mxu0
  %1087 = vmatprep.mubr.bf16.mxu0 %v565
  %1088 = vmatmul.mubr.bf16.gmra.mxu0 %v564
  %v1089 = vpop.f32.mrf.mxu0
  %v1090 = vadd.f32 0.0, %v1089
  %v1091 = vpop.f32.mrf.mxu0
  %v1092 = vpop.f32.mrf.mxu0
  %v1093 = vadd.f32 0.0, %v1092
  %v1094 = vpop.f32.mrf.mxu0
  %1095 = vmatprep.mubr.bf16.mxu0 %v569
  %1096 = vmatmul.mubr.bf16.gmra.mxu0 %v568
  %v1097 = vpop.f32.mrf.mxu0
  %v1098 = vadd.f32 0.0, %v1097
  %v1099 = vpop.f32.mrf.mxu0
  %v1100 = vpop.f32.mrf.mxu0
  %v1101 = vadd.f32 0.0, %v1100
  %v1102 = vpop.f32.mrf.mxu0
  %1103 = vmatprep.mubr.bf16.mxu0 %v573
  %1104 = vmatmul.mubr.bf16.gmra.mxu0 %v572
  %v1105 = vpop.f32.mrf.mxu0
  %v1106 = vadd.f32 0.0, %v1105
  %v1107 = vpop.f32.mrf.mxu0
  %v1108 = vpop.f32.mrf.mxu0
  %v1109 = vadd.f32 0.0, %v1108
  %v1110 = vpop.f32.mrf.mxu0
  %1111 = vmatprep.mubr.bf16.mxu0 %v577
  %1112 = vmatmul.mubr.bf16.gmra.mxu0 %v576
  %v1113 = vpop.f32.mrf.mxu0
  %v1114 = vadd.f32 0.0, %v1113
  %v1115 = vpop.f32.mrf.mxu0
  %v1116 = vpop.f32.mrf.mxu0
  %v1117 = vadd.f32 0.0, %v1116
  %v1118 = vpop.f32.mrf.mxu0
  %1119 = vmatprep.mubr.bf16.mxu0 %v581
  %1120 = vmatmul.mubr.bf16.gmra.mxu0 %v580
  %v1121 = vpop.f32.mrf.mxu0
  %v1122 = vadd.f32 0.0, %v1121
  %v1123 = vpop.f32.mrf.mxu0
  %v1124 = vpop.f32.mrf.mxu0
  %v1125 = vadd.f32 0.0, %v1124
  %v1126 = vpop.f32.mrf.mxu0
  %1127 = vmatprep.mubr.bf16.mxu0 %v585
  %1128 = vmatmul.mubr.bf16.gmra.mxu0 %v584
  %v1129 = vpop.f32.mrf.mxu0
  %v1130 = vadd.f32 0.0, %v1129
  %v1131 = vpop.f32.mrf.mxu0
  %v1132 = vpop.f32.mrf.mxu0
  %v1133 = vadd.f32 0.0, %v1132
  %v1134 = vpop.f32.mrf.mxu0
  %1135 = vdwg.mxu0
  %1136 = vmatprep.subr.bf16.mxu0 0
  %1137 = vmatpush1.bf16.msra.mxu0 %v789
  %1138 = vmatprep.subr.bf16.mxu0 0
  %1139 = vmatpush1.bf16.msra.mxu0 %v788
  %1140 = vmatprep.subr.bf16.mxu0 0
  %1141 = vmatpush1.bf16.msra.mxu0 %v787
  %1142 = vmatprep.subr.bf16.mxu0 0
  %1143 = vmatpush1.bf16.msra.mxu0 %v786
  %1144 = vmatprep.subr.bf16.mxu0 0
  %1145 = vmatpush1.bf16.msra.mxu0 %v785
  %1146 = vmatprep.subr.bf16.mxu0 0
  %1147 = vmatpush1.bf16.msra.mxu0 %v784
  %1148 = vmatprep.subr.bf16.mxu0 0
  %1149 = vmatpush1.bf16.msra.mxu0 %v783
  %1150 = vmatprep.subr.bf16.mxu0 0
  %1151 = vmatpush1.bf16.msra.mxu0 %v782
  %1152 = vmatprep.subr.bf16.mxu0 0
  %1153 = vmatpush2.bf16.msra.mxu0 0
  %1154 = vmatprep.subr.bf16.mxu0 0
  %1155 = vmatpush2.bf16.msra.mxu0 0
  %1156 = vmatprep.subr.bf16.mxu0 0
  %1157 = vmatpush2.bf16.msra.mxu0 0
  %1158 = vmatprep.subr.bf16.mxu0 0
  %1159 = vmatpush2.bf16.msra.mxu0 0
  %1160 = vmatprep.subr.bf16.mxu0 0
  %1161 = vmatpush2.bf16.msra.mxu0 0
  %1162 = vmatprep.subr.bf16.mxu0 0
  %1163 = vmatpush2.bf16.msra.mxu0 0
  %1164 = vmatprep.subr.bf16.mxu0 0
  %1165 = vmatpush2.bf16.msra.mxu0 0
  %1166 = vmatprep.subr.bf16.mxu0 0
  %1167 = vmatpush2.bf16.msra.mxu0 %v790
  %1168 = vmatprep.mubr.bf16.mxu0 %v818
  %1169 = vmatmul.mubr.bf16.gmra.mxu0 %v486
  %v1170 = vpop.f32.mrf.mxu0
  %v1171 = vadd.f32 %v930, %v1170
  %v1172 = vpop.f32.mrf.mxu0
  %v1173 = vpop.f32.mrf.mxu0
  %v1174 = vadd.f32 %v933, %v1173
  %v1175 = vpop.f32.mrf.mxu0
  %1176 = vmatprep.mubr.bf16.mxu0 %v821
  %1177 = vmatmul.mubr.bf16.gmra.mxu0 %v490
  %v1178 = vpop.f32.mrf.mxu0
  %v1179 = vadd.f32 %v938, %v1178
  %v1180 = vpop.f32.mrf.mxu0
  %v1181 = vpop.f32.mrf.mxu0
  %v1182 = vadd.f32 %v941, %v1181
  %v1183 = vpop.f32.mrf.mxu0
  %1184 = vmatprep.mubr.bf16.mxu0 %v824
  %1185 = vmatmul.mubr.bf16.gmra.mxu0 %v494
  %v1186 = vpop.f32.mrf.mxu0
  %v1187 = vadd.f32 %v946, %v1186
  %v1188 = vpop.f32.mrf.mxu0
  %v1189 = vpop.f32.mrf.mxu0
  %v1190 = vadd.f32 %v949, %v1189
  %v1191 = vpop.f32.mrf.mxu0
  %1192 = vmatprep.mubr.bf16.mxu0 %v827
  %1193 = vmatmul.mubr.bf16.gmra.mxu0 %v498
  %v1194 = vpop.f32.mrf.mxu0
  %v1195 = vadd.f32 %v954, %v1194
  %v1196 = vpop.f32.mrf.mxu0
  %v1197 = vpop.f32.mrf.mxu0
  %v1198 = vadd.f32 %v957, %v1197
  %v1199 = vpop.f32.mrf.mxu0
  %1200 = vmatprep.mubr.bf16.mxu0 %v830
  %1201 = vmatmul.mubr.bf16.gmra.mxu0 %v502
  %v1202 = vpop.f32.mrf.mxu0
  %v1203 = vadd.f32 %v962, %v1202
  %v1204 = vpop.f32.mrf.mxu0
  %v1205 = vpop.f32.mrf.mxu0
  %v1206 = vadd.f32 %v965, %v1205
  %v1207 = vpop.f32.mrf.mxu0
  %1208 = vmatprep.mubr.bf16.mxu0 %v833
  %1209 = vmatmul.mubr.bf16.gmra.mxu0 %v506
  %v1210 = vpop.f32.mrf.mxu0
  %v1211 = vadd.f32 %v970, %v1210
  %v1212 = vpop.f32.mrf.mxu0
  %v1213 = vpop.f32.mrf.mxu0
  %v1214 = vadd.f32 %v973, %v1213
  %v1215 = vpop.f32.mrf.mxu0
  %1216 = vmatprep.mubr.bf16.mxu0 %v836
  %1217 = vmatmul.mubr.bf16.gmra.mxu0 %v510
  %v1218 = vpop.f32.mrf.mxu0
  %v1219 = vadd.f32 %v978, %v1218
  %v1220 = vpop.f32.mrf.mxu0
  %v1221 = vpop.f32.mrf.mxu0
  %v1222 = vadd.f32 %v981, %v1221
  %v1223 = vpop.f32.mrf.mxu0
  %1224 = vmatprep.mubr.bf16.mxu0 %v839
  %1225 = vmatmul.mubr.bf16.gmra.mxu0 %v514
  %v1226 = vpop.f32.mrf.mxu0
  %v1227 = vadd.f32 %v986, %v1226
  %v1228 = vpop.f32.mrf.mxu0
  %v1229 = vpop.f32.mrf.mxu0
  %v1230 = vadd.f32 %v989, %v1229
  %v1231 = vpop.f32.mrf.mxu0
  %1232 = vmatprep.mubr.bf16.mxu0 %v842
  %1233 = vmatmul.mubr.bf16.gmra.mxu0 %v518
  %v1234 = vpop.f32.mrf.mxu0
  %v1235 = vadd.f32 %v994, %v1234
  %v1236 = vpop.f32.mrf.mxu0
  %v1237 = vpop.f32.mrf.mxu0
  %v1238 = vadd.f32 %v997, %v1237
  %v1239 = vpop.f32.mrf.mxu0
  %1240 = vmatprep.mubr.bf16.mxu0 %v845
  %1241 = vmatmul.mubr.bf16.gmra.mxu0 %v522
  %v1242 = vpop.f32.mrf.mxu0
  %v1243 = vadd.f32 %v1002, %v1242
  %v1244 = vpop.f32.mrf.mxu0
  %v1245 = vpop.f32.mrf.mxu0
  %v1246 = vadd.f32 %v1005, %v1245
  %v1247 = vpop.f32.mrf.mxu0
  %1248 = vmatprep.mubr.bf16.mxu0 %v848
  %1249 = vmatmul.mubr.bf16.gmra.mxu0 %v526
  %v1250 = vpop.f32.mrf.mxu0
  %v1251 = vadd.f32 %v1010, %v1250
  %v1252 = vpop.f32.mrf.mxu0
  %v1253 = vpop.f32.mrf.mxu0
  %v1254 = vadd.f32 %v1013, %v1253
  %v1255 = vpop.f32.mrf.mxu0
  %1256 = vmatprep.mubr.bf16.mxu0 %v851
  %1257 = vmatmul.mubr.bf16.gmra.mxu0 %v530
  %v1258 = vpop.f32.mrf.mxu0
  %v1259 = vadd.f32 %v1018, %v1258
  %v1260 = vpop.f32.mrf.mxu0
  %v1261 = vpop.f32.mrf.mxu0
  %v1262 = vadd.f32 %v1021, %v1261
  %v1263 = vpop.f32.mrf.mxu0
  %1264 = vmatprep.mubr.bf16.mxu0 %v854
  %1265 = vmatmul.mubr.bf16.gmra.mxu0 %v534
  %v1266 = vpop.f32.mrf.mxu0
  %v1267 = vadd.f32 %v1026, %v1266
  %v1268 = vpop.f32.mrf.mxu0
  %v1269 = vpop.f32.mrf.mxu0
  %v1270 = vadd.f32 %v1029, %v1269
  %v1271 = vpop.f32.mrf.mxu0
  %1272 = vmatprep.mubr.bf16.mxu0 %v857
  %1273 = vmatmul.mubr.bf16.gmra.mxu0 %v538
  %v1274 = vpop.f32.mrf.mxu0
  %v1275 = vadd.f32 %v1034, %v1274
  %v1276 = vpop.f32.mrf.mxu0
  %v1277 = vpop.f32.mrf.mxu0
  %v1278 = vadd.f32 %v1037, %v1277
  %v1279 = vpop.f32.mrf.mxu0
  %1280 = vmatprep.mubr.bf16.mxu0 %v860
  %1281 = vmatmul.mubr.bf16.gmra.mxu0 %v542
  %v1282 = vpop.f32.mrf.mxu0
  %v1283 = vadd.f32 %v1042, %v1282
  %v1284 = vpop.f32.mrf.mxu0
  %v1285 = vpop.f32.mrf.mxu0
  %v1286 = vadd.f32 %v1045, %v1285
  %v1287 = vpop.f32.mrf.mxu0
  %1288 = vmatprep.mubr.bf16.mxu0 %v863
  %1289 = vmatmul.mubr.bf16.gmra.mxu0 %v546
  %v1290 = vpop.f32.mrf.mxu0
  %v1291 = vadd.f32 %v1050, %v1290
  %v1292 = vpop.f32.mrf.mxu0
  %v1293 = vpop.f32.mrf.mxu0
  %v1294 = vadd.f32 %v1053, %v1293
  %v1295 = vpop.f32.mrf.mxu0
  %1296 = vmatprep.mubr.bf16.mxu0 %v866
  %1297 = vmatmul.mubr.bf16.gmra.mxu0 %v550
  %v1298 = vpop.f32.mrf.mxu0
  %v1299 = vadd.f32 %v1058, %v1298
  %v1300 = vpop.f32.mrf.mxu0
  %v1301 = vpop.f32.mrf.mxu0
  %v1302 = vadd.f32 %v1061, %v1301
  %v1303 = vpop.f32.mrf.mxu0
  %1304 = vmatprep.mubr.bf16.mxu0 %v869
  %1305 = vmatmul.mubr.bf16.gmra.mxu0 %v554
  %v1306 = vpop.f32.mrf.mxu0
  %v1307 = vadd.f32 %v1066, %v1306
  %v1308 = vpop.f32.mrf.mxu0
  %v1309 = vpop.f32.mrf.mxu0
  %v1310 = vadd.f32 %v1069, %v1309
  %v1311 = vpop.f32.mrf.mxu0
  %1312 = vmatprep.mubr.bf16.mxu0 %v872
  %1313 = vmatmul.mubr.bf16.gmra.mxu0 %v558
  %v1314 = vpop.f32.mrf.mxu0
  %v1315 = vadd.f32 %v1074, %v1314
  %v1316 = vpop.f32.mrf.mxu0
  %v1317 = vpop.f32.mrf.mxu0
  %v1318 = vadd.f32 %v1077, %v1317
  %v1319 = vpop.f32.mrf.mxu0
  %1320 = vmatprep.mubr.bf16.mxu0 %v875
  %1321 = vmatmul.mubr.bf16.gmra.mxu0 %v562
  %v1322 = vpop.f32.mrf.mxu0
  %v1323 = vadd.f32 %v1082, %v1322
  %v1324 = vpop.f32.mrf.mxu0
  %v1325 = vpop.f32.mrf.mxu0
  %v1326 = vadd.f32 %v1085, %v1325
  %v1327 = vpop.f32.mrf.mxu0
  %1328 = vmatprep.mubr.bf16.mxu0 %v878
  %1329 = vmatmul.mubr.bf16.gmra.mxu0 %v566
  %v1330 = vpop.f32.mrf.mxu0
  %v1331 = vadd.f32 %v1090, %v1330
  %v1332 = vpop.f32.mrf.mxu0
  %v1333 = vpop.f32.mrf.mxu0
  %v1334 = vadd.f32 %v1093, %v1333
  %v1335 = vpop.f32.mrf.mxu0
  %1336 = vmatprep.mubr.bf16.mxu0 %v881
  %1337 = vmatmul.mubr.bf16.gmra.mxu0 %v570
  %v1338 = vpop.f32.mrf.mxu0
  %v1339 = vadd.f32 %v1098, %v1338
  %v1340 = vpop.f32.mrf.mxu0
  %v1341 = vpop.f32.mrf.mxu0
  %v1342 = vadd.f32 %v1101, %v1341
  %v1343 = vpop.f32.mrf.mxu0
  %1344 = vmatprep.mubr.bf16.mxu0 %v884
  %1345 = vmatmul.mubr.bf16.gmra.mxu0 %v574
  %v1346 = vpop.f32.mrf.mxu0
  %v1347 = vadd.f32 %v1106, %v1346
  %v1348 = vpop.f32.mrf.mxu0
  %v1349 = vpop.f32.mrf.mxu0
  %v1350 = vadd.f32 %v1109, %v1349
  %v1351 = vpop.f32.mrf.mxu0
  %1352 = vmatprep.mubr.bf16.mxu0 %v887
  %1353 = vmatmul.mubr.bf16.gmra.mxu0 %v578
  %v1354 = vpop.f32.mrf.mxu0
  %v1355 = vadd.f32 %v1114, %v1354
  %v1356 = vpop.f32.mrf.mxu0
  %v1357 = vpop.f32.mrf.mxu0
  %v1358 = vadd.f32 %v1117, %v1357
  %v1359 = vpop.f32.mrf.mxu0
  %1360 = vmatprep.mubr.bf16.mxu0 %v890
  %1361 = vmatmul.mubr.bf16.gmra.mxu0 %v582
  %v1362 = vpop.f32.mrf.mxu0
  %v1363 = vadd.f32 %v1122, %v1362
  %v1364 = vpop.f32.mrf.mxu0
  %v1365 = vpop.f32.mrf.mxu0
  %v1366 = vadd.f32 %v1125, %v1365
  %v1367 = vpop.f32.mrf.mxu0
  %1368 = vmatprep.mubr.bf16.mxu0 %v893
  %1369 = vmatmul.mubr.bf16.gmra.mxu0 %v586
  %v1370 = vpop.f32.mrf.mxu0
  %v1371 = vadd.f32 %v1130, %v1370
  %v1372 = vpop.f32.mrf.mxu0
  %v1373 = vpop.f32.mrf.mxu0
  %v1374 = vadd.f32 %v1133, %v1373
  %v1375 = vpop.f32.mrf.mxu0
  %1376 = vdwg.mxu0
  %v1377 = vld [vmem:[%s2] sm:$0x1]
  %v1379 = vlaneseq
  %v1380 = vshrl.u32 %v1379, 7
  %v1381 = vsub.s32 0, %v1380
  %v1382 = vrot.slane %v1377, %v1381
  %v1384 = vmul.f32 %v1171, %v1382
  %v1385 = vmul.f32 %v1174, %v1382
  %v1386 = vmul.f32 %v1179, %v1382
  %v1387 = vmul.f32 %v1182, %v1382
  %v1388 = vmul.f32 %v1187, %v1382
  %v1389 = vmul.f32 %v1190, %v1382
  %v1390 = vmul.f32 %v1195, %v1382
  %v1391 = vmul.f32 %v1198, %v1382
  %v1392 = vmul.f32 %v1203, %v1382
  %v1393 = vmul.f32 %v1206, %v1382
  %v1394 = vmul.f32 %v1211, %v1382
  %v1395 = vmul.f32 %v1214, %v1382
  %v1396 = vmul.f32 %v1219, %v1382
  %v1397 = vmul.f32 %v1222, %v1382
  %v1398 = vmul.f32 %v1227, %v1382
  %v1399 = vmul.f32 %v1230, %v1382
  %v1400 = vmul.f32 %v1235, %v1382
  %v1401 = vmul.f32 %v1238, %v1382
  %v1402 = vmul.f32 %v1243, %v1382
  %v1403 = vmul.f32 %v1246, %v1382
  %v1404 = vmul.f32 %v1251, %v1382
  %v1405 = vmul.f32 %v1254, %v1382
  %v1406 = vmul.f32 %v1259, %v1382
  %v1407 = vmul.f32 %v1262, %v1382
  %v1408 = vmul.f32 %v1267, %v1382
  %v1409 = vmul.f32 %v1270, %v1382
  %v1410 = vmul.f32 %v1275, %v1382
  %v1411 = vmul.f32 %v1278, %v1382
  %v1412 = vmul.f32 %v1283, %v1382
  %v1413 = vmul.f32 %v1286, %v1382
  %v1414 = vmul.f32 %v1291, %v1382
  %v1415 = vmul.f32 %v1294, %v1382
  %v1416 = vmul.f32 %v1299, %v1382
  %v1417 = vmul.f32 %v1302, %v1382
  %v1418 = vmul.f32 %v1307, %v1382
  %v1419 = vmul.f32 %v1310, %v1382
  %v1420 = vmul.f32 %v1315, %v1382
  %v1421 = vmul.f32 %v1318, %v1382
  %v1422 = vmul.f32 %v1323, %v1382
  %v1423 = vmul.f32 %v1326, %v1382
  %v1424 = vmul.f32 %v1331, %v1382
  %v1425 = vmul.f32 %v1334, %v1382
  %v1426 = vmul.f32 %v1339, %v1382
  %v1427 = vmul.f32 %v1342, %v1382
  %v1428 = vmul.f32 %v1347, %v1382
  %v1429 = vmul.f32 %v1350, %v1382
  %v1430 = vmul.f32 %v1355, %v1382
  %v1431 = vmul.f32 %v1358, %v1382
  %v1432 = vmul.f32 %v1363, %v1382
  %v1433 = vmul.f32 %v1366, %v1382
  %v1434 = vmul.f32 %v1371, %v1382
  %v1435 = vmul.f32 %v1374, %v1382
  %v1436 = vmax.f32 %v1384, %v1397
  %v1437 = vmax.f32 %v1385, %v1398
  %v1438 = vmax.f32 %v1386, %v1399
  %v1439 = vmax.f32 %v1387, %v1400
  %v1440 = vmax.f32 %v1388, %v1401
  %v1441 = vmax.f32 %v1389, %v1402
  %v1442 = vmax.f32 %v1390, %v1403
  %v1443 = vmax.f32 %v1391, %v1404
  %v1444 = vmax.f32 %v1392, %v1405
  %v1445 = vmax.f32 %v1393, %v1406
  %v1446 = vmax.f32 %v1394, %v1407
  %v1447 = vmax.f32 %v1395, %v1408
  %v1448 = vmax.f32 %v1396, %v1409
  %v1449 = vmax.f32 %v1410, %v1423
  %v1450 = vmax.f32 %v1411, %v1424
  %v1451 = vmax.f32 %v1412, %v1425
  %v1452 = vmax.f32 %v1413, %v1426
  %v1453 = vmax.f32 %v1414, %v1427
  %v1454 = vmax.f32 %v1415, %v1428
  %v1455 = vmax.f32 %v1416, %v1429
  %v1456 = vmax.f32 %v1417, %v1430
  %v1457 = vmax.f32 %v1418, %v1431
  %v1458 = vmax.f32 %v1419, %v1432
  %v1459 = vmax.f32 %v1420, %v1433
  %v1460 = vmax.f32 %v1421, %v1434
  %v1461 = vmax.f32 %v1422, %v1435
  %v1462 = vmax.f32 %v1436, %v1449
  %v1463 = vmax.f32 %v1437, %v1450
  %v1464 = vmax.f32 %v1438, %v1451
  %v1465 = vmax.f32 %v1439, %v1452
  %v1466 = vmax.f32 %v1440, %v1453
  %v1467 = vmax.f32 %v1441, %v1454
  %v1468 = vmax.f32 %v1442, %v1455
  %v1469 = vmax.f32 %v1443, %v1456
  %v1470 = vmax.f32 %v1444, %v1457
  %v1471 = vmax.f32 %v1445, %v1458
  %v1472 = vmax.f32 %v1446, %v1459
  %v1473 = vmax.f32 %v1447, %v1460
  %v1474 = vmax.f32 %v1448, %v1461
  %v1475 = vld [vmem:[%s3] sm:$0x1]
  %v1477 = vlaneseq
  %v1478 = vshrl.u32 %v1477, 7
  %v1479 = vsub.s32 0, %v1478
  %v1480 = vrot.slane %v1475, %v1479
  %v1482 = vadd.f32 %v1462, %v1480
  %v1483 = vadd.f32 %v1463, %v1480
  %v1484 = vadd.f32 %v1464, %v1480
  %v1485 = vadd.f32 %v1465, %v1480
  %v1486 = vadd.f32 %v1466, %v1480
  %v1487 = vadd.f32 %v1467, %v1480
  %v1488 = vadd.f32 %v1468, %v1480
  %v1489 = vadd.f32 %v1469, %v1480
  %v1490 = vadd.f32 %v1470, %v1480
  %v1491 = vadd.f32 %v1471, %v1480
  %v1492 = vadd.f32 %v1472, %v1480
  %v1493 = vadd.f32 %v1473, %v1480
  %v1494 = vadd.f32 %v1474, %v1480
  %v1495 = vmax.f32 %v1482, 0.0
  %v1496 = vmax.f32 %v1483, 0.0
  %v1497 = vmax.f32 %v1484, 0.0
  %v1498 = vmax.f32 %v1485, 0.0
  %v1499 = vmax.f32 %v1486, 0.0
  %v1500 = vmax.f32 %v1487, 0.0
  %v1501 = vmax.f32 %v1488, 0.0
  %v1502 = vmax.f32 %v1489, 0.0
  %v1503 = vmax.f32 %v1490, 0.0
  %v1504 = vmax.f32 %v1491, 0.0
  %v1505 = vmax.f32 %v1492, 0.0
  %v1506 = vmax.f32 %v1493, 0.0
  %v1507 = vmax.f32 %v1494, 0.0
  %vm1508 = vcmask 261120
  %1509 = vst.msk [vmem:[%s4] sm:$0xff] %vm1508, %v1495
  %1510 = vst.msk [vmem:[%s4 + $0x8] sm:$0xff] %vm1508, %v1496
  %1511 = vst.msk [vmem:[%s4 + $0x10] sm:$0xff] %vm1508, %v1497
  %1512 = vst.msk [vmem:[%s4 + $0x18] sm:$0xff] %vm1508, %v1498
  %1513 = vst.msk [vmem:[%s4 + $0x20] sm:$0xff] %vm1508, %v1499
  %1514 = vst.msk [vmem:[%s4 + $0x28] sm:$0xff] %vm1508, %v1500
  %1515 = vst.msk [vmem:[%s4 + $0x30] sm:$0xff] %vm1508, %v1501
  %1516 = vst.msk [vmem:[%s4 + $0x38] sm:$0xff] %vm1508, %v1502
  %1517 = vst.msk [vmem:[%s4 + $0x40] sm:$0xff] %vm1508, %v1503
  %1518 = vst.msk [vmem:[%s4 + $0x48] sm:$0xff] %vm1508, %v1504
  %1519 = vst.msk [vmem:[%s4 + $0x50] sm:$0xff] %vm1508, %v1505
  %1520 = vst.msk [vmem:[%s4 + $0x58] sm:$0xff] %vm1508, %v1506
  %1521 = vst.msk [vmem:[%s4 + $0x60] sm:$0xff] %vm1508, %v1507
  // Predicated region
  $region18: #{convnet_forward.4} parent=0 // pred_check
    _
  $region19: #{convnet_forward.4} parent=0 // pred_check_branch
    %1523 = sbr.rel (0) target = $region21
  $region20: #{convnet_forward.4} parent=0 // pred_region
    _
  $region21: #{convnet_forward.4} parent=0 // pred_fallthru
    _
  // Predicated region
  $region22: #{convnet_forward.4} parent=0 // pred_check
    _
  $region23: #{convnet_forward.4} parent=0 // pred_check_branch
    %1525 = sbr.rel (0) target = $region25
  $region24: #{convnet_forward.4} parent=0 // pred_region
    _
  $region25: #{convnet_forward.4} parent=0 // pred_fallthru
    _

// kernel: convnet_forward.5
$region0: #{convnet_forward.5}
  #allocation0 [shape = 'u32[]', space=smem, size = 0x4, offset = 0x4, fixed_abs, tag = 'smem constant byte address 0x4 - core index']
  #allocation1 [shape = 'u32[144,128]{1,0:T(1,128)}', space=vmem, size = 0x12000, scoped, tag = 'internal scratch']
  %s0 = inlined_call_operand.vmem [shape: bf16[8,1568], index: 0, kind: input, shape index: {}]
  %s1 = inlined_call_operand.vmem [shape: bf16[1568,128], index: 1, kind: input, shape index: {}]
  %s2 = inlined_call_operand.vmem [shape: f32[1,128], index: 2, kind: input, shape index: {}]
  %s3 = inlined_call_operand.vmem [shape: f32[8,128], index: 3, kind: output, shape index: {}]
  %s4 = sld [smem:[#allocation0]]
  $region22: #{convnet_forward.5} parent=0
    _
  %s6 = ssub.s32 1, %s4
  %s7 = scalar_select 0, %s6, %s4
  // Predicated region
  $region2: #{convnet_forward.5} parent=0 // pred_check
    _
  $region3: #{convnet_forward.5} parent=0 // pred_check_branch
    %9 = sbr.rel (0) target = $region5
  $region4: #{convnet_forward.5} parent=0 // pred_region
    _
  $region5: #{convnet_forward.5} parent=0 // pred_fallthru
    _
  // Predicated region
  $region6: #{convnet_forward.5} parent=0 // pred_check
    _
  $region7: #{convnet_forward.5} parent=0 // pred_check_branch
    %11 = sbr.rel (0) target = $region9
  $region8: #{convnet_forward.5} parent=0 // pred_region
    _
  $region9: #{convnet_forward.5} parent=0 // pred_fallthru
    _
  // Predicated region
  $region10: #{convnet_forward.5} parent=0 // pred_check
    _
  $region11: #{convnet_forward.5} parent=0 // pred_check_branch
    %13 = sbr.rel (0) target = $region13
  $region12: #{convnet_forward.5} parent=0 // pred_region
    _
  $region13: #{convnet_forward.5} parent=0 // pred_fallthru
    _
  %v15 = vld [vmem:[%s0] sm:$0xff]
  %v16 = vld [vmem:[%s0 + $0x8] sm:$0xff]
  %v17 = vld [vmem:[%s0 + $0x10] sm:$0xff]
  %v18 = vld [vmem:[%s0 + $0x18] sm:$0xff]
  %v19 = vld [vmem:[%s0 + $0x20] sm:$0xff]
  %v20 = vld [vmem:[%s0 + $0x28] sm:$0xff]
  %v21 = vld [vmem:[%s0 + $0x30] sm:$0xf]
  %v22 = vld [vmem:[%s1] sm:$0xf]
  %v23 = vld [vmem:[%s1 + $0x4] sm:$0xf]
  %v24 = vld [vmem:[%s1 + $0x8] sm:$0xf]
  %v25 = vld [vmem:[%s1 + $0xc] sm:$0xf]
  %v26 = vld [vmem:[%s1 + $0x10] sm:$0xf]
  %v27 = vld [vmem:[%s1 + $0x14] sm:$0xf]
  %v28 = vld [vmem:[%s1 + $0x18] sm:$0xf]
  %v29 = vld [vmem:[%s1 + $0x1c] sm:$0xf]
  %v30 = vld [vmem:[%s1 + $0x20] sm:$0xf]
  %v31 = vld [vmem:[%s1 + $0x24] sm:$0xf]
  %v32 = vld [vmem:[%s1 + $0x28] sm:$0xf]
  %v33 = vld [vmem:[%s1 + $0x2c] sm:$0xf]
  %v34 = vld [vmem:[%s1 + $0x30] sm:$0xf]
  %v35 = vld [vmem:[%s1 + $0x34] sm:$0xf]
  %v36 = vld [vmem:[%s1 + $0x38] sm:$0xf]
  %v37 = vld [vmem:[%s1 + $0x3c] sm:$0xf]
  %v38 = vld [vmem:[%s1 + $0x40] sm:$0xf]
  %v39 = vld [vmem:[%s1 + $0x44] sm:$0xf]
  %v40 = vld [vmem:[%s1 + $0x48] sm:$0xf]
  %v41 = vld [vmem:[%s1 + $0x4c] sm:$0xf]
  %v42 = vld [vmem:[%s1 + $0x50] sm:$0xf]
  %v43 = vld [vmem:[%s1 + $0x54] sm:$0xf]
  %v44 = vld [vmem:[%s1 + $0x58] sm:$0xf]
  %v45 = vld [vmem:[%s1 + $0x5c] sm:$0xf]
  %v46 = vld [vmem:[%s1 + $0x60] sm:$0xf]
  %v47 = vld [vmem:[%s1 + $0x64] sm:$0xf]
  %v48 = vld [vmem:[%s1 + $0x68] sm:$0xf]
  %v49 = vld [vmem:[%s1 + $0x6c] sm:$0xf]
  %v50 = vld [vmem:[%s1 + $0x70] sm:$0xf]
  %v51 = vld [vmem:[%s1 + $0x74] sm:$0xf]
  %v52 = vld [vmem:[%s1 + $0x78] sm:$0xf]
  %v53 = vld [vmem:[%s1 + $0x7c] sm:$0xf]
  %v54 = vld [vmem:[%s1 + $0x80] sm:$0xf]
  %v55 = vld [vmem:[%s1 + $0x84] sm:$0xf]
  %v56 = vld [vmem:[%s1 + $0x88] sm:$0xf]
  %v57 = vld [vmem:[%s1 + $0x8c] sm:$0xf]
  %v58 = vld [vmem:[%s1 + $0x90] sm:$0xf]
  %v59 = vld [vmem:[%s1 + $0x94] sm:$0xf]
  %v60 = vld [vmem:[%s1 + $0x98] sm:$0xf]
  %v61 = vld [vmem:[%s1 + $0x9c] sm:$0xf]
  %v62 = vld [vmem:[%s1 + $0xa0] sm:$0xf]
  %v63 = vld [vmem:[%s1 + $0xa4] sm:$0xf]
  %v64 = vld [vmem:[%s1 + $0xa8] sm:$0xf]
  %v65 = vld [vmem:[%s1 + $0xac] sm:$0xf]
  %v66 = vld [vmem:[%s1 + $0xb0] sm:$0xf]
  %v67 = vld [vmem:[%s1 + $0xb4] sm:$0xf]
  %v68 = vld [vmem:[%s1 + $0xb8] sm:$0xf]
  %v69 = vld [vmem:[%s1 + $0xbc] sm:$0xf]
  %v70 = vld [vmem:[%s1 + $0xc0] sm:$0xf]
  %v71 = vld [vmem:[%s1 + $0xc4] sm:$0xf]
  %v72 = vld [vmem:[%s1 + $0xc8] sm:$0xf]
  %v73 = vld [vmem:[%s1 + $0xcc] sm:$0xf]
  %v74 = vld [vmem:[%s1 + $0xd0] sm:$0xf]
  %v75 = vld [vmem:[%s1 + $0xd4] sm:$0xf]
  %v76 = vld [vmem:[%s1 + $0xd8] sm:$0xf]
  %v77 = vld [vmem:[%s1 + $0xdc] sm:$0xf]
  %v78 = vld [vmem:[%s1 + $0xe0] sm:$0xf]
  %v79 = vld [vmem:[%s1 + $0xe4] sm:$0xf]
  %v80 = vld [vmem:[%s1 + $0xe8] sm:$0xf]
  %v81 = vld [vmem:[%s1 + $0xec] sm:$0xf]
  %v82 = vld [vmem:[%s1 + $0xf0] sm:$0xf]
  %v83 = vld [vmem:[%s1 + $0xf4] sm:$0xf]
  %v84 = vld [vmem:[%s1 + $0xf8] sm:$0xf]
  %v85 = vld [vmem:[%s1 + $0xfc] sm:$0xf]
  %v86 = vld [vmem:[%s1 + $0x100] sm:$0xf]
  %v87 = vld [vmem:[%s1 + $0x104] sm:$0xf]
  %v88 = vld [vmem:[%s1 + $0x108] sm:$0xf]
  %v89 = vld [vmem:[%s1 + $0x10c] sm:$0xf]
  %v90 = vld [vmem:[%s1 + $0x110] sm:$0xf]
  %v91 = vld [vmem:[%s1 + $0x114] sm:$0xf]
  %v92 = vld [vmem:[%s1 + $0x118] sm:$0xf]
  %v93 = vld [vmem:[%s1 + $0x11c] sm:$0xf]
  %v94 = vld [vmem:[%s1 + $0x120] sm:$0xf]
  %v95 = vld [vmem:[%s1 + $0x124] sm:$0xf]
  %v96 = vld [vmem:[%s1 + $0x128] sm:$0xf]
  %v97 = vld [vmem:[%s1 + $0x12c] sm:$0xf]
  %v98 = vld [vmem:[%s1 + $0x130] sm:$0xf]
  %v99 = vld [vmem:[%s1 + $0x134] sm:$0xf]
  %v100 = vld [vmem:[%s1 + $0x138] sm:$0xf]
  %v101 = vld [vmem:[%s1 + $0x13c] sm:$0xf]
  %v102 = vld [vmem:[%s1 + $0x140] sm:$0xf]
  %v103 = vld [vmem:[%s1 + $0x144] sm:$0xf]
  %v104 = vld [vmem:[%s1 + $0x148] sm:$0xf]
  %v105 = vld [vmem:[%s1 + $0x14c] sm:$0xf]
  %v106 = vld [vmem:[%s1 + $0x150] sm:$0xf]
  %v107 = vld [vmem:[%s1 + $0x154] sm:$0xf]
  %v108 = vld [vmem:[%s1 + $0x158] sm:$0xf]
  %v109 = vld [vmem:[%s1 + $0x15c] sm:$0xf]
  %v110 = vld [vmem:[%s1 + $0x160] sm:$0xf]
  %v111 = vld [vmem:[%s1 + $0x164] sm:$0xf]
  %v112 = vld [vmem:[%s1 + $0x168] sm:$0xf]
  %v113 = vld [vmem:[%s1 + $0x16c] sm:$0xf]
  %v114 = vld [vmem:[%s1 + $0x170] sm:$0xf]
  %v115 = vld [vmem:[%s1 + $0x174] sm:$0xf]
  %v116 = vld [vmem:[%s1 + $0x178] sm:$0xf]
  %v117 = vld [vmem:[%s1 + $0x17c] sm:$0xf]
  %v118 = vld [vmem:[%s1 + $0x180] sm:$0xf]
  %v119 = vld [vmem:[%s1 + $0x184] sm:$0xf]
  %v120 = vld [vmem:[%s1 + $0x188] sm:$0xf]
  %v121 = vld [vmem:[%s1 + $0x18c] sm:$0xf]
  %v122 = vld [vmem:[%s1 + $0x190] sm:$0xf]
  %v123 = vld [vmem:[%s1 + $0x194] sm:$0xf]
  %v124 = vld [vmem:[%s1 + $0x198] sm:$0xf]
  %v125 = vld [vmem:[%s1 + $0x19c] sm:$0xf]
  %v126 = vld [vmem:[%s1 + $0x1a0] sm:$0xf]
  %v127 = vld [vmem:[%s1 + $0x1a4] sm:$0xf]
  %v128 = vld [vmem:[%s1 + $0x1a8] sm:$0xf]
  %v129 = vld [vmem:[%s1 + $0x1ac] sm:$0xf]
  %v130 = vld [vmem:[%s1 + $0x1b0] sm:$0xf]
  %v131 = vld [vmem:[%s1 + $0x1b4] sm:$0xf]
  %v132 = vld [vmem:[%s1 + $0x1b8] sm:$0xf]
  %v133 = vld [vmem:[%s1 + $0x1bc] sm:$0xf]
  %v134 = vld [vmem:[%s1 + $0x1c0] sm:$0xf]
  %v135 = vld [vmem:[%s1 + $0x1c4] sm:$0xf]
  %v136 = vld [vmem:[%s1 + $0x1c8] sm:$0xf]
  %v137 = vld [vmem:[%s1 + $0x1cc] sm:$0xf]
  %v138 = vld [vmem:[%s1 + $0x1d0] sm:$0xf]
  %v139 = vld [vmem:[%s1 + $0x1d4] sm:$0xf]
  %v140 = vld [vmem:[%s1 + $0x1d8] sm:$0xf]
  %v141 = vld [vmem:[%s1 + $0x1dc] sm:$0xf]
  %v142 = vld [vmem:[%s1 + $0x1e0] sm:$0xf]
  %v143 = vld [vmem:[%s1 + $0x1e4] sm:$0xf]
  %v144 = vld [vmem:[%s1 + $0x1e8] sm:$0xf]
  %v145 = vld [vmem:[%s1 + $0x1ec] sm:$0xf]
  %v146 = vld [vmem:[%s1 + $0x1f0] sm:$0xf]
  %v147 = vld [vmem:[%s1 + $0x1f4] sm:$0xf]
  %v148 = vld [vmem:[%s1 + $0x1f8] sm:$0xf]
  %v149 = vld [vmem:[%s1 + $0x1fc] sm:$0xf]
  %v150 = vld [vmem:[%s1 + $0x200] sm:$0xf]
  %v151 = vld [vmem:[%s1 + $0x204] sm:$0xf]
  %v152 = vld [vmem:[%s1 + $0x208] sm:$0xf]
  %v153 = vld [vmem:[%s1 + $0x20c] sm:$0xf]
  %v154 = vld [vmem:[%s1 + $0x210] sm:$0xf]
  %v155 = vld [vmem:[%s1 + $0x214] sm:$0xf]
  %v156 = vld [vmem:[%s1 + $0x218] sm:$0xf]
  %v157 = vld [vmem:[%s1 + $0x21c] sm:$0xf]
  %v158 = vld [vmem:[%s1 + $0x220] sm:$0xf]
  %v159 = vld [vmem:[%s1 + $0x224] sm:$0xf]
  %v160 = vld [vmem:[%s1 + $0x228] sm:$0xf]
  %v161 = vld [vmem:[%s1 + $0x22c] sm:$0xf]
  %v162 = vld [vmem:[%s1 + $0x230] sm:$0xf]
  %v163 = vld [vmem:[%s1 + $0x234] sm:$0xf]
  %v164 = vld [vmem:[%s1 + $0x238] sm:$0xf]
  %v165 = vld [vmem:[%s1 + $0x23c] sm:$0xf]
  %v166 = vld [vmem:[%s1 + $0x240] sm:$0xf]
  %v167 = vld [vmem:[%s1 + $0x244] sm:$0xf]
  %v168 = vld [vmem:[%s1 + $0x248] sm:$0xf]
  %v169 = vld [vmem:[%s1 + $0x24c] sm:$0xf]
  %v170 = vld [vmem:[%s1 + $0x250] sm:$0xf]
  %v171 = vld [vmem:[%s1 + $0x254] sm:$0xf]
  %v172 = vld [vmem:[%s1 + $0x258] sm:$0xf]
  %v173 = vld [vmem:[%s1 + $0x25c] sm:$0xf]
  %v174 = vld [vmem:[%s1 + $0x260] sm:$0xf]
  %v175 = vld [vmem:[%s1 + $0x264] sm:$0xf]
  %v176 = vld [vmem:[%s1 + $0x268] sm:$0xf]
  %v177 = vld [vmem:[%s1 + $0x26c] sm:$0xf]
  %v178 = vld [vmem:[%s1 + $0x270] sm:$0xf]
  %v179 = vld [vmem:[%s1 + $0x274] sm:$0xf]
  %v180 = vld [vmem:[%s1 + $0x278] sm:$0xf]
  %v181 = vld [vmem:[%s1 + $0x27c] sm:$0xf]
  %v182 = vld [vmem:[%s1 + $0x280] sm:$0xf]
  %v183 = vld [vmem:[%s1 + $0x284] sm:$0xf]
  %v184 = vld [vmem:[%s1 + $0x288] sm:$0xf]
  %v185 = vld [vmem:[%s1 + $0x28c] sm:$0xf]
  %v186 = vld [vmem:[%s1 + $0x290] sm:$0xf]
  %v187 = vld [vmem:[%s1 + $0x294] sm:$0xf]
  %v188 = vld [vmem:[%s1 + $0x298] sm:$0xf]
  %v189 = vld [vmem:[%s1 + $0x29c] sm:$0xf]
  %v190 = vld [vmem:[%s1 + $0x2a0] sm:$0xf]
  %v191 = vld [vmem:[%s1 + $0x2a4] sm:$0xf]
  %v192 = vld [vmem:[%s1 + $0x2a8] sm:$0xf]
  %v193 = vld [vmem:[%s1 + $0x2ac] sm:$0xf]
  %v194 = vld [vmem:[%s1 + $0x2b0] sm:$0xf]
  %v195 = vld [vmem:[%s1 + $0x2b4] sm:$0xf]
  %v196 = vld [vmem:[%s1 + $0x2b8] sm:$0xf]
  %v197 = vld [vmem:[%s1 + $0x2bc] sm:$0xf]
  %v198 = vld [vmem:[%s1 + $0x2c0] sm:$0xf]
  %v199 = vld [vmem:[%s1 + $0x2c4] sm:$0xf]
  %v200 = vld [vmem:[%s1 + $0x2c8] sm:$0xf]
  %v201 = vld [vmem:[%s1 + $0x2cc] sm:$0xf]
  %v202 = vld [vmem:[%s1 + $0x2d0] sm:$0xf]
  %v203 = vld [vmem:[%s1 + $0x2d4] sm:$0xf]
  %v204 = vld [vmem:[%s1 + $0x2d8] sm:$0xf]
  %v205 = vld [vmem:[%s1 + $0x2dc] sm:$0xf]
  %v206 = vld [vmem:[%s1 + $0x2e0] sm:$0xf]
  %v207 = vld [vmem:[%s1 + $0x2e4] sm:$0xf]
  %v208 = vld [vmem:[%s1 + $0x2e8] sm:$0xf]
  %v209 = vld [vmem:[%s1 + $0x2ec] sm:$0xf]
  %v210 = vld [vmem:[%s1 + $0x2f0] sm:$0xf]
  %v211 = vld [vmem:[%s1 + $0x2f4] sm:$0xf]
  %v212 = vld [vmem:[%s1 + $0x2f8] sm:$0xf]
  %v213 = vld [vmem:[%s1 + $0x2fc] sm:$0xf]
  %v214 = vld [vmem:[%s1 + $0x300] sm:$0xf]
  %v215 = vld [vmem:[%s1 + $0x304] sm:$0xf]
  %v216 = vld [vmem:[%s1 + $0x308] sm:$0xf]
  %v217 = vld [vmem:[%s1 + $0x30c] sm:$0xf]
  %v218 = vld [vmem:[%s2] sm:$0x1]
  %v220 = vlaneseq
  %v221 = vshrl.u32 %v220, 7
  %v222 = vsub.s32 0, %v221
  %v223 = vrot.slane %v218, %v222
  %v232 = vunpack.c.l.b16 %v15
  %v233 = vunpack.c.h.b16 %v15
  %v234 = vunpack.c.l.b16 %v16
  %v235 = vunpack.c.h.b16 %v16
  %v236 = vunpack.c.l.b16 %v17
  %v237 = vunpack.c.h.b16 %v17
  %v238 = vunpack.c.l.b16 %v18
  %v239 = vunpack.c.h.b16 %v18
  %v240 = vunpack.c.l.b16 %v19
  %v241 = vunpack.c.h.b16 %v19
  %v242 = vunpack.c.l.b16 %v20
  %v243 = vunpack.c.h.b16 %v20
  %v244 = vunpack.c.l.b16 %v21
  %v245 = vpack.c.b16 %v232, %v232
  %v246 = vpack.c.b16 %v233, %v233
  %v247 = vpack.c.b16 %v234, %v234
  %v248 = vpack.c.b16 %v235, %v235
  %v249 = vpack.c.b16 %v236, %v236
  %v250 = vpack.c.b16 %v237, %v237
  %v251 = vpack.c.b16 %v238, %v238
  %v252 = vpack.c.b16 %v239, %v239
  %v253 = vpack.c.b16 %v240, %v240
  %v254 = vpack.c.b16 %v241, %v241
  %v255 = vpack.c.b16 %v242, %v242
  %v256 = vpack.c.b16 %v243, %v243
  %v257 = vpack.c.b16 %v244, %v244
  %v466 = vunpack.c.l.b16 %v22
  %v467 = vunpack.c.l.b16 %v23
  %v468 = vunpack.c.l.b16 %v24
  %v469 = vunpack.c.l.b16 %v25
  %v470 = vunpack.c.l.b16 %v26
  %v471 = vunpack.c.l.b16 %v27
  %v472 = vunpack.c.l.b16 %v28
  %v473 = vunpack.c.l.b16 %v29
  %v474 = vunpack.c.l.b16 %v30
  %v475 = vunpack.c.l.b16 %v31
  %v476 = vunpack.c.l.b16 %v32
  %v477 = vunpack.c.l.b16 %v33
  %v478 = vunpack.c.l.b16 %v34
  %v479 = vunpack.c.l.b16 %v35
  %v480 = vunpack.c.l.b16 %v36
  %v481 = vunpack.c.l.b16 %v37
  %v482 = vunpack.c.l.b16 %v38
  %v483 = vunpack.c.l.b16 %v39
  %v484 = vunpack.c.l.b16 %v40
  %v485 = vunpack.c.l.b16 %v41
  %v486 = vunpack.c.l.b16 %v42
  %v487 = vunpack.c.l.b16 %v43
  %v488 = vunpack.c.l.b16 %v44
  %v489 = vunpack.c.l.b16 %v45
  %v490 = vunpack.c.l.b16 %v46
  %v491 = vunpack.c.l.b16 %v47
  %v492 = vunpack.c.l.b16 %v48
  %v493 = vunpack.c.l.b16 %v49
  %v494 = vunpack.c.l.b16 %v50
  %v495 = vunpack.c.l.b16 %v51
  %v496 = vunpack.c.l.b16 %v52
  %v497 = vunpack.c.l.b16 %v53
  %v498 = vunpack.c.l.b16 %v54
  %v499 = vunpack.c.l.b16 %v55
  %v500 = vunpack.c.l.b16 %v56
  %v501 = vunpack.c.l.b16 %v57
  %v502 = vunpack.c.l.b16 %v58
  %v503 = vunpack.c.l.b16 %v59
  %v504 = vunpack.c.l.b16 %v60
  %v505 = vunpack.c.l.b16 %v61
  %v506 = vunpack.c.l.b16 %v62
  %v507 = vunpack.c.l.b16 %v63
  %v508 = vunpack.c.l.b16 %v64
  %v509 = vunpack.c.l.b16 %v65
  %v510 = vunpack.c.l.b16 %v66
  %v511 = vunpack.c.l.b16 %v67
  %v512 = vunpack.c.l.b16 %v68
  %v513 = vunpack.c.l.b16 %v69
  %v514 = vunpack.c.l.b16 %v70
  %v515 = vunpack.c.l.b16 %v71
  %v516 = vunpack.c.l.b16 %v72
  %v517 = vunpack.c.l.b16 %v73
  %v518 = vunpack.c.l.b16 %v74
  %v519 = vunpack.c.l.b16 %v75
  %v520 = vunpack.c.l.b16 %v76
  %v521 = vunpack.c.l.b16 %v77
  %v522 = vunpack.c.l.b16 %v78
  %v523 = vunpack.c.l.b16 %v79
  %v524 = vunpack.c.l.b16 %v80
  %v525 = vunpack.c.l.b16 %v81
  %v526 = vunpack.c.l.b16 %v82
  %v527 = vunpack.c.l.b16 %v83
  %v528 = vunpack.c.l.b16 %v84
  %v529 = vunpack.c.l.b16 %v85
  %v530 = vunpack.c.l.b16 %v86
  %v531 = vunpack.c.l.b16 %v87
  %v532 = vunpack.c.l.b16 %v88
  %v533 = vunpack.c.l.b16 %v89
  %v534 = vunpack.c.l.b16 %v90
  %v535 = vunpack.c.l.b16 %v91
  %v536 = vunpack.c.l.b16 %v92
  %v537 = vunpack.c.l.b16 %v93
  %v538 = vunpack.c.l.b16 %v94
  %v539 = vunpack.c.l.b16 %v95
  %v540 = vunpack.c.l.b16 %v96
  %v541 = vunpack.c.l.b16 %v97
  %v542 = vunpack.c.l.b16 %v98
  %v543 = vunpack.c.l.b16 %v99
  %v544 = vunpack.c.l.b16 %v100
  %v545 = vunpack.c.l.b16 %v101
  %v546 = vunpack.c.l.b16 %v102
  %v547 = vunpack.c.l.b16 %v103
  %v548 = vunpack.c.l.b16 %v104
  %v549 = vunpack.c.l.b16 %v105
  %v550 = vunpack.c.l.b16 %v106
  %v551 = vunpack.c.l.b16 %v107
  %v552 = vunpack.c.l.b16 %v108
  %v553 = vunpack.c.l.b16 %v109
  %v554 = vunpack.c.l.b16 %v110
  %v555 = vunpack.c.l.b16 %v111
  %v556 = vunpack.c.l.b16 %v112
  %v557 = vunpack.c.l.b16 %v113
  %v558 = vunpack.c.l.b16 %v114
  %v559 = vunpack.c.l.b16 %v115
  %v560 = vunpack.c.l.b16 %v116
  %v561 = vunpack.c.l.b16 %v117
  %v562 = vunpack.c.l.b16 %v118
  %v563 = vunpack.c.l.b16 %v119
  %v564 = vunpack.c.l.b16 %v120
  %v565 = vunpack.c.l.b16 %v121
  %v566 = vunpack.c.l.b16 %v122
  %v567 = vunpack.c.l.b16 %v123
  %v568 = vunpack.c.l.b16 %v124
  %v569 = vunpack.c.l.b16 %v125
  %v570 = vunpack.c.l.b16 %v126
  %v571 = vunpack.c.l.b16 %v127
  %v572 = vunpack.c.l.b16 %v128
  %v573 = vunpack.c.l.b16 %v129
  %v574 = vunpack.c.l.b16 %v130
  %v575 = vunpack.c.l.b16 %v131
  %v576 = vunpack.c.l.b16 %v132
  %v577 = vunpack.c.l.b16 %v133
  %v578 = vunpack.c.l.b16 %v134
  %v579 = vunpack.c.l.b16 %v135
  %v580 = vunpack.c.l.b16 %v136
  %v581 = vunpack.c.l.b16 %v137
  %v582 = vunpack.c.l.b16 %v138
  %v583 = vunpack.c.l.b16 %v139
  %v584 = vunpack.c.l.b16 %v140
  %v585 = vunpack.c.l.b16 %v141
  %v586 = vunpack.c.l.b16 %v142
  %v587 = vunpack.c.l.b16 %v143
  %v588 = vunpack.c.l.b16 %v144
  %v589 = vunpack.c.l.b16 %v145
  %v590 = vunpack.c.l.b16 %v146
  %v591 = vunpack.c.l.b16 %v147
  %v592 = vunpack.c.l.b16 %v148
  %v593 = vunpack.c.l.b16 %v149
  %v594 = vunpack.c.l.b16 %v150
  %v595 = vunpack.c.l.b16 %v151
  %v596 = vunpack.c.l.b16 %v152
  %v597 = vunpack.c.l.b16 %v153
  %v598 = vunpack.c.l.b16 %v154
  %v599 = vunpack.c.l.b16 %v155
  %v600 = vunpack.c.l.b16 %v156
  %v601 = vunpack.c.l.b16 %v157
  %v602 = vunpack.c.l.b16 %v158
  %v603 = vunpack.c.l.b16 %v159
  %v604 = vunpack.c.l.b16 %v160
  %v605 = vunpack.c.l.b16 %v161
  %v606 = vunpack.c.l.b16 %v162
  %v607 = vunpack.c.l.b16 %v163
  %v608 = vunpack.c.l.b16 %v164
  %v609 = vunpack.c.l.b16 %v165
  %v610 = vunpack.c.l.b16 %v166
  %v611 = vunpack.c.l.b16 %v167
  %v612 = vunpack.c.l.b16 %v168
  %v613 = vunpack.c.l.b16 %v169
  %v614 = vunpack.c.l.b16 %v170
  %v615 = vunpack.c.l.b16 %v171
  %v616 = vunpack.c.l.b16 %v172
  %v617 = vunpack.c.l.b16 %v173
  %v618 = vunpack.c.l.b16 %v174
  %v619 = vunpack.c.l.b16 %v175
  %v620 = vunpack.c.l.b16 %v176
  %v621 = vunpack.c.l.b16 %v177
  %v622 = vunpack.c.l.b16 %v178
  %v623 = vunpack.c.l.b16 %v179
  %v624 = vunpack.c.l.b16 %v180
  %v625 = vunpack.c.l.b16 %v181
  %v626 = vunpack.c.l.b16 %v182
  %v627 = vunpack.c.l.b16 %v183
  %v628 = vunpack.c.l.b16 %v184
  %v629 = vunpack.c.l.b16 %v185
  %v630 = vunpack.c.l.b16 %v186
  %v631 = vunpack.c.l.b16 %v187
  %v632 = vunpack.c.l.b16 %v188
  %v633 = vunpack.c.l.b16 %v189
  %v634 = vunpack.c.l.b16 %v190
  %v635 = vunpack.c.l.b16 %v191
  %v636 = vunpack.c.l.b16 %v192
  %v637 = vunpack.c.l.b16 %v193
  %v638 = vunpack.c.l.b16 %v194
  %v639 = vunpack.c.l.b16 %v195
  %v640 = vunpack.c.l.b16 %v196
  %v641 = vunpack.c.l.b16 %v197
  %v642 = vunpack.c.l.b16 %v198
  %v643 = vunpack.c.l.b16 %v199
  %v644 = vunpack.c.l.b16 %v200
  %v645 = vunpack.c.l.b16 %v201
  %v646 = vunpack.c.l.b16 %v202
  %v647 = vunpack.c.l.b16 %v203
  %v648 = vunpack.c.l.b16 %v204
  %v649 = vunpack.c.l.b16 %v205
  %v650 = vunpack.c.l.b16 %v206
  %v651 = vunpack.c.l.b16 %v207
  %v652 = vunpack.c.l.b16 %v208
  %v653 = vunpack.c.l.b16 %v209
  %v654 = vunpack.c.l.b16 %v210
  %v655 = vunpack.c.l.b16 %v211
  %v656 = vunpack.c.l.b16 %v212
  %v657 = vunpack.c.l.b16 %v213
  %v658 = vunpack.c.l.b16 %v214
  %v659 = vunpack.c.l.b16 %v215
  %v660 = vunpack.c.l.b16 %v216
  %v661 = vunpack.c.l.b16 %v217
  %v662 = vpack.c.b16 %v467, %v466
  %v663 = vpack.c.b16 %v469, %v468
  %v664 = vpack.c.b16 %v471, %v470
  %v665 = vpack.c.b16 %v473, %v472
  %v666 = vpack.c.b16 %v475, %v474
  %v667 = vpack.c.b16 %v477, %v476
  %v668 = vpack.c.b16 %v479, %v478
  %v669 = vpack.c.b16 %v481, %v480
  %v670 = vpack.c.b16 %v483, %v482
  %v671 = vpack.c.b16 %v485, %v484
  %v672 = vpack.c.b16 %v487, %v486
  %v673 = vpack.c.b16 %v489, %v488
  %v674 = vpack.c.b16 %v491, %v490
  %v675 = vpack.c.b16 %v493, %v492
  %v676 = vpack.c.b16 %v495, %v494
  %v677 = vpack.c.b16 %v497, %v496
  %v678 = vpack.c.b16 %v499, %v498
  %v679 = vpack.c.b16 %v501, %v500
  %v680 = vpack.c.b16 %v503, %v502
  %v681 = vpack.c.b16 %v505, %v504
  %v682 = vpack.c.b16 %v507, %v506
  %v683 = vpack.c.b16 %v509, %v508
  %v684 = vpack.c.b16 %v511, %v510
  %v685 = vpack.c.b16 %v513, %v512
  %v686 = vpack.c.b16 %v515, %v514
  %v687 = vpack.c.b16 %v517, %v516
  %v688 = vpack.c.b16 %v519, %v518
  %v689 = vpack.c.b16 %v521, %v520
  %v690 = vpack.c.b16 %v523, %v522
  %v691 = vpack.c.b16 %v525, %v524
  %v692 = vpack.c.b16 %v527, %v526
  %v693 = vpack.c.b16 %v529, %v528
  %v694 = vpack.c.b16 %v531, %v530
  %v695 = vpack.c.b16 %v533, %v532
  %v696 = vpack.c.b16 %v535, %v534
  %v697 = vpack.c.b16 %v537, %v536
  %v698 = vpack.c.b16 %v539, %v538
  %v699 = vpack.c.b16 %v541, %v540
  %v700 = vpack.c.b16 %v543, %v542
  %v701 = vpack.c.b16 %v545, %v544
  %v702 = vpack.c.b16 %v547, %v546
  %v703 = vpack.c.b16 %v549, %v548
  %v704 = vpack.c.b16 %v551, %v550
  %v705 = vpack.c.b16 %v553, %v552
  %v706 = vpack.c.b16 %v555, %v554
  %v707 = vpack.c.b16 %v557, %v556
  %v708 = vpack.c.b16 %v559, %v558
  %v709 = vpack.c.b16 %v561, %v560
  %v710 = vpack.c.b16 %v563, %v562
  %v711 = vpack.c.b16 %v565, %v564
  %v712 = vpack.c.b16 %v567, %v566
  %v713 = vpack.c.b16 %v569, %v568
  %v714 = vpack.c.b16 %v571, %v570
  %v715 = vpack.c.b16 %v573, %v572
  %v716 = vpack.c.b16 %v575, %v574
  %v717 = vpack.c.b16 %v577, %v576
  %v718 = vpack.c.b16 %v579, %v578
  %v719 = vpack.c.b16 %v581, %v580
  %v720 = vpack.c.b16 %v583, %v582
  %v721 = vpack.c.b16 %v585, %v584
  %v722 = vpack.c.b16 %v587, %v586
  %v723 = vpack.c.b16 %v589, %v588
  %v724 = vpack.c.b16 %v591, %v590
  %v725 = vpack.c.b16 %v593, %v592
  %v726 = vpack.c.b16 %v595, %v594
  %v727 = vpack.c.b16 %v597, %v596
  %v728 = vpack.c.b16 %v599, %v598
  %v729 = vpack.c.b16 %v601, %v600
  %v730 = vpack.c.b16 %v603, %v602
  %v731 = vpack.c.b16 %v605, %v604
  %v732 = vpack.c.b16 %v607, %v606
  %v733 = vpack.c.b16 %v609, %v608
  %v734 = vpack.c.b16 %v611, %v610
  %v735 = vpack.c.b16 %v613, %v612
  %v736 = vpack.c.b16 %v615, %v614
  %v737 = vpack.c.b16 %v617, %v616
  %v738 = vpack.c.b16 %v619, %v618
  %v739 = vpack.c.b16 %v621, %v620
  %v740 = vpack.c.b16 %v623, %v622
  %v741 = vpack.c.b16 %v625, %v624
  %v742 = vpack.c.b16 %v627, %v626
  %v743 = vpack.c.b16 %v629, %v628
  %v744 = vpack.c.b16 %v631, %v630
  %v745 = vpack.c.b16 %v633, %v632
  %v746 = vpack.c.b16 %v635, %v634
  %v747 = vpack.c.b16 %v637, %v636
  %v748 = vpack.c.b16 %v639, %v638
  %v749 = vpack.c.b16 %v641, %v640
  %v750 = vpack.c.b16 %v643, %v642
  %v751 = vpack.c.b16 %v645, %v644
  %v752 = vpack.c.b16 %v647, %v646
  %v753 = vpack.c.b16 %v649, %v648
  %v754 = vpack.c.b16 %v651, %v650
  %v755 = vpack.c.b16 %v653, %v652
  %v756 = vpack.c.b16 %v655, %v654
  %v757 = vpack.c.b16 %v657, %v656
  %v758 = vpack.c.b16 %v659, %v658
  %v759 = vpack.c.b16 %v661, %v660
  %vm858 = vcmask 261120
  %v860 = vsel %vm858, %v257, 0
  %862 = vmatprep.subr.bf16.mxu0 0
  %863 = vmatpush1.bf16.msra.mxu0 %v669
  %864 = vmatprep.subr.bf16.mxu0 0
  %865 = vmatpush1.bf16.msra.mxu0 %v668
  %866 = vmatprep.subr.bf16.mxu0 0
  %867 = vmatpush1.bf16.msra.mxu0 %v667
  %868 = vmatprep.subr.bf16.mxu0 0
  %869 = vmatpush1.bf16.msra.mxu0 %v666
  %870 = vmatprep.subr.bf16.mxu0 0
  %871 = vmatpush1.bf16.msra.mxu0 %v665
  %872 = vmatprep.subr.bf16.mxu0 0
  %873 = vmatpush1.bf16.msra.mxu0 %v664
  %874 = vmatprep.subr.bf16.mxu0 0
  %875 = vmatpush1.bf16.msra.mxu0 %v663
  %876 = vmatprep.subr.bf16.mxu0 0
  %877 = vmatpush1.bf16.msra.mxu0 %v662
  %878 = vmatprep.subr.bf16.mxu0 0
  %879 = vmatpush2.bf16.msra.mxu0 %v677
  %880 = vmatprep.subr.bf16.mxu0 0
  %881 = vmatpush2.bf16.msra.mxu0 %v676
  %882 = vmatprep.subr.bf16.mxu0 0
  %883 = vmatpush2.bf16.msra.mxu0 %v675
  %884 = vmatprep.subr.bf16.mxu0 0
  %885 = vmatpush2.bf16.msra.mxu0 %v674
  %886 = vmatprep.subr.bf16.mxu0 0
  %887 = vmatpush2.bf16.msra.mxu0 %v673
  %888 = vmatprep.subr.bf16.mxu0 0
  %889 = vmatpush2.bf16.msra.mxu0 %v672
  %890 = vmatprep.subr.bf16.mxu0 0
  %891 = vmatpush2.bf16.msra.mxu0 %v671
  %892 = vmatprep.subr.bf16.mxu0 0
  %893 = vmatpush2.bf16.msra.mxu0 %v670
  %894 = vmatprep.mubr.bf16.mxu0 %v246
  %895 = vmatmul.mubr.bf16.gmra.mxu0 %v245
  %v896 = vpop.f32.mrf.mxu0
  %v897 = vadd.f32 %v223, %v896
  %v898 = vpop.f32.mrf.mxu0
  %v899 = vpop.f32.mrf.mxu0
  %v900 = vpop.f32.mrf.mxu0
  %901 = vdwg.mxu0
  %902 = vmatprep.subr.bf16.mxu0 0
  %903 = vmatpush1.bf16.msra.mxu0 %v685
  %904 = vmatprep.subr.bf16.mxu0 0
  %905 = vmatpush1.bf16.msra.mxu0 %v684
  %906 = vmatprep.subr.bf16.mxu0 0
  %907 = vmatpush1.bf16.msra.mxu0 %v683
  %908 = vmatprep.subr.bf16.mxu0 0
  %909 = vmatpush1.bf16.msra.mxu0 %v682
  %910 = vmatprep.subr.bf16.mxu0 0
  %911 = vmatpush1.bf16.msra.mxu0 %v681
  %912 = vmatprep.subr.bf16.mxu0 0
  %913 = vmatpush1.bf16.msra.mxu0 %v680
  %914 = vmatprep.subr.bf16.mxu0 0
  %915 = vmatpush1.bf16.msra.mxu0 %v679
  %916 = vmatprep.subr.bf16.mxu0 0
  %917 = vmatpush1.bf16.msra.mxu0 %v678
  %918 = vmatprep.subr.bf16.mxu0 0
  %919 = vmatpush2.bf16.msra.mxu0 %v693
  %920 = vmatprep.subr.bf16.mxu0 0
  %921 = vmatpush2.bf16.msra.mxu0 %v692
  %922 = vmatprep.subr.bf16.mxu0 0
  %923 = vmatpush2.bf16.msra.mxu0 %v691
  %924 = vmatprep.subr.bf16.mxu0 0
  %925 = vmatpush2.bf16.msra.mxu0 %v690
  %926 = vmatprep.subr.bf16.mxu0 0
  %927 = vmatpush2.bf16.msra.mxu0 %v689
  %928 = vmatprep.subr.bf16.mxu0 0
  %929 = vmatpush2.bf16.msra.mxu0 %v688
  %930 = vmatprep.subr.bf16.mxu0 0
  %931 = vmatpush2.bf16.msra.mxu0 %v687
  %932 = vmatprep.subr.bf16.mxu0 0
  %933 = vmatpush2.bf16.msra.mxu0 %v686
  %934 = vmatprep.mubr.bf16.mxu0 %v248
  %935 = vmatmul.mubr.bf16.gmra.mxu0 %v247
  %v936 = vpop.f32.mrf.mxu0
  %v937 = vadd.f32 %v897, %v936
  %v938 = vpop.f32.mrf.mxu0
  %v939 = vpop.f32.mrf.mxu0
  %v940 = vpop.f32.mrf.mxu0
  %941 = vdwg.mxu0
  %942 = vmatprep.subr.bf16.mxu0 0
  %943 = vmatpush1.bf16.msra.mxu0 %v701
  %944 = vmatprep.subr.bf16.mxu0 0
  %945 = vmatpush1.bf16.msra.mxu0 %v700
  %946 = vmatprep.subr.bf16.mxu0 0
  %947 = vmatpush1.bf16.msra.mxu0 %v699
  %948 = vmatprep.subr.bf16.mxu0 0
  %949 = vmatpush1.bf16.msra.mxu0 %v698
  %950 = vmatprep.subr.bf16.mxu0 0
  %951 = vmatpush1.bf16.msra.mxu0 %v697
  %952 = vmatprep.subr.bf16.mxu0 0
  %953 = vmatpush1.bf16.msra.mxu0 %v696
  %954 = vmatprep.subr.bf16.mxu0 0
  %955 = vmatpush1.bf16.msra.mxu0 %v695
  %956 = vmatprep.subr.bf16.mxu0 0
  %957 = vmatpush1.bf16.msra.mxu0 %v694
  %958 = vmatprep.subr.bf16.mxu0 0
  %959 = vmatpush2.bf16.msra.mxu0 %v709
  %960 = vmatprep.subr.bf16.mxu0 0
  %961 = vmatpush2.bf16.msra.mxu0 %v708
  %962 = vmatprep.subr.bf16.mxu0 0
  %963 = vmatpush2.bf16.msra.mxu0 %v707
  %964 = vmatprep.subr.bf16.mxu0 0
  %965 = vmatpush2.bf16.msra.mxu0 %v706
  %966 = vmatprep.subr.bf16.mxu0 0
  %967 = vmatpush2.bf16.msra.mxu0 %v705
  %968 = vmatprep.subr.bf16.mxu0 0
  %969 = vmatpush2.bf16.msra.mxu0 %v704
  %970 = vmatprep.subr.bf16.mxu0 0
  %971 = vmatpush2.bf16.msra.mxu0 %v703
  %972 = vmatprep.subr.bf16.mxu0 0
  %973 = vmatpush2.bf16.msra.mxu0 %v702
  %974 = vmatprep.mubr.bf16.mxu0 %v250
  %975 = vmatmul.mubr.bf16.gmra.mxu0 %v249
  %v976 = vpop.f32.mrf.mxu0
  %v977 = vadd.f32 %v937, %v976
  %v978 = vpop.f32.mrf.mxu0
  %v979 = vpop.f32.mrf.mxu0
  %v980 = vpop.f32.mrf.mxu0
  %981 = vdwg.mxu0
  %982 = vmatprep.subr.bf16.mxu0 0
  %983 = vmatpush1.bf16.msra.mxu0 %v717
  %984 = vmatprep.subr.bf16.mxu0 0
  %985 = vmatpush1.bf16.msra.mxu0 %v716
  %986 = vmatprep.subr.bf16.mxu0 0
  %987 = vmatpush1.bf16.msra.mxu0 %v715
  %988 = vmatprep.subr.bf16.mxu0 0
  %989 = vmatpush1.bf16.msra.mxu0 %v714
  %990 = vmatprep.subr.bf16.mxu0 0
  %991 = vmatpush1.bf16.msra.mxu0 %v713
  %992 = vmatprep.subr.bf16.mxu0 0
  %993 = vmatpush1.bf16.msra.mxu0 %v712
  %994 = vmatprep.subr.bf16.mxu0 0
  %995 = vmatpush1.bf16.msra.mxu0 %v711
  %996 = vmatprep.subr.bf16.mxu0 0
  %997 = vmatpush1.bf16.msra.mxu0 %v710
  %998 = vmatprep.subr.bf16.mxu0 0
  %999 = vmatpush2.bf16.msra.mxu0 %v725
  %1000 = vmatprep.subr.bf16.mxu0 0
  %1001 = vmatpush2.bf16.msra.mxu0 %v724
  %1002 = vmatprep.subr.bf16.mxu0 0
  %1003 = vmatpush2.bf16.msra.mxu0 %v723
  %1004 = vmatprep.subr.bf16.mxu0 0
  %1005 = vmatpush2.bf16.msra.mxu0 %v722
  %1006 = vmatprep.subr.bf16.mxu0 0
  %1007 = vmatpush2.bf16.msra.mxu0 %v721
  %1008 = vmatprep.subr.bf16.mxu0 0
  %1009 = vmatpush2.bf16.msra.mxu0 %v720
  %1010 = vmatprep.subr.bf16.mxu0 0
  %1011 = vmatpush2.bf16.msra.mxu0 %v719
  %1012 = vmatprep.subr.bf16.mxu0 0
  %1013 = vmatpush2.bf16.msra.mxu0 %v718
  %1014 = vmatprep.mubr.bf16.mxu0 %v252
  %1015 = vmatmul.mubr.bf16.gmra.mxu0 %v251
  %v1016 = vpop.f32.mrf.mxu0
  %v1017 = vadd.f32 %v977, %v1016
  %v1018 = vpop.f32.mrf.mxu0
  %v1019 = vpop.f32.mrf.mxu0
  %v1020 = vpop.f32.mrf.mxu0
  %1021 = vdwg.mxu0
  %1022 = vmatprep.subr.bf16.mxu0 0
  %1023 = vmatpush1.bf16.msra.mxu0 %v733
  %1024 = vmatprep.subr.bf16.mxu0 0
  %1025 = vmatpush1.bf16.msra.mxu0 %v732
  %1026 = vmatprep.subr.bf16.mxu0 0
  %1027 = vmatpush1.bf16.msra.mxu0 %v731
  %1028 = vmatprep.subr.bf16.mxu0 0
  %1029 = vmatpush1.bf16.msra.mxu0 %v730
  %1030 = vmatprep.subr.bf16.mxu0 0
  %1031 = vmatpush1.bf16.msra.mxu0 %v729
  %1032 = vmatprep.subr.bf16.mxu0 0
  %1033 = vmatpush1.bf16.msra.mxu0 %v728
  %1034 = vmatprep.subr.bf16.mxu0 0
  %1035 = vmatpush1.bf16.msra.mxu0 %v727
  %1036 = vmatprep.subr.bf16.mxu0 0
  %1037 = vmatpush1.bf16.msra.mxu0 %v726
  %1038 = vmatprep.subr.bf16.mxu0 0
  %1039 = vmatpush2.bf16.msra.mxu0 %v741
  %1040 = vmatprep.subr.bf16.mxu0 0
  %1041 = vmatpush2.bf16.msra.mxu0 %v740
  %1042 = vmatprep.subr.bf16.mxu0 0
  %1043 = vmatpush2.bf16.msra.mxu0 %v739
  %1044 = vmatprep.subr.bf16.mxu0 0
  %1045 = vmatpush2.bf16.msra.mxu0 %v738
  %1046 = vmatprep.subr.bf16.mxu0 0
  %1047 = vmatpush2.bf16.msra.mxu0 %v737
  %1048 = vmatprep.subr.bf16.mxu0 0
  %1049 = vmatpush2.bf16.msra.mxu0 %v736
  %1050 = vmatprep.subr.bf16.mxu0 0
  %1051 = vmatpush2.bf16.msra.mxu0 %v735
  %1052 = vmatprep.subr.bf16.mxu0 0
  %1053 = vmatpush2.bf16.msra.mxu0 %v734
  %1054 = vmatprep.mubr.bf16.mxu0 %v254
  %1055 = vmatmul.mubr.bf16.gmra.mxu0 %v253
  %v1056 = vpop.f32.mrf.mxu0
  %v1057 = vadd.f32 %v1017, %v1056
  %v1058 = vpop.f32.mrf.mxu0
  %v1059 = vpop.f32.mrf.mxu0
  %v1060 = vpop.f32.mrf.mxu0
  %1061 = vdwg.mxu0
  %1062 = vmatprep.subr.bf16.mxu0 0
  %1063 = vmatpush1.bf16.msra.mxu0 %v749
  %1064 = vmatprep.subr.bf16.mxu0 0
  %1065 = vmatpush1.bf16.msra.mxu0 %v748
  %1066 = vmatprep.subr.bf16.mxu0 0
  %1067 = vmatpush1.bf16.msra.mxu0 %v747
  %1068 = vmatprep.subr.bf16.mxu0 0
  %1069 = vmatpush1.bf16.msra.mxu0 %v746
  %1070 = vmatprep.subr.bf16.mxu0 0
  %1071 = vmatpush1.bf16.msra.mxu0 %v745
  %1072 = vmatprep.subr.bf16.mxu0 0
  %1073 = vmatpush1.bf16.msra.mxu0 %v744
  %1074 = vmatprep.subr.bf16.mxu0 0
  %1075 = vmatpush1.bf16.msra.mxu0 %v743
  %1076 = vmatprep.subr.bf16.mxu0 0
  %1077 = vmatpush1.bf16.msra.mxu0 %v742
  %1078 = vmatprep.subr.bf16.mxu0 0
  %1079 = vmatpush2.bf16.msra.mxu0 %v757
  %1080 = vmatprep.subr.bf16.mxu0 0
  %1081 = vmatpush2.bf16.msra.mxu0 %v756
  %1082 = vmatprep.subr.bf16.mxu0 0
  %1083 = vmatpush2.bf16.msra.mxu0 %v755
  %1084 = vmatprep.subr.bf16.mxu0 0
  %1085 = vmatpush2.bf16.msra.mxu0 %v754
  %1086 = vmatprep.subr.bf16.mxu0 0
  %1087 = vmatpush2.bf16.msra.mxu0 %v753
  %1088 = vmatprep.subr.bf16.mxu0 0
  %1089 = vmatpush2.bf16.msra.mxu0 %v752
  %1090 = vmatprep.subr.bf16.mxu0 0
  %1091 = vmatpush2.bf16.msra.mxu0 %v751
  %1092 = vmatprep.subr.bf16.mxu0 0
  %1093 = vmatpush2.bf16.msra.mxu0 %v750
  %1094 = vmatprep.mubr.bf16.mxu0 %v256
  %1095 = vmatmul.mubr.bf16.gmra.mxu0 %v255
  %v1096 = vpop.f32.mrf.mxu0
  %v1097 = vadd.f32 %v1057, %v1096
  %v1098 = vpop.f32.mrf.mxu0
  %v1099 = vpop.f32.mrf.mxu0
  %v1100 = vpop.f32.mrf.mxu0
  %1101 = vdwg.mxu0
  %1102 = vmatprep.subr.bf16.mxu0 0
  %1103 = vmatpush1.bf16.msra.mxu0 0
  %1104 = vmatprep.subr.bf16.mxu0 0
  %1105 = vmatpush1.bf16.msra.mxu0 0
  %1106 = vmatprep.subr.bf16.mxu0 0
  %1107 = vmatpush1.bf16.msra.mxu0 0
  %1108 = vmatprep.subr.bf16.mxu0 0
  %1109 = vmatpush1.bf16.msra.mxu0 0
  %1110 = vmatprep.subr.bf16.mxu0 0
  %1111 = vmatpush1.bf16.msra.mxu0 0
  %1112 = vmatprep.subr.bf16.mxu0 0
  %1113 = vmatpush1.bf16.msra.mxu0 0
  %1114 = vmatprep.subr.bf16.mxu0 0
  %1115 = vmatpush1.bf16.msra.mxu0 %v759
  %1116 = vmatprep.subr.bf16.mxu0 0
  %1117 = vmatpush1.bf16.msra.mxu0 %v758
  %1118 = vmatprep.subr.bf16.mxu0 0
  %1119 = vmatpush2.bf16.msra.mxu0 0
  %1120 = vmatprep.subr.bf16.mxu0 0
  %1121 = vmatpush2.bf16.msra.mxu0 0
  %1122 = vmatprep.subr.bf16.mxu0 0
  %1123 = vmatpush2.bf16.msra.mxu0 0
  %1124 = vmatprep.subr.bf16.mxu0 0
  %1125 = vmatpush2.bf16.msra.mxu0 0
  %1126 = vmatprep.subr.bf16.mxu0 0
  %1127 = vmatpush2.bf16.msra.mxu0 0
  %1128 = vmatprep.subr.bf16.mxu0 0
  %1129 = vmatpush2.bf16.msra.mxu0 0
  %1130 = vmatprep.subr.bf16.mxu0 0
  %1131 = vmatpush2.bf16.msra.mxu0 0
  %1132 = vmatprep.subr.bf16.mxu0 0
  %1133 = vmatpush2.bf16.msra.mxu0 0
  %1134 = vmatprep.mubr.bf16.mxu0 0
  %1135 = vmatmul.mubr.bf16.gmra.mxu0 %v860
  %v1136 = vpop.f32.mrf.mxu0
  %v1137 = vadd.f32 %v1097, %v1136
  %v1138 = vpop.f32.mrf.mxu0
  %v1139 = vpop.f32.mrf.mxu0
  %v1140 = vpop.f32.mrf.mxu0
  %1141 = vdwg.mxu0
  %1142 = vst [vmem:[%s3] sm:$0xff] %v1137
  // Predicated region
  $region14: #{convnet_forward.5} parent=0 // pred_check
    _
  $region15: #{convnet_forward.5} parent=0 // pred_check_branch
    %1144 = sbr.rel (0) target = $region17
  $region16: #{convnet_forward.5} parent=0 // pred_region
    _
  $region17: #{convnet_forward.5} parent=0 // pred_fallthru
    _
  // Predicated region
  $region18: #{convnet_forward.5} parent=0 // pred_check
    _
  $region19: #{convnet_forward.5} parent=0 // pred_check_branch
    %1146 = sbr.rel (0) target = $region21
  $region20: #{convnet_forward.5} parent=0 // pred_region
    _
  $region21: #{convnet_forward.5} parent=0 // pred_fallthru
    _

</llo_original>
